<compile_context>
chip_gen: v6e
topology: v6e:2x2x1
jax: 0.10.0
libtpu: 0.0.40
codegen_flags: <defaults>
</compile_context>

<pallas_src>
import functools
import jax
import jax.numpy as jnp
from jax import lax
from jax.experimental import pallas as pl
from jax.experimental.pallas import tpu as pltpu

NEG_BIG = -1e30
RATIO = 0.8


def net0_kernel(x_ref, a_ref, mask_ref,
                cw0_ref, cb0_ref, ph0_ref,
                cw1_ref, cb1_ref, ph1_ref,
                cw2_ref, cb2_ref, ph2_ref,
                cw3_ref, cb3_ref, ph3_ref,
                l1w_ref, l1b_ref, l2w_ref, l2b_ref, l3w_ref, l3b_ref,
                o_ref, *, ratio):
    X = x_ref[...]                         # [G, P, F_in]
    A = a_ref[...]                         # [G, P, P]   (never rewritten)
    mask = mask_ref[...]                   # [G, P, 1]

    G, P, _ = A.shape
    H = cw0_ref.shape[1]                   # hidden width (128)

    # ---- hoisted once: f32 tie-break mask (j outranks i on equal score iff j < i) ----
    row = lax.broadcasted_iota(jnp.int32, (P, P), 0)    # i index
    col = lax.broadcasted_iota(jnp.int32, (P, P), 1)    # j index
    lower_tri = (col < row).astype(jnp.float32)         # [P, P]; iotas die here

    acc_max = jnp.zeros((G, H), jnp.float32)
    acc_mean = jnp.zeros((G, H), jnp.float32)

    layer_params = ((cw0_ref, cb0_ref, ph0_ref),
                    (cw1_ref, cb1_ref, ph1_ref),
                    (cw2_ref, cb2_ref, ph2_ref),
                    (cw3_ref, cb3_ref, ph3_ref))

    for w_ref, b_ref, ph_ref in layer_params:
        W = w_ref[...]                     # [F_in, H]
        b = b_ref[...]                     # [1, H]
        p_hat = ph_ref[...]                # [1, H], pre-normalized on host (p / ||p||)

        mask_row = mask.reshape(G, 1, P)   # live flag of neighbor j

        # -------- GCNConv + ReLU (self loops folded; A kept original) --------------------
        # deg counts only live neighbors; A @ v is exact because dead rows of X are 0.
        deg = jnp.sum(A * mask_row, axis=-1, keepdims=True) + mask        # [G, P, 1]
        dinv = jnp.where(deg > 0.0, lax.rsqrt(deg), 0.0)
        # X @ W presented to the MXU as one (G*P, F) matmul (larger M for bigger G).
        # TODO(synk): at much larger P/B, cast A and X to bf16 for the two matmuls on
        # v6e/v7x (keep f32 accumulate via preferred_element_type); skip on v5e.
        y = jnp.dot(X.reshape(G * P, -1), W,
                    preferred_element_type=jnp.float32).reshape(G, P, H)
        v = dinv * y
        if G == 1:
            z = jnp.dot(A.reshape(P, P), v.reshape(P, H),
                        preferred_element_type=jnp.float32).reshape(G, P, H)
        else:
            z = jnp.einsum('gij,gjh->gih', A, v,
                           preferred_element_type=jnp.float32)
        z = z + mask * v                                                   # (A + I_mask) @ v
        X = jnp.maximum(dinv * z + b, 0.0) * mask                          # [G, P, H]

        # -------- TopKPooling(ratio=0.8): per-graph ranking on [G, P, P] ------------------
        s = jnp.sum(X * p_hat, axis=-1, keepdims=True)                     # [G, P, 1] (VPU+XLU)
        sj = s.reshape(G, 1, P)                                            # bit-identical relabel
        outranks = ((sj > s).astype(jnp.float32)
                    + (sj == s).astype(jnp.float32) * lower_tri)           # [G, P, P]
        rank = jnp.sum(mask_row * outranks, axis=-1, keepdims=True)        # [G, P, 1]
        nvalid = jnp.sum(mask, axis=1, keepdims=True)                      # [G, 1, 1]
        k = jnp.ceil(ratio * nvalid)
        keep = mask * (rank < k).astype(jnp.float32)                       # [G, P, 1]

        X = X * jnp.tanh(s) * keep
        mask = keep                                                        # A left untouched

        # -------- readout: gmp / gap per graph --------------------------------------------
        counts = jnp.sum(mask, axis=1)                                     # [G, 1]
        sums = jnp.sum(X, axis=1)                                          # [G, H] (dead rows 0)
        mean_g = sums / jnp.maximum(counts, 1.0)                           # exact divide
        max_g = jnp.max(jnp.where(mask > 0.5, X, NEG_BIG), axis=1)         # [G, H]
        max_g = jnp.where(counts > 0.0, max_g, 0.0)                        # guard empty graphs
        acc_max = acc_max + max_g
        acc_mean = acc_mean + mean_g

    # -------- MLP head (eval mode) --------------------------------------------------------
    # cat([gmp, gap]) @ W1  ==  gmp @ W1[:H] + gap @ W1[H:]   (no in-kernel concatenate)
    w1a = l1w_ref[0:H, :]
    w1b = l1w_ref[H:2 * H, :]
    h = (jnp.dot(acc_max, w1a, preferred_element_type=jnp.float32)
         + jnp.dot(acc_mean, w1b, preferred_element_type=jnp.float32)
         + l1b_ref[...])
    h = jnp.maximum(h, 0.0)
    # TODO(synk): F.dropout(p=0.5, training=self.training) is identity in eval mode;
    # training-mode stochastic dropout is not implemented here.
    h = jnp.maximum(
        jnp.dot(h, l2w_ref[...], preferred_element_type=jnp.float32) + l2b_ref[...], 0.0)
    logits = jnp.dot(h, l3w_ref[...], preferred_element_type=jnp.float32) + l3b_ref[...]
    m = jnp.max(logits, axis=-1, keepdims=True)
    zc = logits - m
    lse = jnp.log(jnp.sum(jnp.exp(zc), axis=-1, keepdims=True))
    o_ref[...] = (zc - lse).reshape(G, 1, -1)


def net0_forward(x, adj, mask, params, *, graphs_per_block=1):
    B, P, F_in = x.shape
    G = graphs_per_block
    assert B % G == 0, "batch must be divisible by graphs_per_block"
    num_classes = params["lin3W"].shape[1]

    def p_hat(p):                                   # host-side L2 normalization, [H,1] -> [1,H]
        return (p / jnp.sqrt(jnp.sum(p * p))).reshape(1, -1)

    args = (x, adj, mask,
            params["convW0"], params["convB0"], p_hat(params["poolP0"]),
            params["convW1"], params["convB1"], p_hat(params["poolP1"]),
            params["convW2"], params["convB2"], p_hat(params["poolP2"]),
            params["convW3"], params["convB3"], p_hat(params["poolP3"]),
            params["lin1W"], params["lin1B"],
            params["lin2W"], params["lin2B"],
            params["lin3W"], params["lin3B"])

    data_specs = [
        pl.BlockSpec((G, P, F_in), lambda i: (i, 0, 0)),
        pl.BlockSpec((G, P, P), lambda i: (i, 0, 0)),
        pl.BlockSpec((G, P, 1), lambda i: (i, 0, 0)),
    ]
    # parameters: full-array blocks, constant block index -> fetched once, stay resident
    param_specs = [pl.BlockSpec(a.shape, lambda i: (0, 0)) for a in args[3:]]

    out = pl.pallas_call(
        functools.partial(net0_kernel, ratio=RATIO),
        out_shape=jax.ShapeDtypeStruct((B, 1, num_classes), jnp.float32),
        grid=(B // G,),
        in_specs=data_specs + param_specs,
        out_specs=pl.BlockSpec((G, 1, num_classes), lambda i: (i, 0, 0)),
        compiler_params=pltpu.CompilerParams(dimension_semantics=("parallel",)),
    )(*args)
    return out.reshape(B, num_classes)


# ------------------------------------ main ------------------------------------------------- #
if __name__ == "__main__":
    B = 2                # graphs in the batch
    NODES_PER = 16       # (padded) nodes per graph
    F_IN = 16            # dataset.num_features (synthetic)
    HID = 128
    NUM_CLASSES = 6      # dataset.num_classes (synthetic)

    key = jax.random.PRNGKey(0)
    keys = jax.random.split(key, 20)

    def init_w(k, shape):
        fan_in = shape[0]
        return jax.random.normal(k, shape, jnp.float32) / jnp.sqrt(jnp.float32(fan_in))

    params = {}
    conv_dims = [(F_IN, HID), (HID, HID), (HID, HID), (HID, HID)]
    ki = 0
    for i, (fi, fo) in enumerate(conv_dims):
        params[f"convW{i}"] = init_w(keys[ki], (fi, fo)); ki += 1
        params[f"convB{i}"] = jnp.zeros((1, fo), jnp.float32)
        params[f"poolP{i}"] = init_w(keys[ki], (fo, 1)); ki += 1
    params["lin1W"] = init_w(keys[ki], (2 * HID, 128)); ki += 1
    params["lin1B"] = jnp.zeros((1, 128), jnp.float32)
    params["lin2W"] = init_w(keys[ki], (128, 64)); ki += 1
    params["lin2B"] = jnp.zeros((1, 64), jnp.float32)
    params["lin3W"] = init_w(keys[ki], (64, NUM_CLASSES)); ki += 1
    params["lin3B"] = jnp.zeros((1, NUM_CLASSES), jnp.float32)

    # per-graph dense symmetric adjacency, no self loops
    rand = jax.random.uniform(keys[ki], (B, NODES_PER, NODES_PER)); ki += 1
    up = (rand < 0.3).astype(jnp.float32)
    sym = jnp.maximum(up, jnp.swapaxes(up, -1, -2))
    adj = sym * (1.0 - jnp.eye(NODES_PER, dtype=jnp.float32))

    x = jax.random.normal(keys[ki], (B, NODES_PER, F_IN), jnp.float32); ki += 1
    mask0 = jnp.ones((B, NODES_PER, 1), jnp.float32)

    fwd = jax.jit(functools.partial(net0_forward, graphs_per_block=1))
    out = fwd(x, adj, mask0, params)
    out = jax.block_until_ready(out)
    assert out.shape == (B, NUM_CLASSES)
    assert bool(jnp.all(jnp.isfinite(out)))
    print("KERNEL_OK")
</pallas_src>

<mosaic_0001>
module attributes {stable_mosaic.version = 11 : i64} {
  func.func @net0_kernel(%arg0: i32, %arg1: memref<1x16x16xf32, #tpu.memory_space<vmem>>, %arg2: memref<1x16x16xf32, #tpu.memory_space<vmem>>, %arg3: memref<1x16x1xf32, #tpu.memory_space<vmem>>, %arg4: memref<16x128xf32, #tpu.memory_space<vmem>>, %arg5: memref<1x128xf32, #tpu.memory_space<vmem>>, %arg6: memref<1x128xf32, #tpu.memory_space<vmem>>, %arg7: memref<128x128xf32, #tpu.memory_space<vmem>>, %arg8: memref<1x128xf32, #tpu.memory_space<vmem>>, %arg9: memref<1x128xf32, #tpu.memory_space<vmem>>, %arg10: memref<128x128xf32, #tpu.memory_space<vmem>>, %arg11: memref<1x128xf32, #tpu.memory_space<vmem>>, %arg12: memref<1x128xf32, #tpu.memory_space<vmem>>, %arg13: memref<128x128xf32, #tpu.memory_space<vmem>>, %arg14: memref<1x128xf32, #tpu.memory_space<vmem>>, %arg15: memref<1x128xf32, #tpu.memory_space<vmem>>, %arg16: memref<256x128xf32, #tpu.memory_space<vmem>>, %arg17: memref<1x128xf32, #tpu.memory_space<vmem>>, %arg18: memref<128x64xf32, #tpu.memory_space<vmem>>, %arg19: memref<1x64xf32, #tpu.memory_space<vmem>>, %arg20: memref<64x6xf32, #tpu.memory_space<vmem>>, %arg21: memref<1x6xf32, #tpu.memory_space<vmem>>, %arg22: memref<1x1x6xf32, #tpu.memory_space<vmem>>) attributes {dimension_semantics = [#tpu.dimension_semantics<parallel>], iteration_bounds = array<i64: 2>, scalar_prefetch = 0 : i64, scratch_operands = 0 : i64, tpu.core_type = #tpu.core_type<tc>, window_params = [{transform_indices = @transform_0, window_bounds = array<i64: 1, 16, 16>}, {transform_indices = @transform_1, window_bounds = array<i64: 1, 16, 16>}, {transform_indices = @transform_2, window_bounds = array<i64: 1, 16, 1>}, {pipeline_mode = #tpu.pipeline_mode<synchronous>, transform_indices = @transform_3, window_bounds = array<i64: 16, 128>}, {pipeline_mode = #tpu.pipeline_mode<synchronous>, transform_indices = @transform_4, window_bounds = array<i64: 1, 128>}, {pipeline_mode = #tpu.pipeline_mode<synchronous>, transform_indices = @transform_5, window_bounds = array<i64: 1, 128>}, {pipeline_mode = #tpu.pipeline_mode<synchronous>, transform_indices = @transform_6, window_bounds = array<i64: 128, 128>}, {pipeline_mode = #tpu.pipeline_mode<synchronous>, transform_indices = @transform_7, window_bounds = array<i64: 1, 128>}, {pipeline_mode = #tpu.pipeline_mode<synchronous>, transform_indices = @transform_8, window_bounds = array<i64: 1, 128>}, {pipeline_mode = #tpu.pipeline_mode<synchronous>, transform_indices = @transform_9, window_bounds = array<i64: 128, 128>}, {pipeline_mode = #tpu.pipeline_mode<synchronous>, transform_indices = @transform_10, window_bounds = array<i64: 1, 128>}, {pipeline_mode = #tpu.pipeline_mode<synchronous>, transform_indices = @transform_11, window_bounds = array<i64: 1, 128>}, {pipeline_mode = #tpu.pipeline_mode<synchronous>, transform_indices = @transform_12, window_bounds = array<i64: 128, 128>}, {pipeline_mode = #tpu.pipeline_mode<synchronous>, transform_indices = @transform_13, window_bounds = array<i64: 1, 128>}, {pipeline_mode = #tpu.pipeline_mode<synchronous>, transform_indices = @transform_14, window_bounds = array<i64: 1, 128>}, {pipeline_mode = #tpu.pipeline_mode<synchronous>, transform_indices = @transform_15, window_bounds = array<i64: 256, 128>}, {pipeline_mode = #tpu.pipeline_mode<synchronous>, transform_indices = @transform_16, window_bounds = array<i64: 1, 128>}, {pipeline_mode = #tpu.pipeline_mode<synchronous>, transform_indices = @transform_17, window_bounds = array<i64: 128, 64>}, {pipeline_mode = #tpu.pipeline_mode<synchronous>, transform_indices = @transform_18, window_bounds = array<i64: 1, 64>}, {pipeline_mode = #tpu.pipeline_mode<synchronous>, transform_indices = @transform_19, window_bounds = array<i64: 64, 6>}, {pipeline_mode = #tpu.pipeline_mode<synchronous>, transform_indices = @transform_20, window_bounds = array<i64: 1, 6>}, {transform_indices = @transform_21, window_bounds = array<i64: 1, 1, 6>}]} {
    %c0 = arith.constant 0 : index
    %c0_0 = arith.constant 0 : index
    %c0_1 = arith.constant 0 : index
    %0 = vector.load %arg1[%c0, %c0_0, %c0_1] : memref<1x16x16xf32, #tpu.memory_space<vmem>>, vector<1x16x16xf32>
    %c0_2 = arith.constant 0 : index
    %c0_3 = arith.constant 0 : index
    %c0_4 = arith.constant 0 : index
    %1 = vector.load %arg2[%c0_2, %c0_3, %c0_4] : memref<1x16x16xf32, #tpu.memory_space<vmem>>, vector<1x16x16xf32>
    %c0_5 = arith.constant 0 : index
    %c0_6 = arith.constant 0 : index
    %c0_7 = arith.constant 0 : index
    %2 = vector.load %arg3[%c0_5, %c0_6, %c0_7] : memref<1x16x1xf32, #tpu.memory_space<vmem>>, vector<1x16x1xf32>
    %3 = tpu.iota {dimensions = array<i32: 0>} : vector<16x16xi32>
    %4 = tpu.iota {dimensions = array<i32: 1>} : vector<16x16xi32>
    %5 = arith.cmpi slt, %4, %3 : vector<16x16xi32>
    %6 = arith.extui %5 : vector<16x16xi1> to vector<16x16xi32>
    %7 = arith.sitofp %6 : vector<16x16xi32> to vector<16x16xf32>
    %cst = arith.constant 0.000000e+00 : f32
    %8 = vector.broadcast %cst : f32 to vector<1x128xf32>
    %cst_8 = arith.constant 0.000000e+00 : f32
    %9 = vector.broadcast %cst_8 : f32 to vector<1x128xf32>
    %c0_9 = arith.constant 0 : index
    %c0_10 = arith.constant 0 : index
    %10 = vector.load %arg4[%c0_9, %c0_10] : memref<16x128xf32, #tpu.memory_space<vmem>>, vector<16x128xf32>
    %c0_11 = arith.constant 0 : index
    %c0_12 = arith.constant 0 : index
    %11 = vector.load %arg5[%c0_11, %c0_12] : memref<1x128xf32, #tpu.memory_space<vmem>>, vector<1x128xf32>
    %c0_13 = arith.constant 0 : index
    %c0_14 = arith.constant 0 : index
    %12 = vector.load %arg6[%c0_13, %c0_14] : memref<1x128xf32, #tpu.memory_space<vmem>>, vector<1x128xf32>
    %13 = vector.shape_cast %2 : vector<1x16x1xf32> to vector<1x1x16xf32>
    %14 = vector.broadcast %13 : vector<1x1x16xf32> to vector<1x16x16xf32>
    %15 = arith.mulf %1, %14 : vector<1x16x16xf32>
    %cst_15 = arith.constant dense<0.000000e+00> : vector<1x16xf32>
    %16 = vector.multi_reduction <add>, %15, %cst_15 [2] : vector<1x16x16xf32> to vector<1x16xf32>
    %17 = vector.shape_cast %16 : vector<1x16xf32> to vector<1x16x1xf32>
    %18 = arith.addf %17, %2 : vector<1x16x1xf32>
    %cst_16 = arith.constant 0.000000e+00 : f32
    %19 = vector.broadcast %cst_16 : f32 to vector<1x16x1xf32>
    %20 = arith.cmpf ogt, %18, %19 : vector<1x16x1xf32>
    %21 = math.rsqrt %18 : vector<1x16x1xf32>
    %cst_17 = arith.constant 0.000000e+00 : f32
    %22 = vector.broadcast %cst_17 : f32 to vector<1x16x1xf32>
    %23 = arith.select %20, %21, %22 : vector<1x16x1xi1>, vector<1x16x1xf32>
    %24 = vector.shape_cast %0 : vector<1x16x16xf32> to vector<16x16xf32>
    %cst_18 = arith.constant dense<0.000000e+00> : vector<16x128xf32>
    %25 = tpu.matmul %24, %10, %cst_18 {dimension_numbers = #tpu.dot_dimension_numbers<[1], [0], [0], [1], [0, 0, 1, 1], [], []>} : vector<16x16xf32>, vector<16x128xf32>, vector<16x128xf32> -> vector<16x128xf32>
    %26 = vector.shape_cast %25 : vector<16x128xf32> to vector<1x16x128xf32>
    %27 = vector.broadcast %23 : vector<1x16x1xf32> to vector<1x16x128xf32>
    %28 = arith.mulf %27, %26 : vector<1x16x128xf32>
    %29 = vector.shape_cast %1 : vector<1x16x16xf32> to vector<16x16xf32>
    %30 = vector.shape_cast %28 : vector<1x16x128xf32> to vector<16x128xf32>
    %cst_19 = arith.constant dense<0.000000e+00> : vector<16x128xf32>
    %31 = tpu.matmul %29, %30, %cst_19 {dimension_numbers = #tpu.dot_dimension_numbers<[1], [0], [0], [1], [0, 0, 1, 1], [], []>} : vector<16x16xf32>, vector<16x128xf32>, vector<16x128xf32> -> vector<16x128xf32>
    %32 = vector.shape_cast %31 : vector<16x128xf32> to vector<1x16x128xf32>
    %33 = vector.broadcast %2 : vector<1x16x1xf32> to vector<1x16x128xf32>
    %34 = arith.mulf %33, %28 : vector<1x16x128xf32>
    %35 = arith.addf %32, %34 : vector<1x16x128xf32>
    %36 = vector.broadcast %23 : vector<1x16x1xf32> to vector<1x16x128xf32>
    %37 = arith.mulf %36, %35 : vector<1x16x128xf32>
    %38 = vector.shape_cast %11 : vector<1x128xf32> to vector<1x1x128xf32>
    %39 = vector.broadcast %38 : vector<1x1x128xf32> to vector<1x16x128xf32>
    %40 = arith.addf %37, %39 : vector<1x16x128xf32>
    %cst_20 = arith.constant 0.000000e+00 : f32
    %41 = vector.broadcast %cst_20 : f32 to vector<1x16x128xf32>
    %42 = arith.maximumf %40, %41 : vector<1x16x128xf32>
    %43 = vector.broadcast %2 : vector<1x16x1xf32> to vector<1x16x128xf32>
    %44 = arith.mulf %42, %43 : vector<1x16x128xf32>
    %45 = vector.shape_cast %12 : vector<1x128xf32> to vector<1x1x128xf32>
    %46 = vector.broadcast %45 : vector<1x1x128xf32> to vector<1x16x128xf32>
    %47 = arith.mulf %44, %46 : vector<1x16x128xf32>
    %cst_21 = arith.constant dense<0.000000e+00> : vector<1x16xf32>
    %48 = vector.multi_reduction <add>, %47, %cst_21 [2] : vector<1x16x128xf32> to vector<1x16xf32>
    %49 = vector.shape_cast %48 : vector<1x16xf32> to vector<1x16x1xf32>
    %50 = vector.shape_cast %49 : vector<1x16x1xf32> to vector<1x1x16xf32>
    %51 = vector.broadcast %50 : vector<1x1x16xf32> to vector<1x16x16xf32>
    %52 = vector.broadcast %49 : vector<1x16x1xf32> to vector<1x16x16xf32>
    %53 = arith.cmpf ogt, %51, %52 : vector<1x16x16xf32>
    %54 = arith.extui %53 : vector<1x16x16xi1> to vector<1x16x16xi32>
    %55 = arith.sitofp %54 : vector<1x16x16xi32> to vector<1x16x16xf32>
    %56 = vector.broadcast %50 : vector<1x1x16xf32> to vector<1x16x16xf32>
    %57 = vector.broadcast %49 : vector<1x16x1xf32> to vector<1x16x16xf32>
    %58 = arith.cmpf oeq, %56, %57 : vector<1x16x16xf32>
    %59 = arith.extui %58 : vector<1x16x16xi1> to vector<1x16x16xi32>
    %60 = arith.sitofp %59 : vector<1x16x16xi32> to vector<1x16x16xf32>
    %61 = vector.shape_cast %7 : vector<16x16xf32> to vector<1x16x16xf32>
    %62 = arith.mulf %60, %61 : vector<1x16x16xf32>
    %63 = arith.addf %55, %62 : vector<1x16x16xf32>
    %64 = vector.broadcast %13 : vector<1x1x16xf32> to vector<1x16x16xf32>
    %65 = arith.mulf %64, %63 : vector<1x16x16xf32>
    %cst_22 = arith.constant dense<0.000000e+00> : vector<1x16xf32>
    %66 = vector.multi_reduction <add>, %65, %cst_22 [2] : vector<1x16x16xf32> to vector<1x16xf32>
    %67 = vector.shape_cast %66 : vector<1x16xf32> to vector<1x16x1xf32>
    %cst_23 = arith.constant dense<0.000000e+00> : vector<1x1xf32>
    %68 = vector.multi_reduction <add>, %2, %cst_23 [1] : vector<1x16x1xf32> to vector<1x1xf32>
    %69 = vector.shape_cast %68 : vector<1x1xf32> to vector<1x1x1xf32>
    %cst_24 = arith.constant 8.000000e-01 : f32
    %70 = vector.broadcast %cst_24 : f32 to vector<1x1x1xf32>
    %71 = arith.mulf %70, %69 : vector<1x1x1xf32>
    %72 = math.ceil %71 : vector<1x1x1xf32>
    %73 = vector.broadcast %72 : vector<1x1x1xf32> to vector<1x16x1xf32>
    %74 = arith.cmpf olt, %67, %73 : vector<1x16x1xf32>
    %75 = arith.extui %74 : vector<1x16x1xi1> to vector<1x16x1xi32>
    %76 = arith.sitofp %75 : vector<1x16x1xi32> to vector<1x16x1xf32>
    %77 = arith.mulf %2, %76 : vector<1x16x1xf32>
    %78 = math.tanh %49 : vector<1x16x1xf32>
    %79 = vector.broadcast %78 : vector<1x16x1xf32> to vector<1x16x128xf32>
    %80 = arith.mulf %44, %79 : vector<1x16x128xf32>
    %81 = vector.broadcast %77 : vector<1x16x1xf32> to vector<1x16x128xf32>
    %82 = arith.mulf %80, %81 : vector<1x16x128xf32>
    %cst_25 = arith.constant dense<0.000000e+00> : vector<1x1xf32>
    %83 = vector.multi_reduction <add>, %77, %cst_25 [1] : vector<1x16x1xf32> to vector<1x1xf32>
    %cst_26 = arith.constant dense<0.000000e+00> : vector<1x128xf32>
    %84 = vector.multi_reduction <add>, %82, %cst_26 [1] : vector<1x16x128xf32> to vector<1x128xf32>
    %cst_27 = arith.constant 1.000000e+00 : f32
    %85 = vector.broadcast %cst_27 : f32 to vector<1x1xf32>
    %86 = arith.maximumf %83, %85 : vector<1x1xf32>
    %87 = vector.broadcast %86 : vector<1x1xf32> to vector<1x128xf32>
    %88 = arith.divf %84, %87 : vector<1x128xf32>
    %cst_28 = arith.constant 5.000000e-01 : f32
    %89 = vector.broadcast %cst_28 : f32 to vector<1x16x1xf32>
    %90 = arith.cmpf ogt, %77, %89 : vector<1x16x1xf32>
    %cst_29 = arith.constant -1.000000e+30 : f32
    %91 = vector.shape_cast %90 : vector<1x16x1xi1> to vector<1x16x1xi1>
    %92 = vector.broadcast %91 : vector<1x16x1xi1> to vector<1x16x128xi1>
    %93 = vector.broadcast %cst_29 : f32 to vector<1x16x128xf32>
    %94 = arith.select %92, %82, %93 : vector<1x16x128xi1>, vector<1x16x128xf32>
    %cst_30 = arith.constant dense<0xFF800000> : vector<1x128xf32>
    %95 = vector.multi_reduction <maximumf>, %94, %cst_30 [1] : vector<1x16x128xf32> to vector<1x128xf32>
    %cst_31 = arith.constant 0.000000e+00 : f32
    %96 = vector.broadcast %cst_31 : f32 to vector<1x1xf32>
    %97 = arith.cmpf ogt, %83, %96 : vector<1x1xf32>
    %cst_32 = arith.constant 0.000000e+00 : f32
    %98 = vector.shape_cast %97 : vector<1x1xi1> to vector<1x1xi1>
    %99 = vector.broadcast %98 : vector<1x1xi1> to vector<1x128xi1>
    %100 = vector.broadcast %cst_32 : f32 to vector<1x128xf32>
    %101 = arith.select %99, %95, %100 : vector<1x128xi1>, vector<1x128xf32>
    %102 = arith.addf %8, %101 : vector<1x128xf32>
    %103 = arith.addf %9, %88 : vector<1x128xf32>
    %c0_33 = arith.constant 0 : index
    %c0_34 = arith.constant 0 : index
    %104 = vector.load %arg7[%c0_33, %c0_34] : memref<128x128xf32, #tpu.memory_space<vmem>>, vector<128x128xf32>
    %c0_35 = arith.constant 0 : index
    %c0_36 = arith.constant 0 : index
    %105 = vector.load %arg8[%c0_35, %c0_36] : memref<1x128xf32, #tpu.memory_space<vmem>>, vector<1x128xf32>
    %c0_37 = arith.constant 0 : index
    %c0_38 = arith.constant 0 : index
    %106 = vector.load %arg9[%c0_37, %c0_38] : memref<1x128xf32, #tpu.memory_space<vmem>>, vector<1x128xf32>
    %107 = vector.shape_cast %77 : vector<1x16x1xf32> to vector<1x1x16xf32>
    %108 = vector.broadcast %107 : vector<1x1x16xf32> to vector<1x16x16xf32>
    %109 = arith.mulf %1, %108 : vector<1x16x16xf32>
    %cst_39 = arith.constant dense<0.000000e+00> : vector<1x16xf32>
    %110 = vector.multi_reduction <add>, %109, %cst_39 [2] : vector<1x16x16xf32> to vector<1x16xf32>
    %111 = vector.shape_cast %110 : vector<1x16xf32> to vector<1x16x1xf32>
    %112 = arith.addf %111, %77 : vector<1x16x1xf32>
    %cst_40 = arith.constant 0.000000e+00 : f32
    %113 = vector.broadcast %cst_40 : f32 to vector<1x16x1xf32>
    %114 = arith.cmpf ogt, %112, %113 : vector<1x16x1xf32>
    %115 = math.rsqrt %112 : vector<1x16x1xf32>
    %cst_41 = arith.constant 0.000000e+00 : f32
    %116 = vector.broadcast %cst_41 : f32 to vector<1x16x1xf32>
    %117 = arith.select %114, %115, %116 : vector<1x16x1xi1>, vector<1x16x1xf32>
    %118 = vector.shape_cast %82 : vector<1x16x128xf32> to vector<16x128xf32>
    %cst_42 = arith.constant dense<0.000000e+00> : vector<16x128xf32>
    %119 = tpu.matmul %118, %104, %cst_42 {dimension_numbers = #tpu.dot_dimension_numbers<[1], [0], [0], [1], [0, 0, 1, 1], [], []>} : vector<16x128xf32>, vector<128x128xf32>, vector<16x128xf32> -> vector<16x128xf32>
    %120 = vector.shape_cast %119 : vector<16x128xf32> to vector<1x16x128xf32>
    %121 = vector.broadcast %117 : vector<1x16x1xf32> to vector<1x16x128xf32>
    %122 = arith.mulf %121, %120 : vector<1x16x128xf32>
    %123 = vector.shape_cast %1 : vector<1x16x16xf32> to vector<16x16xf32>
    %124 = vector.shape_cast %122 : vector<1x16x128xf32> to vector<16x128xf32>
    %cst_43 = arith.constant dense<0.000000e+00> : vector<16x128xf32>
    %125 = tpu.matmul %123, %124, %cst_43 {dimension_numbers = #tpu.dot_dimension_numbers<[1], [0], [0], [1], [0, 0, 1, 1], [], []>} : vector<16x16xf32>, vector<16x128xf32>, vector<16x128xf32> -> vector<16x128xf32>
    %126 = vector.shape_cast %125 : vector<16x128xf32> to vector<1x16x128xf32>
    %127 = vector.broadcast %77 : vector<1x16x1xf32> to vector<1x16x128xf32>
    %128 = arith.mulf %127, %122 : vector<1x16x128xf32>
    %129 = arith.addf %126, %128 : vector<1x16x128xf32>
    %130 = vector.broadcast %117 : vector<1x16x1xf32> to vector<1x16x128xf32>
    %131 = arith.mulf %130, %129 : vector<1x16x128xf32>
    %132 = vector.shape_cast %105 : vector<1x128xf32> to vector<1x1x128xf32>
    %133 = vector.broadcast %132 : vector<1x1x128xf32> to vector<1x16x128xf32>
    %134 = arith.addf %131, %133 : vector<1x16x128xf32>
    %cst_44 = arith.constant 0.000000e+00 : f32
    %135 = vector.broadcast %cst_44 : f32 to vector<1x16x128xf32>
    %136 = arith.maximumf %134, %135 : vector<1x16x128xf32>
    %137 = vector.broadcast %77 : vector<1x16x1xf32> to vector<1x16x128xf32>
    %138 = arith.mulf %136, %137 : vector<1x16x128xf32>
    %139 = vector.shape_cast %106 : vector<1x128xf32> to vector<1x1x128xf32>
    %140 = vector.broadcast %139 : vector<1x1x128xf32> to vector<1x16x128xf32>
    %141 = arith.mulf %138, %140 : vector<1x16x128xf32>
    %cst_45 = arith.constant dense<0.000000e+00> : vector<1x16xf32>
    %142 = vector.multi_reduction <add>, %141, %cst_45 [2] : vector<1x16x128xf32> to vector<1x16xf32>
    %143 = vector.shape_cast %142 : vector<1x16xf32> to vector<1x16x1xf32>
    %144 = vector.shape_cast %143 : vector<1x16x1xf32> to vector<1x1x16xf32>
    %145 = vector.broadcast %144 : vector<1x1x16xf32> to vector<1x16x16xf32>
    %146 = vector.broadcast %143 : vector<1x16x1xf32> to vector<1x16x16xf32>
    %147 = arith.cmpf ogt, %145, %146 : vector<1x16x16xf32>
    %148 = arith.extui %147 : vector<1x16x16xi1> to vector<1x16x16xi32>
    %149 = arith.sitofp %148 : vector<1x16x16xi32> to vector<1x16x16xf32>
    %150 = vector.broadcast %144 : vector<1x1x16xf32> to vector<1x16x16xf32>
    %151 = vector.broadcast %143 : vector<1x16x1xf32> to vector<1x16x16xf32>
    %152 = arith.cmpf oeq, %150, %151 : vector<1x16x16xf32>
    %153 = arith.extui %152 : vector<1x16x16xi1> to vector<1x16x16xi32>
    %154 = arith.sitofp %153 : vector<1x16x16xi32> to vector<1x16x16xf32>
    %155 = vector.shape_cast %7 : vector<16x16xf32> to vector<1x16x16xf32>
    %156 = arith.mulf %154, %155 : vector<1x16x16xf32>
    %157 = arith.addf %149, %156 : vector<1x16x16xf32>
    %158 = vector.broadcast %107 : vector<1x1x16xf32> to vector<1x16x16xf32>
    %159 = arith.mulf %158, %157 : vector<1x16x16xf32>
    %cst_46 = arith.constant dense<0.000000e+00> : vector<1x16xf32>
    %160 = vector.multi_reduction <add>, %159, %cst_46 [2] : vector<1x16x16xf32> to vector<1x16xf32>
    %161 = vector.shape_cast %160 : vector<1x16xf32> to vector<1x16x1xf32>
    %cst_47 = arith.constant dense<0.000000e+00> : vector<1x1xf32>
    %162 = vector.multi_reduction <add>, %77, %cst_47 [1] : vector<1x16x1xf32> to vector<1x1xf32>
    %163 = vector.shape_cast %162 : vector<1x1xf32> to vector<1x1x1xf32>
    %cst_48 = arith.constant 8.000000e-01 : f32
    %164 = vector.broadcast %cst_48 : f32 to vector<1x1x1xf32>
    %165 = arith.mulf %164, %163 : vector<1x1x1xf32>
    %166 = math.ceil %165 : vector<1x1x1xf32>
    %167 = vector.broadcast %166 : vector<1x1x1xf32> to vector<1x16x1xf32>
    %168 = arith.cmpf olt, %161, %167 : vector<1x16x1xf32>
    %169 = arith.extui %168 : vector<1x16x1xi1> to vector<1x16x1xi32>
    %170 = arith.sitofp %169 : vector<1x16x1xi32> to vector<1x16x1xf32>
    %171 = arith.mulf %77, %170 : vector<1x16x1xf32>
    %172 = math.tanh %143 : vector<1x16x1xf32>
    %173 = vector.broadcast %172 : vector<1x16x1xf32> to vector<1x16x128xf32>
    %174 = arith.mulf %138, %173 : vector<1x16x128xf32>
    %175 = vector.broadcast %171 : vector<1x16x1xf32> to vector<1x16x128xf32>
    %176 = arith.mulf %174, %175 : vector<1x16x128xf32>
    %cst_49 = arith.constant dense<0.000000e+00> : vector<1x1xf32>
    %177 = vector.multi_reduction <add>, %171, %cst_49 [1] : vector<1x16x1xf32> to vector<1x1xf32>
    %cst_50 = arith.constant dense<0.000000e+00> : vector<1x128xf32>
    %178 = vector.multi_reduction <add>, %176, %cst_50 [1] : vector<1x16x128xf32> to vector<1x128xf32>
    %cst_51 = arith.constant 1.000000e+00 : f32
    %179 = vector.broadcast %cst_51 : f32 to vector<1x1xf32>
    %180 = arith.maximumf %177, %179 : vector<1x1xf32>
    %181 = vector.broadcast %180 : vector<1x1xf32> to vector<1x128xf32>
    %182 = arith.divf %178, %181 : vector<1x128xf32>
    %cst_52 = arith.constant 5.000000e-01 : f32
    %183 = vector.broadcast %cst_52 : f32 to vector<1x16x1xf32>
    %184 = arith.cmpf ogt, %171, %183 : vector<1x16x1xf32>
    %cst_53 = arith.constant -1.000000e+30 : f32
    %185 = vector.shape_cast %184 : vector<1x16x1xi1> to vector<1x16x1xi1>
    %186 = vector.broadcast %185 : vector<1x16x1xi1> to vector<1x16x128xi1>
    %187 = vector.broadcast %cst_53 : f32 to vector<1x16x128xf32>
    %188 = arith.select %186, %176, %187 : vector<1x16x128xi1>, vector<1x16x128xf32>
    %cst_54 = arith.constant dense<0xFF800000> : vector<1x128xf32>
    %189 = vector.multi_reduction <maximumf>, %188, %cst_54 [1] : vector<1x16x128xf32> to vector<1x128xf32>
    %cst_55 = arith.constant 0.000000e+00 : f32
    %190 = vector.broadcast %cst_55 : f32 to vector<1x1xf32>
    %191 = arith.cmpf ogt, %177, %190 : vector<1x1xf32>
    %cst_56 = arith.constant 0.000000e+00 : f32
    %192 = vector.shape_cast %191 : vector<1x1xi1> to vector<1x1xi1>
    %193 = vector.broadcast %192 : vector<1x1xi1> to vector<1x128xi1>
    %194 = vector.broadcast %cst_56 : f32 to vector<1x128xf32>
    %195 = arith.select %193, %189, %194 : vector<1x128xi1>, vector<1x128xf32>
    %196 = arith.addf %102, %195 : vector<1x128xf32>
    %197 = arith.addf %103, %182 : vector<1x128xf32>
    %c0_57 = arith.constant 0 : index
    %c0_58 = arith.constant 0 : index
    %198 = vector.load %arg10[%c0_57, %c0_58] : memref<128x128xf32, #tpu.memory_space<vmem>>, vector<128x128xf32>
    %c0_59 = arith.constant 0 : index
    %c0_60 = arith.constant 0 : index
    %199 = vector.load %arg11[%c0_59, %c0_60] : memref<1x128xf32, #tpu.memory_space<vmem>>, vector<1x128xf32>
    %c0_61 = arith.constant 0 : index
    %c0_62 = arith.constant 0 : index
    %200 = vector.load %arg12[%c0_61, %c0_62] : memref<1x128xf32, #tpu.memory_space<vmem>>, vector<1x128xf32>
    %201 = vector.shape_cast %171 : vector<1x16x1xf32> to vector<1x1x16xf32>
    %202 = vector.broadcast %201 : vector<1x1x16xf32> to vector<1x16x16xf32>
    %203 = arith.mulf %1, %202 : vector<1x16x16xf32>
    %cst_63 = arith.constant dense<0.000000e+00> : vector<1x16xf32>
    %204 = vector.multi_reduction <add>, %203, %cst_63 [2] : vector<1x16x16xf32> to vector<1x16xf32>
    %205 = vector.shape_cast %204 : vector<1x16xf32> to vector<1x16x1xf32>
    %206 = arith.addf %205, %171 : vector<1x16x1xf32>
    %cst_64 = arith.constant 0.000000e+00 : f32
    %207 = vector.broadcast %cst_64 : f32 to vector<1x16x1xf32>
    %208 = arith.cmpf ogt, %206, %207 : vector<1x16x1xf32>
    %209 = math.rsqrt %206 : vector<1x16x1xf32>
    %cst_65 = arith.constant 0.000000e+00 : f32
    %210 = vector.broadcast %cst_65 : f32 to vector<1x16x1xf32>
    %211 = arith.select %208, %209, %210 : vector<1x16x1xi1>, vector<1x16x1xf32>
    %212 = vector.shape_cast %176 : vector<1x16x128xf32> to vector<16x128xf32>
    %cst_66 = arith.constant dense<0.000000e+00> : vector<16x128xf32>
    %213 = tpu.matmul %212, %198, %cst_66 {dimension_numbers = #tpu.dot_dimension_numbers<[1], [0], [0], [1], [0, 0, 1, 1], [], []>} : vector<16x128xf32>, vector<128x128xf32>, vector<16x128xf32> -> vector<16x128xf32>
    %214 = vector.shape_cast %213 : vector<16x128xf32> to vector<1x16x128xf32>
    %215 = vector.broadcast %211 : vector<1x16x1xf32> to vector<1x16x128xf32>
    %216 = arith.mulf %215, %214 : vector<1x16x128xf32>
    %217 = vector.shape_cast %1 : vector<1x16x16xf32> to vector<16x16xf32>
    %218 = vector.shape_cast %216 : vector<1x16x128xf32> to vector<16x128xf32>
    %cst_67 = arith.constant dense<0.000000e+00> : vector<16x128xf32>
    %219 = tpu.matmul %217, %218, %cst_67 {dimension_numbers = #tpu.dot_dimension_numbers<[1], [0], [0], [1], [0, 0, 1, 1], [], []>} : vector<16x16xf32>, vector<16x128xf32>, vector<16x128xf32> -> vector<16x128xf32>
    %220 = vector.shape_cast %219 : vector<16x128xf32> to vector<1x16x128xf32>
    %221 = vector.broadcast %171 : vector<1x16x1xf32> to vector<1x16x128xf32>
    %222 = arith.mulf %221, %216 : vector<1x16x128xf32>
    %223 = arith.addf %220, %222 : vector<1x16x128xf32>
    %224 = vector.broadcast %211 : vector<1x16x1xf32> to vector<1x16x128xf32>
    %225 = arith.mulf %224, %223 : vector<1x16x128xf32>
    %226 = vector.shape_cast %199 : vector<1x128xf32> to vector<1x1x128xf32>
    %227 = vector.broadcast %226 : vector<1x1x128xf32> to vector<1x16x128xf32>
    %228 = arith.addf %225, %227 : vector<1x16x128xf32>
    %cst_68 = arith.constant 0.000000e+00 : f32
    %229 = vector.broadcast %cst_68 : f32 to vector<1x16x128xf32>
    %230 = arith.maximumf %228, %229 : vector<1x16x128xf32>
    %231 = vector.broadcast %171 : vector<1x16x1xf32> to vector<1x16x128xf32>
    %232 = arith.mulf %230, %231 : vector<1x16x128xf32>
    %233 = vector.shape_cast %200 : vector<1x128xf32> to vector<1x1x128xf32>
    %234 = vector.broadcast %233 : vector<1x1x128xf32> to vector<1x16x128xf32>
    %235 = arith.mulf %232, %234 : vector<1x16x128xf32>
    %cst_69 = arith.constant dense<0.000000e+00> : vector<1x16xf32>
    %236 = vector.multi_reduction <add>, %235, %cst_69 [2] : vector<1x16x128xf32> to vector<1x16xf32>
    %237 = vector.shape_cast %236 : vector<1x16xf32> to vector<1x16x1xf32>
    %238 = vector.shape_cast %237 : vector<1x16x1xf32> to vector<1x1x16xf32>
    %239 = vector.broadcast %238 : vector<1x1x16xf32> to vector<1x16x16xf32>
    %240 = vector.broadcast %237 : vector<1x16x1xf32> to vector<1x16x16xf32>
    %241 = arith.cmpf ogt, %239, %240 : vector<1x16x16xf32>
    %242 = arith.extui %241 : vector<1x16x16xi1> to vector<1x16x16xi32>
    %243 = arith.sitofp %242 : vector<1x16x16xi32> to vector<1x16x16xf32>
    %244 = vector.broadcast %238 : vector<1x1x16xf32> to vector<1x16x16xf32>
    %245 = vector.broadcast %237 : vector<1x16x1xf32> to vector<1x16x16xf32>
    %246 = arith.cmpf oeq, %244, %245 : vector<1x16x16xf32>
    %247 = arith.extui %246 : vector<1x16x16xi1> to vector<1x16x16xi32>
    %248 = arith.sitofp %247 : vector<1x16x16xi32> to vector<1x16x16xf32>
    %249 = vector.shape_cast %7 : vector<16x16xf32> to vector<1x16x16xf32>
    %250 = arith.mulf %248, %249 : vector<1x16x16xf32>
    %251 = arith.addf %243, %250 : vector<1x16x16xf32>
    %252 = vector.broadcast %201 : vector<1x1x16xf32> to vector<1x16x16xf32>
    %253 = arith.mulf %252, %251 : vector<1x16x16xf32>
    %cst_70 = arith.constant dense<0.000000e+00> : vector<1x16xf32>
    %254 = vector.multi_reduction <add>, %253, %cst_70 [2] : vector<1x16x16xf32> to vector<1x16xf32>
    %255 = vector.shape_cast %254 : vector<1x16xf32> to vector<1x16x1xf32>
    %cst_71 = arith.constant dense<0.000000e+00> : vector<1x1xf32>
    %256 = vector.multi_reduction <add>, %171, %cst_71 [1] : vector<1x16x1xf32> to vector<1x1xf32>
    %257 = vector.shape_cast %256 : vector<1x1xf32> to vector<1x1x1xf32>
    %cst_72 = arith.constant 8.000000e-01 : f32
    %258 = vector.broadcast %cst_72 : f32 to vector<1x1x1xf32>
    %259 = arith.mulf %258, %257 : vector<1x1x1xf32>
    %260 = math.ceil %259 : vector<1x1x1xf32>
    %261 = vector.broadcast %260 : vector<1x1x1xf32> to vector<1x16x1xf32>
    %262 = arith.cmpf olt, %255, %261 : vector<1x16x1xf32>
    %263 = arith.extui %262 : vector<1x16x1xi1> to vector<1x16x1xi32>
    %264 = arith.sitofp %263 : vector<1x16x1xi32> to vector<1x16x1xf32>
    %265 = arith.mulf %171, %264 : vector<1x16x1xf32>
    %266 = math.tanh %237 : vector<1x16x1xf32>
    %267 = vector.broadcast %266 : vector<1x16x1xf32> to vector<1x16x128xf32>
    %268 = arith.mulf %232, %267 : vector<1x16x128xf32>
    %269 = vector.broadcast %265 : vector<1x16x1xf32> to vector<1x16x128xf32>
    %270 = arith.mulf %268, %269 : vector<1x16x128xf32>
    %cst_73 = arith.constant dense<0.000000e+00> : vector<1x1xf32>
    %271 = vector.multi_reduction <add>, %265, %cst_73 [1] : vector<1x16x1xf32> to vector<1x1xf32>
    %cst_74 = arith.constant dense<0.000000e+00> : vector<1x128xf32>
    %272 = vector.multi_reduction <add>, %270, %cst_74 [1] : vector<1x16x128xf32> to vector<1x128xf32>
    %cst_75 = arith.constant 1.000000e+00 : f32
    %273 = vector.broadcast %cst_75 : f32 to vector<1x1xf32>
    %274 = arith.maximumf %271, %273 : vector<1x1xf32>
    %275 = vector.broadcast %274 : vector<1x1xf32> to vector<1x128xf32>
    %276 = arith.divf %272, %275 : vector<1x128xf32>
    %cst_76 = arith.constant 5.000000e-01 : f32
    %277 = vector.broadcast %cst_76 : f32 to vector<1x16x1xf32>
    %278 = arith.cmpf ogt, %265, %277 : vector<1x16x1xf32>
    %cst_77 = arith.constant -1.000000e+30 : f32
    %279 = vector.shape_cast %278 : vector<1x16x1xi1> to vector<1x16x1xi1>
    %280 = vector.broadcast %279 : vector<1x16x1xi1> to vector<1x16x128xi1>
    %281 = vector.broadcast %cst_77 : f32 to vector<1x16x128xf32>
    %282 = arith.select %280, %270, %281 : vector<1x16x128xi1>, vector<1x16x128xf32>
    %cst_78 = arith.constant dense<0xFF800000> : vector<1x128xf32>
    %283 = vector.multi_reduction <maximumf>, %282, %cst_78 [1] : vector<1x16x128xf32> to vector<1x128xf32>
    %cst_79 = arith.constant 0.000000e+00 : f32
    %284 = vector.broadcast %cst_79 : f32 to vector<1x1xf32>
    %285 = arith.cmpf ogt, %271, %284 : vector<1x1xf32>
    %cst_80 = arith.constant 0.000000e+00 : f32
    %286 = vector.shape_cast %285 : vector<1x1xi1> to vector<1x1xi1>
    %287 = vector.broadcast %286 : vector<1x1xi1> to vector<1x128xi1>
    %288 = vector.broadcast %cst_80 : f32 to vector<1x128xf32>
    %289 = arith.select %287, %283, %288 : vector<1x128xi1>, vector<1x128xf32>
    %290 = arith.addf %196, %289 : vector<1x128xf32>
    %291 = arith.addf %197, %276 : vector<1x128xf32>
    %c0_81 = arith.constant 0 : index
    %c0_82 = arith.constant 0 : index
    %292 = vector.load %arg13[%c0_81, %c0_82] : memref<128x128xf32, #tpu.memory_space<vmem>>, vector<128x128xf32>
    %c0_83 = arith.constant 0 : index
    %c0_84 = arith.constant 0 : index
    %293 = vector.load %arg14[%c0_83, %c0_84] : memref<1x128xf32, #tpu.memory_space<vmem>>, vector<1x128xf32>
    %c0_85 = arith.constant 0 : index
    %c0_86 = arith.constant 0 : index
    %294 = vector.load %arg15[%c0_85, %c0_86] : memref<1x128xf32, #tpu.memory_space<vmem>>, vector<1x128xf32>
    %295 = vector.shape_cast %265 : vector<1x16x1xf32> to vector<1x1x16xf32>
    %296 = vector.broadcast %295 : vector<1x1x16xf32> to vector<1x16x16xf32>
    %297 = arith.mulf %1, %296 : vector<1x16x16xf32>
    %cst_87 = arith.constant dense<0.000000e+00> : vector<1x16xf32>
    %298 = vector.multi_reduction <add>, %297, %cst_87 [2] : vector<1x16x16xf32> to vector<1x16xf32>
    %299 = vector.shape_cast %298 : vector<1x16xf32> to vector<1x16x1xf32>
    %300 = arith.addf %299, %265 : vector<1x16x1xf32>
    %cst_88 = arith.constant 0.000000e+00 : f32
    %301 = vector.broadcast %cst_88 : f32 to vector<1x16x1xf32>
    %302 = arith.cmpf ogt, %300, %301 : vector<1x16x1xf32>
    %303 = math.rsqrt %300 : vector<1x16x1xf32>
    %cst_89 = arith.constant 0.000000e+00 : f32
    %304 = vector.broadcast %cst_89 : f32 to vector<1x16x1xf32>
    %305 = arith.select %302, %303, %304 : vector<1x16x1xi1>, vector<1x16x1xf32>
    %306 = vector.shape_cast %270 : vector<1x16x128xf32> to vector<16x128xf32>
    %cst_90 = arith.constant dense<0.000000e+00> : vector<16x128xf32>
    %307 = tpu.matmul %306, %292, %cst_90 {dimension_numbers = #tpu.dot_dimension_numbers<[1], [0], [0], [1], [0, 0, 1, 1], [], []>} : vector<16x128xf32>, vector<128x128xf32>, vector<16x128xf32> -> vector<16x128xf32>
    %308 = vector.shape_cast %307 : vector<16x128xf32> to vector<1x16x128xf32>
    %309 = vector.broadcast %305 : vector<1x16x1xf32> to vector<1x16x128xf32>
    %310 = arith.mulf %309, %308 : vector<1x16x128xf32>
    %311 = vector.shape_cast %1 : vector<1x16x16xf32> to vector<16x16xf32>
    %312 = vector.shape_cast %310 : vector<1x16x128xf32> to vector<16x128xf32>
    %cst_91 = arith.constant dense<0.000000e+00> : vector<16x128xf32>
    %313 = tpu.matmul %311, %312, %cst_91 {dimension_numbers = #tpu.dot_dimension_numbers<[1], [0], [0], [1], [0, 0, 1, 1], [], []>} : vector<16x16xf32>, vector<16x128xf32>, vector<16x128xf32> -> vector<16x128xf32>
    %314 = vector.shape_cast %313 : vector<16x128xf32> to vector<1x16x128xf32>
    %315 = vector.broadcast %265 : vector<1x16x1xf32> to vector<1x16x128xf32>
    %316 = arith.mulf %315, %310 : vector<1x16x128xf32>
    %317 = arith.addf %314, %316 : vector<1x16x128xf32>
    %318 = vector.broadcast %305 : vector<1x16x1xf32> to vector<1x16x128xf32>
    %319 = arith.mulf %318, %317 : vector<1x16x128xf32>
    %320 = vector.shape_cast %293 : vector<1x128xf32> to vector<1x1x128xf32>
    %321 = vector.broadcast %320 : vector<1x1x128xf32> to vector<1x16x128xf32>
    %322 = arith.addf %319, %321 : vector<1x16x128xf32>
    %cst_92 = arith.constant 0.000000e+00 : f32
    %323 = vector.broadcast %cst_92 : f32 to vector<1x16x128xf32>
    %324 = arith.maximumf %322, %323 : vector<1x16x128xf32>
    %325 = vector.broadcast %265 : vector<1x16x1xf32> to vector<1x16x128xf32>
    %326 = arith.mulf %324, %325 : vector<1x16x128xf32>
    %327 = vector.shape_cast %294 : vector<1x128xf32> to vector<1x1x128xf32>
    %328 = vector.broadcast %327 : vector<1x1x128xf32> to vector<1x16x128xf32>
    %329 = arith.mulf %326, %328 : vector<1x16x128xf32>
    %cst_93 = arith.constant dense<0.000000e+00> : vector<1x16xf32>
    %330 = vector.multi_reduction <add>, %329, %cst_93 [2] : vector<1x16x128xf32> to vector<1x16xf32>
    %331 = vector.shape_cast %330 : vector<1x16xf32> to vector<1x16x1xf32>
    %332 = vector.shape_cast %331 : vector<1x16x1xf32> to vector<1x1x16xf32>
    %333 = vector.broadcast %332 : vector<1x1x16xf32> to vector<1x16x16xf32>
    %334 = vector.broadcast %331 : vector<1x16x1xf32> to vector<1x16x16xf32>
    %335 = arith.cmpf ogt, %333, %334 : vector<1x16x16xf32>
    %336 = arith.extui %335 : vector<1x16x16xi1> to vector<1x16x16xi32>
    %337 = arith.sitofp %336 : vector<1x16x16xi32> to vector<1x16x16xf32>
    %338 = vector.broadcast %332 : vector<1x1x16xf32> to vector<1x16x16xf32>
    %339 = vector.broadcast %331 : vector<1x16x1xf32> to vector<1x16x16xf32>
    %340 = arith.cmpf oeq, %338, %339 : vector<1x16x16xf32>
    %341 = arith.extui %340 : vector<1x16x16xi1> to vector<1x16x16xi32>
    %342 = arith.sitofp %341 : vector<1x16x16xi32> to vector<1x16x16xf32>
    %343 = vector.shape_cast %7 : vector<16x16xf32> to vector<1x16x16xf32>
    %344 = arith.mulf %342, %343 : vector<1x16x16xf32>
    %345 = arith.addf %337, %344 : vector<1x16x16xf32>
    %346 = vector.broadcast %295 : vector<1x1x16xf32> to vector<1x16x16xf32>
    %347 = arith.mulf %346, %345 : vector<1x16x16xf32>
    %cst_94 = arith.constant dense<0.000000e+00> : vector<1x16xf32>
    %348 = vector.multi_reduction <add>, %347, %cst_94 [2] : vector<1x16x16xf32> to vector<1x16xf32>
    %349 = vector.shape_cast %348 : vector<1x16xf32> to vector<1x16x1xf32>
    %cst_95 = arith.constant dense<0.000000e+00> : vector<1x1xf32>
    %350 = vector.multi_reduction <add>, %265, %cst_95 [1] : vector<1x16x1xf32> to vector<1x1xf32>
    %351 = vector.shape_cast %350 : vector<1x1xf32> to vector<1x1x1xf32>
    %cst_96 = arith.constant 8.000000e-01 : f32
    %352 = vector.broadcast %cst_96 : f32 to vector<1x1x1xf32>
    %353 = arith.mulf %352, %351 : vector<1x1x1xf32>
    %354 = math.ceil %353 : vector<1x1x1xf32>
    %355 = vector.broadcast %354 : vector<1x1x1xf32> to vector<1x16x1xf32>
    %356 = arith.cmpf olt, %349, %355 : vector<1x16x1xf32>
    %357 = arith.extui %356 : vector<1x16x1xi1> to vector<1x16x1xi32>
    %358 = arith.sitofp %357 : vector<1x16x1xi32> to vector<1x16x1xf32>
    %359 = arith.mulf %265, %358 : vector<1x16x1xf32>
    %360 = math.tanh %331 : vector<1x16x1xf32>
    %361 = vector.broadcast %360 : vector<1x16x1xf32> to vector<1x16x128xf32>
    %362 = arith.mulf %326, %361 : vector<1x16x128xf32>
    %363 = vector.broadcast %359 : vector<1x16x1xf32> to vector<1x16x128xf32>
    %364 = arith.mulf %362, %363 : vector<1x16x128xf32>
    %cst_97 = arith.constant dense<0.000000e+00> : vector<1x1xf32>
    %365 = vector.multi_reduction <add>, %359, %cst_97 [1] : vector<1x16x1xf32> to vector<1x1xf32>
    %cst_98 = arith.constant dense<0.000000e+00> : vector<1x128xf32>
    %366 = vector.multi_reduction <add>, %364, %cst_98 [1] : vector<1x16x128xf32> to vector<1x128xf32>
    %cst_99 = arith.constant 1.000000e+00 : f32
    %367 = vector.broadcast %cst_99 : f32 to vector<1x1xf32>
    %368 = arith.maximumf %365, %367 : vector<1x1xf32>
    %369 = vector.broadcast %368 : vector<1x1xf32> to vector<1x128xf32>
    %370 = arith.divf %366, %369 : vector<1x128xf32>
    %cst_100 = arith.constant 5.000000e-01 : f32
    %371 = vector.broadcast %cst_100 : f32 to vector<1x16x1xf32>
    %372 = arith.cmpf ogt, %359, %371 : vector<1x16x1xf32>
    %cst_101 = arith.constant -1.000000e+30 : f32
    %373 = vector.shape_cast %372 : vector<1x16x1xi1> to vector<1x16x1xi1>
    %374 = vector.broadcast %373 : vector<1x16x1xi1> to vector<1x16x128xi1>
    %375 = vector.broadcast %cst_101 : f32 to vector<1x16x128xf32>
    %376 = arith.select %374, %364, %375 : vector<1x16x128xi1>, vector<1x16x128xf32>
    %cst_102 = arith.constant dense<0xFF800000> : vector<1x128xf32>
    %377 = vector.multi_reduction <maximumf>, %376, %cst_102 [1] : vector<1x16x128xf32> to vector<1x128xf32>
    %cst_103 = arith.constant 0.000000e+00 : f32
    %378 = vector.broadcast %cst_103 : f32 to vector<1x1xf32>
    %379 = arith.cmpf ogt, %365, %378 : vector<1x1xf32>
    %cst_104 = arith.constant 0.000000e+00 : f32
    %380 = vector.shape_cast %379 : vector<1x1xi1> to vector<1x1xi1>
    %381 = vector.broadcast %380 : vector<1x1xi1> to vector<1x128xi1>
    %382 = vector.broadcast %cst_104 : f32 to vector<1x128xf32>
    %383 = arith.select %381, %377, %382 : vector<1x128xi1>, vector<1x128xf32>
    %384 = arith.addf %290, %383 : vector<1x128xf32>
    %385 = arith.addf %291, %370 : vector<1x128xf32>
    %c0_105 = arith.constant 0 : index
    %c0_106 = arith.constant 0 : index
    %386 = vector.load %arg16[%c0_105, %c0_106] : memref<256x128xf32, #tpu.memory_space<vmem>>, vector<128x128xf32>
    %c128 = arith.constant 128 : index
    %c0_107 = arith.constant 0 : index
    %387 = vector.load %arg16[%c128, %c0_107] : memref<256x128xf32, #tpu.memory_space<vmem>>, vector<128x128xf32>
    %cst_108 = arith.constant dense<0.000000e+00> : vector<1x128xf32>
    %388 = tpu.matmul %384, %386, %cst_108 {dimension_numbers = #tpu.dot_dimension_numbers<[1], [0], [0], [1], [0, 0, 1, 1], [], []>} : vector<1x128xf32>, vector<128x128xf32>, vector<1x128xf32> -> vector<1x128xf32>
    %cst_109 = arith.constant dense<0.000000e+00> : vector<1x128xf32>
    %389 = tpu.matmul %385, %387, %cst_109 {dimension_numbers = #tpu.dot_dimension_numbers<[1], [0], [0], [1], [0, 0, 1, 1], [], []>} : vector<1x128xf32>, vector<128x128xf32>, vector<1x128xf32> -> vector<1x128xf32>
    %390 = arith.addf %388, %389 : vector<1x128xf32>
    %c0_110 = arith.constant 0 : index
    %c0_111 = arith.constant 0 : index
    %391 = vector.load %arg17[%c0_110, %c0_111] : memref<1x128xf32, #tpu.memory_space<vmem>>, vector<1x128xf32>
    %392 = arith.addf %390, %391 : vector<1x128xf32>
    %cst_112 = arith.constant 0.000000e+00 : f32
    %393 = vector.broadcast %cst_112 : f32 to vector<1x128xf32>
    %394 = arith.maximumf %392, %393 : vector<1x128xf32>
    %c0_113 = arith.constant 0 : index
    %c0_114 = arith.constant 0 : index
    %395 = vector.load %arg18[%c0_113, %c0_114] : memref<128x64xf32, #tpu.memory_space<vmem>>, vector<128x64xf32>
    %cst_115 = arith.constant dense<0.000000e+00> : vector<1x64xf32>
    %396 = tpu.matmul %394, %395, %cst_115 {dimension_numbers = #tpu.dot_dimension_numbers<[1], [0], [0], [1], [0, 0, 1, 1], [], []>} : vector<1x128xf32>, vector<128x64xf32>, vector<1x64xf32> -> vector<1x64xf32>
    %c0_116 = arith.constant 0 : index
    %c0_117 = arith.constant 0 : index
    %397 = vector.load %arg19[%c0_116, %c0_117] : memref<1x64xf32, #tpu.memory_space<vmem>>, vector<1x64xf32>
    %398 = arith.addf %396, %397 : vector<1x64xf32>
    %cst_118 = arith.constant 0.000000e+00 : f32
    %399 = vector.broadcast %cst_118 : f32 to vector<1x64xf32>
    %400 = arith.maximumf %398, %399 : vector<1x64xf32>
    %c0_119 = arith.constant 0 : index
    %c0_120 = arith.constant 0 : index
    %401 = vector.load %arg20[%c0_119, %c0_120] : memref<64x6xf32, #tpu.memory_space<vmem>>, vector<64x6xf32>
    %cst_121 = arith.constant dense<0.000000e+00> : vector<1x6xf32>
    %402 = tpu.matmul %400, %401, %cst_121 {dimension_numbers = #tpu.dot_dimension_numbers<[1], [0], [0], [1], [0, 0, 1, 1], [], []>} : vector<1x64xf32>, vector<64x6xf32>, vector<1x6xf32> -> vector<1x6xf32>
    %c0_122 = arith.constant 0 : index
    %c0_123 = arith.constant 0 : index
    %403 = vector.load %arg21[%c0_122, %c0_123] : memref<1x6xf32, #tpu.memory_space<vmem>>, vector<1x6xf32>
    %404 = arith.addf %402, %403 : vector<1x6xf32>
    %cst_124 = arith.constant dense<0xFF800000> : vector<1xf32>
    %405 = vector.multi_reduction <maximumf>, %404, %cst_124 [1] : vector<1x6xf32> to vector<1xf32>
    %406 = vector.shape_cast %405 : vector<1xf32> to vector<1x1xf32>
    %407 = vector.broadcast %406 : vector<1x1xf32> to vector<1x6xf32>
    %408 = arith.subf %404, %407 : vector<1x6xf32>
    %409 = math.exp %408 : vector<1x6xf32>
    %cst_125 = arith.constant dense<0.000000e+00> : vector<1xf32>
    %410 = vector.multi_reduction <add>, %409, %cst_125 [1] : vector<1x6xf32> to vector<1xf32>
    %411 = vector.shape_cast %410 : vector<1xf32> to vector<1x1xf32>
    %412 = math.log %411 : vector<1x1xf32>
    %413 = vector.broadcast %412 : vector<1x1xf32> to vector<1x6xf32>
    %414 = arith.subf %408, %413 : vector<1x6xf32>
    %415 = vector.shape_cast %414 : vector<1x6xf32> to vector<1x1x6xf32>
    %c0_126 = arith.constant 0 : index
    %c0_127 = arith.constant 0 : index
    %c0_128 = arith.constant 0 : index
    %416 = vector.load %arg22[%c0_126, %c0_127, %c0_128] : memref<1x1x6xf32, #tpu.memory_space<vmem>>, vector<1x1x6xf32>
    tpu.vector_store %arg22[%c0_126, %c0_127, %c0_128], %415 {strides = array<i32>} : memref<1x1x6xf32, #tpu.memory_space<vmem>>, vector<1x1x6xf32>,
    return
  }
  func.func @transform_0(%arg0: i32) -> (i32, i32, i32) {
    %c0_i32 = arith.constant 0 : i32
    %c0_i32_0 = arith.constant 0 : i32
    %c0_i32_1 = arith.constant 0 : i32
    return %arg0, %c0_i32, %c0_i32_0 : i32, i32, i32
  }
  func.func @transform_1(%arg0: i32) -> (i32, i32, i32) {
    %c0_i32 = arith.constant 0 : i32
    %c0_i32_0 = arith.constant 0 : i32
    %c0_i32_1 = arith.constant 0 : i32
    return %arg0, %c0_i32, %c0_i32_0 : i32, i32, i32
  }
  func.func @transform_2(%arg0: i32) -> (i32, i32, i32) {
    %c0_i32 = arith.constant 0 : i32
    %c0_i32_0 = arith.constant 0 : i32
    %c0_i32_1 = arith.constant 0 : i32
    return %arg0, %c0_i32, %c0_i32_0 : i32, i32, i32
  }
  func.func @transform_3(%arg0: i32) -> (i32, i32) {
    %c0_i32 = arith.constant 0 : i32
    %c0_i32_0 = arith.constant 0 : i32
    %c0_i32_1 = arith.constant 0 : i32
    return %c0_i32, %c0_i32_0 : i32, i32
  }
  func.func @transform_4(%arg0: i32) -> (i32, i32) {
    %c0_i32 = arith.constant 0 : i32
    %c0_i32_0 = arith.constant 0 : i32
    %c0_i32_1 = arith.constant 0 : i32
    return %c0_i32, %c0_i32_0 : i32, i32
  }
  func.func @transform_5(%arg0: i32) -> (i32, i32) {
    %c0_i32 = arith.constant 0 : i32
    %c0_i32_0 = arith.constant 0 : i32
    %c0_i32_1 = arith.constant 0 : i32
    return %c0_i32, %c0_i32_0 : i32, i32
  }
  func.func @transform_6(%arg0: i32) -> (i32, i32) {
    %c0_i32 = arith.constant 0 : i32
    %c0_i32_0 = arith.constant 0 : i32
    %c0_i32_1 = arith.constant 0 : i32
    return %c0_i32, %c0_i32_0 : i32, i32
  }
  func.func @transform_7(%arg0: i32) -> (i32, i32) {
    %c0_i32 = arith.constant 0 : i32
    %c0_i32_0 = arith.constant 0 : i32
    %c0_i32_1 = arith.constant 0 : i32
    return %c0_i32, %c0_i32_0 : i32, i32
  }
  func.func @transform_8(%arg0: i32) -> (i32, i32) {
    %c0_i32 = arith.constant 0 : i32
    %c0_i32_0 = arith.constant 0 : i32
    %c0_i32_1 = arith.constant 0 : i32
    return %c0_i32, %c0_i32_0 : i32, i32
  }
  func.func @transform_9(%arg0: i32) -> (i32, i32) {
    %c0_i32 = arith.constant 0 : i32
    %c0_i32_0 = arith.constant 0 : i32
    %c0_i32_1 = arith.constant 0 : i32
    return %c0_i32, %c0_i32_0 : i32, i32
  }
  func.func @transform_10(%arg0: i32) -> (i32, i32) {
    %c0_i32 = arith.constant 0 : i32
    %c0_i32_0 = arith.constant 0 : i32
    %c0_i32_1 = arith.constant 0 : i32
    return %c0_i32, %c0_i32_0 : i32, i32
  }
  func.func @transform_11(%arg0: i32) -> (i32, i32) {
    %c0_i32 = arith.constant 0 : i32
    %c0_i32_0 = arith.constant 0 : i32
    %c0_i32_1 = arith.constant 0 : i32
    return %c0_i32, %c0_i32_0 : i32, i32
  }
  func.func @transform_12(%arg0: i32) -> (i32, i32) {
    %c0_i32 = arith.constant 0 : i32
    %c0_i32_0 = arith.constant 0 : i32
    %c0_i32_1 = arith.constant 0 : i32
    return %c0_i32, %c0_i32_0 : i32, i32
  }
  func.func @transform_13(%arg0: i32) -> (i32, i32) {
    %c0_i32 = arith.constant 0 : i32
    %c0_i32_0 = arith.constant 0 : i32
    %c0_i32_1 = arith.constant 0 : i32
    return %c0_i32, %c0_i32_0 : i32, i32
  }
  func.func @transform_14(%arg0: i32) -> (i32, i32) {
    %c0_i32 = arith.constant 0 : i32
    %c0_i32_0 = arith.constant 0 : i32
    %c0_i32_1 = arith.constant 0 : i32
    return %c0_i32, %c0_i32_0 : i32, i32
  }
  func.func @transform_15(%arg0: i32) -> (i32, i32) {
    %c0_i32 = arith.constant 0 : i32
    %c0_i32_0 = arith.constant 0 : i32
    %c0_i32_1 = arith.constant 0 : i32
    return %c0_i32, %c0_i32_0 : i32, i32
  }
  func.func @transform_16(%arg0: i32) -> (i32, i32) {
    %c0_i32 = arith.constant 0 : i32
    %c0_i32_0 = arith.constant 0 : i32
    %c0_i32_1 = arith.constant 0 : i32
    return %c0_i32, %c0_i32_0 : i32, i32
  }
  func.func @transform_17(%arg0: i32) -> (i32, i32) {
    %c0_i32 = arith.constant 0 : i32
    %c0_i32_0 = arith.constant 0 : i32
    %c0_i32_1 = arith.constant 0 : i32
    return %c0_i32, %c0_i32_0 : i32, i32
  }
  func.func @transform_18(%arg0: i32) -> (i32, i32) {
    %c0_i32 = arith.constant 0 : i32
    %c0_i32_0 = arith.constant 0 : i32
    %c0_i32_1 = arith.constant 0 : i32
    return %c0_i32, %c0_i32_0 : i32, i32
  }
  func.func @transform_19(%arg0: i32) -> (i32, i32) {
    %c0_i32 = arith.constant 0 : i32
    %c0_i32_0 = arith.constant 0 : i32
    %c0_i32_1 = arith.constant 0 : i32
    return %c0_i32, %c0_i32_0 : i32, i32
  }
  func.func @transform_20(%arg0: i32) -> (i32, i32) {
    %c0_i32 = arith.constant 0 : i32
    %c0_i32_0 = arith.constant 0 : i32
    %c0_i32_1 = arith.constant 0 : i32
    return %c0_i32, %c0_i32_0 : i32, i32
  }
  func.func @transform_21(%arg0: i32) -> (i32, i32, i32) {
    %c0_i32 = arith.constant 0 : i32
    %c0_i32_0 = arith.constant 0 : i32
    %c0_i32_1 = arith.constant 0 : i32
    return %arg0, %c0_i32, %c0_i32_0 : i32, i32, i32
  }
}

</mosaic_0001>

<llo_original>
// kernel: net0_forward.1
$region0: #{net0_forward.1}
  #allocation0 [shape = 'u32[]', space=smem, size = 0x4, offset = 0x4, fixed_abs, tag = 'smem constant byte address 0x4 - core index']
  #allocation1 [shape = 'u32[144,128]{1,0:T(1,128)}', space=vmem, size = 0x12000, scoped, tag = 'internal scratch']
  %s0 = inlined_call_operand.vmem [shape: f32[2,16,16], index: 0, kind: input, shape index: {}]
  %s1 = inlined_call_operand.hbm [shape: f32[2,16,16], index: 1, kind: input, shape index: {}]
  %s2 = inlined_call_operand.vmem [shape: f32[2,16,1], index: 2, kind: input, shape index: {}]
  %s3 = inlined_call_operand.hbm [shape: f32[16,128], index: 3, kind: input, shape index: {}]
  %s4 = inlined_call_operand.hbm [shape: f32[1,128], index: 4, kind: input, shape index: {}]
  %s5 = inlined_call_operand.vmem [shape: f32[1,128], index: 5, kind: input, shape index: {}]
  %s6 = inlined_call_operand.hbm [shape: f32[128,128], index: 6, kind: input, shape index: {}]
  %s7 = inlined_call_operand.hbm [shape: f32[1,128], index: 7, kind: input, shape index: {}]
  %s8 = inlined_call_operand.vmem [shape: f32[1,128], index: 8, kind: input, shape index: {}]
  %s9 = inlined_call_operand.hbm [shape: f32[128,128], index: 9, kind: input, shape index: {}]
  %s10 = inlined_call_operand.hbm [shape: f32[1,128], index: 10, kind: input, shape index: {}]
  %s11 = inlined_call_operand.vmem [shape: f32[1,128], index: 11, kind: input, shape index: {}]
  %s12 = inlined_call_operand.hbm [shape: f32[128,128], index: 12, kind: input, shape index: {}]
  %s13 = inlined_call_operand.hbm [shape: f32[1,128], index: 13, kind: input, shape index: {}]
  %s14 = inlined_call_operand.vmem [shape: f32[1,128], index: 14, kind: input, shape index: {}]
  %s15 = inlined_call_operand.vmem [shape: f32[256,128], index: 15, kind: input, shape index: {}]
  %s16 = inlined_call_operand.hbm [shape: f32[1,128], index: 16, kind: input, shape index: {}]
  %s17 = inlined_call_operand.vmem [shape: f32[128,64], index: 17, kind: input, shape index: {}]
  %s18 = inlined_call_operand.hbm [shape: f32[1,64], index: 18, kind: input, shape index: {}]
  %s19 = inlined_call_operand.vmem [shape: f32[64,6], index: 19, kind: input, shape index: {}]
  %s20 = inlined_call_operand.hbm [shape: f32[1,6], index: 20, kind: input, shape index: {}]
  %s21 = inlined_call_operand.hbm [shape: f32[2,1,6], index: 21, kind: output, shape index: {}]
  %s22 = sld [smem:[#allocation0]]
  $region165: #{net0_forward.1} parent=0
    _
  %s24 = ssub.s32 1, %s22
  %s25 = scalar_select 0, %s24, %s22
  $region1: #{net0_forward.1} parent=0
    #allocation2 [shape = 'u8[16384]{0}', space=vmem, size = 0x4000, scoped, tag = 'input window, operand 1']
    #allocation3 [shape = 's32[2]{0}', space=sflag, size = 0x8, scoped, tag = 'scoped memory for net0_forward.1']
    #allocation4 [shape = 's32[2]{0}', space=sflag, size = 0x8, scoped, tag = 'scoped memory for net0_forward.1']
    #allocation5 [shape = 'u8[8192]{0}', space=vmem, size = 0x2000, scoped, tag = 'input window, operand 3, single buffered']
    #allocation6 [shape = 's32[1]{0}', space=sflag, size = 0x4, scoped, tag = 'scoped memory for net0_forward.1']
    #allocation7 [shape = 'u8[512]{0}', space=vmem, size = 0x400, scoped, tag = 'input window, operand 4, single buffered']
    #allocation8 [shape = 'u8[65536]{0}', space=vmem, size = 0x10000, scoped, tag = 'input window, operand 6, single buffered']
    #allocation9 [shape = 's32[1]{0}', space=sflag, size = 0x4, scoped, tag = 'scoped memory for net0_forward.1']
    #allocation10 [shape = 'u8[512]{0}', space=vmem, size = 0x400, scoped, tag = 'input window, operand 7, single buffered']
    #allocation11 [shape = 'u8[65536]{0}', space=vmem, size = 0x10000, scoped, tag = 'input window, operand 9, single buffered']
    #allocation12 [shape = 's32[1]{0}', space=sflag, size = 0x4, scoped, tag = 'scoped memory for net0_forward.1']
    #allocation13 [shape = 'u8[512]{0}', space=vmem, size = 0x400, scoped, tag = 'input window, operand 10, single buffered']
    #allocation14 [shape = 'u8[65536]{0}', space=vmem, size = 0x10000, scoped, tag = 'input window, operand 12, single buffered']
    #allocation15 [shape = 's32[1]{0}', space=sflag, size = 0x4, scoped, tag = 'scoped memory for net0_forward.1']
    #allocation16 [shape = 'u8[512]{0}', space=vmem, size = 0x400, scoped, tag = 'input window, operand 13, single buffered']
    #allocation17 [shape = 'u8[512]{0}', space=vmem, size = 0x400, scoped, tag = 'input window, operand 16, single buffered']
    #allocation18 [shape = 's32[1]{0}', space=sflag, size = 0x4, scoped, tag = 'scoped memory for net0_forward.1']
    #allocation19 [shape = 'u8[512]{0}', space=vmem, size = 0x400, scoped, tag = 'input window, operand 18, single buffered']
    #allocation20 [shape = 'u8[512]{0}', space=vmem, size = 0x400, scoped, tag = 'input window, operand 20, single buffered']
    #allocation21 [shape = 's32[1]{0}', space=sflag, size = 0x4, scoped, tag = 'scoped memory for net0_forward.1']
    #allocation22 [shape = 'u8[1024]{0}', space=vmem, size = 0x400, scoped, tag = 'output window, operand 0']
    %26 = vsyncpa [#allocation3], 0
    %s27 = scalar_lea.sflag [#allocation3], 1
    %28 = vsyncpa %s27, 0
    %29 = vsyncpa [#allocation6], 0
    %30 = vsyncpa [#allocation9], 0
    %31 = vsyncpa [#allocation12], 0
    %32 = vsyncpa [#allocation15], 0
    %33 = vsyncpa [#allocation18], 0
    %34 = vsyncpa [#allocation21], 0
    %35 = vsyncpa [#allocation4], 0
    %s36 = scalar_lea.sflag [#allocation4], 1
    %37 = vsyncpa %s36, 0
    loop: start=0, step=1, limit=4
    $region2: #{net0_forward.1} parent=1 // loop_pre_header
      _
    $region3: #{net0_forward.1} parent=1 // loop_header
      %s39 = sphi 0, %s43
      %p40 = scmp.ge.s32.totalorder %s39, 4
      %s49 = sphi 0, %s51
      %s52 = sphi 0, %s49
      %s53 = sphi 0, %s52
      %s69 = sphi 0, %s53
      %s75 = sphi 0, %s77
      %s78 = sphi 0, %s75
      %s79 = sphi 0, %s78
      %s95 = sphi 0, %s79
      %s101 = sphi 0, %s103
      %s104 = sphi 0, %s101
      %s105 = sphi 0, %s104
      %s121 = sphi 0, %s105
      %s125 = sphi 0, %s125
      %s127 = sphi 0, %s125
      %s128 = sphi 0, %s127
      %s142 = sphi 0, %s128
      %s146 = sphi 0, %s146
      %s148 = sphi 0, %s146
      %s149 = sphi 0, %s148
      %s163 = sphi 0, %s149
      %s167 = sphi 0, %s167
      %s169 = sphi 0, %s167
      %s170 = sphi 0, %s169
      %s184 = sphi 0, %s170
      %s188 = sphi 0, %s188
      %s190 = sphi 0, %s188
      %s191 = sphi 0, %s190
      %s205 = sphi 0, %s191
      %s209 = sphi 0, %s209
      %s211 = sphi 0, %s209
      %s212 = sphi 0, %s211
      %s226 = sphi 0, %s212
      %s230 = sphi 0, %s230
      %s232 = sphi 0, %s230
      %s233 = sphi 0, %s232
      %s247 = sphi 0, %s233
      %s251 = sphi 0, %s251
      %s253 = sphi 0, %s251
      %s254 = sphi 0, %s253
      %s268 = sphi 0, %s254
      %s272 = sphi 0, %s272
      %s274 = sphi 0, %s272
      %s275 = sphi 0, %s274
      %s289 = sphi 0, %s275
      %s293 = sphi 0, %s293
      %s295 = sphi 0, %s293
      %s296 = sphi 0, %s295
      %s310 = sphi 0, %s296
      %s314 = sphi 0, %s314
      %s316 = sphi 0, %s314
      %s317 = sphi 0, %s316
      %s331 = sphi 0, %s317
      %s335 = sphi 0, %s335
      %s337 = sphi 0, %s335
      %s338 = sphi 0, %s337
      %s352 = sphi 0, %s338
      %s356 = sphi 0, %s356
      %s358 = sphi 0, %s356
      %s359 = sphi 0, %s358
      %s373 = sphi 0, %s359
      %s377 = sphi 0, %s377
      %s379 = sphi 0, %s377
      %s380 = sphi 0, %s379
      %s394 = sphi 0, %s380
      %s398 = sphi 0, %s398
      %s400 = sphi 0, %s398
      %s401 = sphi 0, %s400
      %s415 = sphi 0, %s401
      %s419 = sphi 0, %s419
      %s421 = sphi 0, %s419
      %s422 = sphi 0, %s421
      %s436 = sphi 0, %s422
      %s440 = sphi 0, %s440
      %s442 = sphi 0, %s440
      %s443 = sphi 0, %s442
      %s457 = sphi 0, %s443
      %s461 = sphi 0, %s461
      %s463 = sphi 0, %s461
      %s464 = sphi 0, %s463
      %s478 = sphi 0, %s464
      %s482 = sphi 0, %s482
      %s484 = sphi 0, %s482
      %s485 = sphi 0, %s484
      %s499 = sphi 0, %s485
      %s505 = sphi 0, %s507
      %s508 = sphi 0, %s505
      %s509 = sphi 0, %s508
      %s525 = sphi 0, %s509
    $region4: #{net0_forward.1} parent=1 // loop_header_branch
      %42 = sbr.rel (%p40) target = $region8
    $region5: #{net0_forward.1} parent=1 // loop_body
      %s44 = ssub.s32 %s39, 1
      %s45 = ssub.s32 %s39, 2
      %s46 = sadd.s32 %s39, 1
      %s47 = ssub.s32 %s39, %s46
      %p48 = scmp.eq.s32.totalorder %s47, 0
      %s50 = sadd.s32 %s49, 1
      %s51 = scalar_select %p48, %s49, %s50
      %p54 = pneg %p48
      %p55 = scmp.eq.s32.totalorder %s39, 1
      %p56 = por %p54, %p55
      %p57 = scmp.ne.s32.totalorder %s49, %s52
      %p58 = scmp.eq.s32.totalorder %s39, 0
      %p59 = por %p57, %p58
      %p60 = scmp.ne.s32.totalorder %s49, %s52
      %p61 = scmp.eq.s32.totalorder %s44, 1
      %p62 = por %p60, %p61
      %p63 = scmp.ne.s32.totalorder %s52, %s53
      %p64 = scmp.eq.s32.totalorder %s44, 0
      %p65 = por %p63, %p64
      %p66 = scmp.ne.s32.totalorder %s52, %s53
      %p67 = scmp.eq.s32.totalorder %s45, 1
      %p68 = por %p66, %p67
      %p70 = scmp.ne.s32.totalorder %s53, %s69
      %p71 = scmp.eq.s32.totalorder %s45, 0
      %p72 = por %p70, %p71
      %s73 = ssub.s32 %s39, %s46
      %p74 = scmp.eq.s32.totalorder %s73, 0
      %s76 = sadd.s32 %s75, 1
      %s77 = scalar_select %p74, %s75, %s76
      %p80 = pneg %p74
      %p81 = scmp.eq.s32.totalorder %s39, 1
      %p82 = por %p80, %p81
      %p83 = scmp.ne.s32.totalorder %s75, %s78
      %p84 = scmp.eq.s32.totalorder %s39, 0
      %p85 = por %p83, %p84
      %p86 = scmp.ne.s32.totalorder %s75, %s78
      %p87 = scmp.eq.s32.totalorder %s44, 1
      %p88 = por %p86, %p87
      %p89 = scmp.ne.s32.totalorder %s78, %s79
      %p90 = scmp.eq.s32.totalorder %s44, 0
      %p91 = por %p89, %p90
      %p92 = scmp.ne.s32.totalorder %s78, %s79
      %p93 = scmp.eq.s32.totalorder %s45, 1
      %p94 = por %p92, %p93
      %p96 = scmp.ne.s32.totalorder %s79, %s95
      %p97 = scmp.eq.s32.totalorder %s45, 0
      %p98 = por %p96, %p97
      %s99 = ssub.s32 %s39, %s46
      %p100 = scmp.eq.s32.totalorder %s99, 0
      %s102 = sadd.s32 %s101, 1
      %s103 = scalar_select %p100, %s101, %s102
      %p106 = pneg %p100
      %p107 = scmp.eq.s32.totalorder %s39, 1
      %p108 = por %p106, %p107
      %p109 = scmp.ne.s32.totalorder %s101, %s104
      %p110 = scmp.eq.s32.totalorder %s39, 0
      %p111 = por %p109, %p110
      %p112 = scmp.ne.s32.totalorder %s101, %s104
      %p113 = scmp.eq.s32.totalorder %s44, 1
      %p114 = por %p112, %p113
      %p115 = scmp.ne.s32.totalorder %s104, %s105
      %p116 = scmp.eq.s32.totalorder %s44, 0
      %p117 = por %p115, %p116
      %p118 = scmp.ne.s32.totalorder %s104, %s105
      %p119 = scmp.eq.s32.totalorder %s45, 1
      %p120 = por %p118, %p119
      %p122 = scmp.ne.s32.totalorder %s105, %s121
      %p123 = scmp.eq.s32.totalorder %s45, 0
      %p124 = por %p122, %p123
      %s126 = sadd.s32 %s125, 1
      %p129 = scmp.eq.s32.totalorder %s39, 1
      %p130 = scmp.ne.s32.totalorder %s125, %s127
      %p131 = scmp.eq.s32.totalorder %s39, 0
      %p132 = por %p130, %p131
      %p133 = scmp.ne.s32.totalorder %s125, %s127
      %p134 = scmp.eq.s32.totalorder %s44, 1
      %p135 = por %p133, %p134
      %p136 = scmp.ne.s32.totalorder %s127, %s128
      %p137 = scmp.eq.s32.totalorder %s44, 0
      %p138 = por %p136, %p137
      %p139 = scmp.ne.s32.totalorder %s127, %s128
      %p140 = scmp.eq.s32.totalorder %s45, 1
      %p141 = por %p139, %p140
      %p143 = scmp.ne.s32.totalorder %s128, %s142
      %p144 = scmp.eq.s32.totalorder %s45, 0
      %p145 = por %p143, %p144
      %s147 = sadd.s32 %s146, 1
      %p150 = scmp.eq.s32.totalorder %s39, 1
      %p151 = scmp.ne.s32.totalorder %s146, %s148
      %p152 = scmp.eq.s32.totalorder %s39, 0
      %p153 = por %p151, %p152
      %p154 = scmp.ne.s32.totalorder %s146, %s148
      %p155 = scmp.eq.s32.totalorder %s44, 1
      %p156 = por %p154, %p155
      %p157 = scmp.ne.s32.totalorder %s148, %s149
      %p158 = scmp.eq.s32.totalorder %s44, 0
      %p159 = por %p157, %p158
      %p160 = scmp.ne.s32.totalorder %s148, %s149
      %p161 = scmp.eq.s32.totalorder %s45, 1
      %p162 = por %p160, %p161
      %p164 = scmp.ne.s32.totalorder %s149, %s163
      %p165 = scmp.eq.s32.totalorder %s45, 0
      %p166 = por %p164, %p165
      %s168 = sadd.s32 %s167, 1
      %p171 = scmp.eq.s32.totalorder %s39, 1
      %p172 = scmp.ne.s32.totalorder %s167, %s169
      %p173 = scmp.eq.s32.totalorder %s39, 0
      %p174 = por %p172, %p173
      %p175 = scmp.ne.s32.totalorder %s167, %s169
      %p176 = scmp.eq.s32.totalorder %s44, 1
      %p177 = por %p175, %p176
      %p178 = scmp.ne.s32.totalorder %s169, %s170
      %p179 = scmp.eq.s32.totalorder %s44, 0
      %p180 = por %p178, %p179
      %p181 = scmp.ne.s32.totalorder %s169, %s170
      %p182 = scmp.eq.s32.totalorder %s45, 1
      %p183 = por %p181, %p182
      %p185 = scmp.ne.s32.totalorder %s170, %s184
      %p186 = scmp.eq.s32.totalorder %s45, 0
      %p187 = por %p185, %p186
      %s189 = sadd.s32 %s188, 1
      %p192 = scmp.eq.s32.totalorder %s39, 1
      %p193 = scmp.ne.s32.totalorder %s188, %s190
      %p194 = scmp.eq.s32.totalorder %s39, 0
      %p195 = por %p193, %p194
      %p196 = scmp.ne.s32.totalorder %s188, %s190
      %p197 = scmp.eq.s32.totalorder %s44, 1
      %p198 = por %p196, %p197
      %p199 = scmp.ne.s32.totalorder %s190, %s191
      %p200 = scmp.eq.s32.totalorder %s44, 0
      %p201 = por %p199, %p200
      %p202 = scmp.ne.s32.totalorder %s190, %s191
      %p203 = scmp.eq.s32.totalorder %s45, 1
      %p204 = por %p202, %p203
      %p206 = scmp.ne.s32.totalorder %s191, %s205
      %p207 = scmp.eq.s32.totalorder %s45, 0
      %p208 = por %p206, %p207
      %s210 = sadd.s32 %s209, 1
      %p213 = scmp.eq.s32.totalorder %s39, 1
      %p214 = scmp.ne.s32.totalorder %s209, %s211
      %p215 = scmp.eq.s32.totalorder %s39, 0
      %p216 = por %p214, %p215
      %p217 = scmp.ne.s32.totalorder %s209, %s211
      %p218 = scmp.eq.s32.totalorder %s44, 1
      %p219 = por %p217, %p218
      %p220 = scmp.ne.s32.totalorder %s211, %s212
      %p221 = scmp.eq.s32.totalorder %s44, 0
      %p222 = por %p220, %p221
      %p223 = scmp.ne.s32.totalorder %s211, %s212
      %p224 = scmp.eq.s32.totalorder %s45, 1
      %p225 = por %p223, %p224
      %p227 = scmp.ne.s32.totalorder %s212, %s226
      %p228 = scmp.eq.s32.totalorder %s45, 0
      %p229 = por %p227, %p228
      %s231 = sadd.s32 %s230, 1
      %p234 = scmp.eq.s32.totalorder %s39, 1
      %p235 = scmp.ne.s32.totalorder %s230, %s232
      %p236 = scmp.eq.s32.totalorder %s39, 0
      %p237 = por %p235, %p236
      %p238 = scmp.ne.s32.totalorder %s230, %s232
      %p239 = scmp.eq.s32.totalorder %s44, 1
      %p240 = por %p238, %p239
      %p241 = scmp.ne.s32.totalorder %s232, %s233
      %p242 = scmp.eq.s32.totalorder %s44, 0
      %p243 = por %p241, %p242
      %p244 = scmp.ne.s32.totalorder %s232, %s233
      %p245 = scmp.eq.s32.totalorder %s45, 1
      %p246 = por %p244, %p245
      %p248 = scmp.ne.s32.totalorder %s233, %s247
      %p249 = scmp.eq.s32.totalorder %s45, 0
      %p250 = por %p248, %p249
      %s252 = sadd.s32 %s251, 1
      %p255 = scmp.eq.s32.totalorder %s39, 1
      %p256 = scmp.ne.s32.totalorder %s251, %s253
      %p257 = scmp.eq.s32.totalorder %s39, 0
      %p258 = por %p256, %p257
      %p259 = scmp.ne.s32.totalorder %s251, %s253
      %p260 = scmp.eq.s32.totalorder %s44, 1
      %p261 = por %p259, %p260
      %p262 = scmp.ne.s32.totalorder %s253, %s254
      %p263 = scmp.eq.s32.totalorder %s44, 0
      %p264 = por %p262, %p263
      %p265 = scmp.ne.s32.totalorder %s253, %s254
      %p266 = scmp.eq.s32.totalorder %s45, 1
      %p267 = por %p265, %p266
      %p269 = scmp.ne.s32.totalorder %s254, %s268
      %p270 = scmp.eq.s32.totalorder %s45, 0
      %p271 = por %p269, %p270
      %s273 = sadd.s32 %s272, 1
      %p276 = scmp.eq.s32.totalorder %s39, 1
      %p277 = scmp.ne.s32.totalorder %s272, %s274
      %p278 = scmp.eq.s32.totalorder %s39, 0
      %p279 = por %p277, %p278
      %p280 = scmp.ne.s32.totalorder %s272, %s274
      %p281 = scmp.eq.s32.totalorder %s44, 1
      %p282 = por %p280, %p281
      %p283 = scmp.ne.s32.totalorder %s274, %s275
      %p284 = scmp.eq.s32.totalorder %s44, 0
      %p285 = por %p283, %p284
      %p286 = scmp.ne.s32.totalorder %s274, %s275
      %p287 = scmp.eq.s32.totalorder %s45, 1
      %p288 = por %p286, %p287
      %p290 = scmp.ne.s32.totalorder %s275, %s289
      %p291 = scmp.eq.s32.totalorder %s45, 0
      %p292 = por %p290, %p291
      %s294 = sadd.s32 %s293, 1
      %p297 = scmp.eq.s32.totalorder %s39, 1
      %p298 = scmp.ne.s32.totalorder %s293, %s295
      %p299 = scmp.eq.s32.totalorder %s39, 0
      %p300 = por %p298, %p299
      %p301 = scmp.ne.s32.totalorder %s293, %s295
      %p302 = scmp.eq.s32.totalorder %s44, 1
      %p303 = por %p301, %p302
      %p304 = scmp.ne.s32.totalorder %s295, %s296
      %p305 = scmp.eq.s32.totalorder %s44, 0
      %p306 = por %p304, %p305
      %p307 = scmp.ne.s32.totalorder %s295, %s296
      %p308 = scmp.eq.s32.totalorder %s45, 1
      %p309 = por %p307, %p308
      %p311 = scmp.ne.s32.totalorder %s296, %s310
      %p312 = scmp.eq.s32.totalorder %s45, 0
      %p313 = por %p311, %p312
      %s315 = sadd.s32 %s314, 1
      %p318 = scmp.eq.s32.totalorder %s39, 1
      %p319 = scmp.ne.s32.totalorder %s314, %s316
      %p320 = scmp.eq.s32.totalorder %s39, 0
      %p321 = por %p319, %p320
      %p322 = scmp.ne.s32.totalorder %s314, %s316
      %p323 = scmp.eq.s32.totalorder %s44, 1
      %p324 = por %p322, %p323
      %p325 = scmp.ne.s32.totalorder %s316, %s317
      %p326 = scmp.eq.s32.totalorder %s44, 0
      %p327 = por %p325, %p326
      %p328 = scmp.ne.s32.totalorder %s316, %s317
      %p329 = scmp.eq.s32.totalorder %s45, 1
      %p330 = por %p328, %p329
      %p332 = scmp.ne.s32.totalorder %s317, %s331
      %p333 = scmp.eq.s32.totalorder %s45, 0
      %p334 = por %p332, %p333
      %s336 = sadd.s32 %s335, 1
      %p339 = scmp.eq.s32.totalorder %s39, 1
      %p340 = scmp.ne.s32.totalorder %s335, %s337
      %p341 = scmp.eq.s32.totalorder %s39, 0
      %p342 = por %p340, %p341
      %p343 = scmp.ne.s32.totalorder %s335, %s337
      %p344 = scmp.eq.s32.totalorder %s44, 1
      %p345 = por %p343, %p344
      %p346 = scmp.ne.s32.totalorder %s337, %s338
      %p347 = scmp.eq.s32.totalorder %s44, 0
      %p348 = por %p346, %p347
      %p349 = scmp.ne.s32.totalorder %s337, %s338
      %p350 = scmp.eq.s32.totalorder %s45, 1
      %p351 = por %p349, %p350
      %p353 = scmp.ne.s32.totalorder %s338, %s352
      %p354 = scmp.eq.s32.totalorder %s45, 0
      %p355 = por %p353, %p354
      %s357 = sadd.s32 %s356, 1
      %p360 = scmp.eq.s32.totalorder %s39, 1
      %p361 = scmp.ne.s32.totalorder %s356, %s358
      %p362 = scmp.eq.s32.totalorder %s39, 0
      %p363 = por %p361, %p362
      %p364 = scmp.ne.s32.totalorder %s356, %s358
      %p365 = scmp.eq.s32.totalorder %s44, 1
      %p366 = por %p364, %p365
      %p367 = scmp.ne.s32.totalorder %s358, %s359
      %p368 = scmp.eq.s32.totalorder %s44, 0
      %p369 = por %p367, %p368
      %p370 = scmp.ne.s32.totalorder %s358, %s359
      %p371 = scmp.eq.s32.totalorder %s45, 1
      %p372 = por %p370, %p371
      %p374 = scmp.ne.s32.totalorder %s359, %s373
      %p375 = scmp.eq.s32.totalorder %s45, 0
      %p376 = por %p374, %p375
      %s378 = sadd.s32 %s377, 1
      %p381 = scmp.eq.s32.totalorder %s39, 1
      %p382 = scmp.ne.s32.totalorder %s377, %s379
      %p383 = scmp.eq.s32.totalorder %s39, 0
      %p384 = por %p382, %p383
      %p385 = scmp.ne.s32.totalorder %s377, %s379
      %p386 = scmp.eq.s32.totalorder %s44, 1
      %p387 = por %p385, %p386
      %p388 = scmp.ne.s32.totalorder %s379, %s380
      %p389 = scmp.eq.s32.totalorder %s44, 0
      %p390 = por %p388, %p389
      %p391 = scmp.ne.s32.totalorder %s379, %s380
      %p392 = scmp.eq.s32.totalorder %s45, 1
      %p393 = por %p391, %p392
      %p395 = scmp.ne.s32.totalorder %s380, %s394
      %p396 = scmp.eq.s32.totalorder %s45, 0
      %p397 = por %p395, %p396
      %s399 = sadd.s32 %s398, 1
      %p402 = scmp.eq.s32.totalorder %s39, 1
      %p403 = scmp.ne.s32.totalorder %s398, %s400
      %p404 = scmp.eq.s32.totalorder %s39, 0
      %p405 = por %p403, %p404
      %p406 = scmp.ne.s32.totalorder %s398, %s400
      %p407 = scmp.eq.s32.totalorder %s44, 1
      %p408 = por %p406, %p407
      %p409 = scmp.ne.s32.totalorder %s400, %s401
      %p410 = scmp.eq.s32.totalorder %s44, 0
      %p411 = por %p409, %p410
      %p412 = scmp.ne.s32.totalorder %s400, %s401
      %p413 = scmp.eq.s32.totalorder %s45, 1
      %p414 = por %p412, %p413
      %p416 = scmp.ne.s32.totalorder %s401, %s415
      %p417 = scmp.eq.s32.totalorder %s45, 0
      %p418 = por %p416, %p417
      %s420 = sadd.s32 %s419, 1
      %p423 = scmp.eq.s32.totalorder %s39, 1
      %p424 = scmp.ne.s32.totalorder %s419, %s421
      %p425 = scmp.eq.s32.totalorder %s39, 0
      %p426 = por %p424, %p425
      %p427 = scmp.ne.s32.totalorder %s419, %s421
      %p428 = scmp.eq.s32.totalorder %s44, 1
      %p429 = por %p427, %p428
      %p430 = scmp.ne.s32.totalorder %s421, %s422
      %p431 = scmp.eq.s32.totalorder %s44, 0
      %p432 = por %p430, %p431
      %p433 = scmp.ne.s32.totalorder %s421, %s422
      %p434 = scmp.eq.s32.totalorder %s45, 1
      %p435 = por %p433, %p434
      %p437 = scmp.ne.s32.totalorder %s422, %s436
      %p438 = scmp.eq.s32.totalorder %s45, 0
      %p439 = por %p437, %p438
      %s441 = sadd.s32 %s440, 1
      %p444 = scmp.eq.s32.totalorder %s39, 1
      %p445 = scmp.ne.s32.totalorder %s440, %s442
      %p446 = scmp.eq.s32.totalorder %s39, 0
      %p447 = por %p445, %p446
      %p448 = scmp.ne.s32.totalorder %s440, %s442
      %p449 = scmp.eq.s32.totalorder %s44, 1
      %p450 = por %p448, %p449
      %p451 = scmp.ne.s32.totalorder %s442, %s443
      %p452 = scmp.eq.s32.totalorder %s44, 0
      %p453 = por %p451, %p452
      %p454 = scmp.ne.s32.totalorder %s442, %s443
      %p455 = scmp.eq.s32.totalorder %s45, 1
      %p456 = por %p454, %p455
      %p458 = scmp.ne.s32.totalorder %s443, %s457
      %p459 = scmp.eq.s32.totalorder %s45, 0
      %p460 = por %p458, %p459
      %s462 = sadd.s32 %s461, 1
      %p465 = scmp.eq.s32.totalorder %s39, 1
      %p466 = scmp.ne.s32.totalorder %s461, %s463
      %p467 = scmp.eq.s32.totalorder %s39, 0
      %p468 = por %p466, %p467
      %p469 = scmp.ne.s32.totalorder %s461, %s463
      %p470 = scmp.eq.s32.totalorder %s44, 1
      %p471 = por %p469, %p470
      %p472 = scmp.ne.s32.totalorder %s463, %s464
      %p473 = scmp.eq.s32.totalorder %s44, 0
      %p474 = por %p472, %p473
      %p475 = scmp.ne.s32.totalorder %s463, %s464
      %p476 = scmp.eq.s32.totalorder %s45, 1
      %p477 = por %p475, %p476
      %p479 = scmp.ne.s32.totalorder %s464, %s478
      %p480 = scmp.eq.s32.totalorder %s45, 0
      %p481 = por %p479, %p480
      %s483 = sadd.s32 %s482, 1
      %p486 = scmp.eq.s32.totalorder %s39, 1
      %p487 = scmp.ne.s32.totalorder %s482, %s484
      %p488 = scmp.eq.s32.totalorder %s39, 0
      %p489 = por %p487, %p488
      %p490 = scmp.ne.s32.totalorder %s482, %s484
      %p491 = scmp.eq.s32.totalorder %s44, 1
      %p492 = por %p490, %p491
      %p493 = scmp.ne.s32.totalorder %s484, %s485
      %p494 = scmp.eq.s32.totalorder %s44, 0
      %p495 = por %p493, %p494
      %p496 = scmp.ne.s32.totalorder %s484, %s485
      %p497 = scmp.eq.s32.totalorder %s45, 1
      %p498 = por %p496, %p497
      %p500 = scmp.ne.s32.totalorder %s485, %s499
      %p501 = scmp.eq.s32.totalorder %s45, 0
      %p502 = por %p500, %p501
      %s503 = ssub.s32 %s39, %s46
      %p504 = scmp.eq.s32.totalorder %s503, 0
      %s506 = sadd.s32 %s505, 1
      %s507 = scalar_select %p504, %s505, %s506
      %p510 = pneg %p504
      %p511 = scmp.eq.s32.totalorder %s39, 1
      %p512 = por %p510, %p511
      %p513 = scmp.ne.s32.totalorder %s505, %s508
      %p514 = scmp.eq.s32.totalorder %s39, 0
      %p515 = por %p513, %p514
      %p516 = scmp.ne.s32.totalorder %s505, %s508
      %p517 = scmp.eq.s32.totalorder %s44, 1
      %p518 = por %p516, %p517
      %p519 = scmp.ne.s32.totalorder %s508, %s509
      %p520 = scmp.eq.s32.totalorder %s44, 0
      %p521 = por %p519, %p520
      %p522 = scmp.ne.s32.totalorder %s508, %s509
      %p523 = scmp.eq.s32.totalorder %s45, 1
      %p524 = por %p522, %p523
      %p526 = scmp.ne.s32.totalorder %s509, %s525
      %p527 = scmp.eq.s32.totalorder %s45, 0
      %p528 = por %p526, %p527
      %p529 = scmp.le.s32.totalorder 1, %s39
      %p530 = scmp.lt.s32.totalorder %s39, 3
      %p531 = pnand %p529, %p530
      %p532 = pneg %p531
      // Predicated region
      $region9: #{net0_forward.1} parent=5 // pred_check
        _
      $region10: #{net0_forward.1} parent=5 // pred_check_branch
        %534 = sbr.rel (%p531) target = $region12
      $region11: #{net0_forward.1} parent=5 // pred_region
        %s535 = ssub.s32 %s39, 1
        // Predicated region
        $region13: #{net0_forward.1} parent=11 // pred_check
          %p536 = pneg %p138
        $region14: #{net0_forward.1} parent=11 // pred_check_branch
          %538 = sbr.rel (%p536) target = $region16
        $region15: #{net0_forward.1} parent=11 // pred_region
          %s540 = ssub.s32 256, 256
          %541 = vsyncadd [#allocation6], %s540
          %s542 = sshll.u32 [#allocation5], 4
          %s543 = int_to_ptr.vmem [resolvable:$true] %s542
          %548 = dma.hbm_to_vmem [thread:$0]  %s3, 256, %s543, [#allocation6], 128, 128, 8
        $region16: #{net0_forward.1} parent=11 // pred_fallthru
          _
        // Predicated region
        $region17: #{net0_forward.1} parent=11 // pred_check
          %p549 = pneg %p159
        $region18: #{net0_forward.1} parent=11 // pred_check_branch
          %551 = sbr.rel (%p549) target = $region20
        $region19: #{net0_forward.1} parent=11 // pred_region
          %s553 = ssub.s32 16, 16
          %554 = vsyncadd [#allocation6], %s553
          %s556 = sshll.u32 [#allocation7], 4
          %s557 = int_to_ptr.vmem [resolvable:$true] %s556
          %559 = dma.hbm_to_vmem [thread:$0]  %s4, 16, %s557, [#allocation6]
        $region20: #{net0_forward.1} parent=11 // pred_fallthru
          _
        // Predicated region
        $region21: #{net0_forward.1} parent=11 // pred_check
          %p560 = pneg %p180
        $region22: #{net0_forward.1} parent=11 // pred_check_branch
          %562 = sbr.rel (%p560) target = $region24
        $region23: #{net0_forward.1} parent=11 // pred_region
          _
        $region24: #{net0_forward.1} parent=11 // pred_fallthru
          _
        // Predicated region
        $region25: #{net0_forward.1} parent=11 // pred_check
          %p563 = pneg %p201
        $region26: #{net0_forward.1} parent=11 // pred_check_branch
          %565 = sbr.rel (%p563) target = $region28
        $region27: #{net0_forward.1} parent=11 // pred_region
          %s567 = ssub.s32 2048, 2048
          %568 = vsyncadd [#allocation9], %s567
          %s569 = sshll.u32 [#allocation8], 4
          %s570 = int_to_ptr.vmem [resolvable:$true] %s569
          %575 = dma.hbm_to_vmem [thread:$0]  %s6, 2048, %s570, [#allocation9], 128, 128, 8
        $region28: #{net0_forward.1} parent=11 // pred_fallthru
          _
        // Predicated region
        $region29: #{net0_forward.1} parent=11 // pred_check
          %p576 = pneg %p222
        $region30: #{net0_forward.1} parent=11 // pred_check_branch
          %578 = sbr.rel (%p576) target = $region32
        $region31: #{net0_forward.1} parent=11 // pred_region
          %s580 = ssub.s32 16, 16
          %581 = vsyncadd [#allocation9], %s580
          %s583 = sshll.u32 [#allocation10], 4
          %s584 = int_to_ptr.vmem [resolvable:$true] %s583
          %586 = dma.hbm_to_vmem [thread:$0]  %s7, 16, %s584, [#allocation9]
        $region32: #{net0_forward.1} parent=11 // pred_fallthru
          _
        // Predicated region
        $region33: #{net0_forward.1} parent=11 // pred_check
          %p587 = pneg %p243
        $region34: #{net0_forward.1} parent=11 // pred_check_branch
          %589 = sbr.rel (%p587) target = $region36
        $region35: #{net0_forward.1} parent=11 // pred_region
          _
        $region36: #{net0_forward.1} parent=11 // pred_fallthru
          _
        // Predicated region
        $region37: #{net0_forward.1} parent=11 // pred_check
          %p590 = pneg %p264
        $region38: #{net0_forward.1} parent=11 // pred_check_branch
          %592 = sbr.rel (%p590) target = $region40
        $region39: #{net0_forward.1} parent=11 // pred_region
          %s594 = ssub.s32 2048, 2048
          %595 = vsyncadd [#allocation12], %s594
          %s596 = sshll.u32 [#allocation11], 4
          %s597 = int_to_ptr.vmem [resolvable:$true] %s596
          %602 = dma.hbm_to_vmem [thread:$0]  %s9, 2048, %s597, [#allocation12], 128, 128, 8
        $region40: #{net0_forward.1} parent=11 // pred_fallthru
          _
        // Predicated region
        $region41: #{net0_forward.1} parent=11 // pred_check
          %p603 = pneg %p285
        $region42: #{net0_forward.1} parent=11 // pred_check_branch
          %605 = sbr.rel (%p603) target = $region44
        $region43: #{net0_forward.1} parent=11 // pred_region
          %s607 = ssub.s32 16, 16
          %608 = vsyncadd [#allocation12], %s607
          %s610 = sshll.u32 [#allocation13], 4
          %s611 = int_to_ptr.vmem [resolvable:$true] %s610
          %613 = dma.hbm_to_vmem [thread:$0]  %s10, 16, %s611, [#allocation12]
        $region44: #{net0_forward.1} parent=11 // pred_fallthru
          _
        // Predicated region
        $region45: #{net0_forward.1} parent=11 // pred_check
          %p614 = pneg %p306
        $region46: #{net0_forward.1} parent=11 // pred_check_branch
          %616 = sbr.rel (%p614) target = $region48
        $region47: #{net0_forward.1} parent=11 // pred_region
          _
        $region48: #{net0_forward.1} parent=11 // pred_fallthru
          _
        // Predicated region
        $region49: #{net0_forward.1} parent=11 // pred_check
          %p617 = pneg %p327
        $region50: #{net0_forward.1} parent=11 // pred_check_branch
          %619 = sbr.rel (%p617) target = $region52
        $region51: #{net0_forward.1} parent=11 // pred_region
          %s621 = ssub.s32 2048, 2048
          %622 = vsyncadd [#allocation15], %s621
          %s623 = sshll.u32 [#allocation14], 4
          %s624 = int_to_ptr.vmem [resolvable:$true] %s623
          %629 = dma.hbm_to_vmem [thread:$0]  %s12, 2048, %s624, [#allocation15], 128, 128, 8
        $region52: #{net0_forward.1} parent=11 // pred_fallthru
          _
        // Predicated region
        $region53: #{net0_forward.1} parent=11 // pred_check
          %p630 = pneg %p348
        $region54: #{net0_forward.1} parent=11 // pred_check_branch
          %632 = sbr.rel (%p630) target = $region56
        $region55: #{net0_forward.1} parent=11 // pred_region
          %s634 = ssub.s32 16, 16
          %635 = vsyncadd [#allocation15], %s634
          %s637 = sshll.u32 [#allocation16], 4
          %s638 = int_to_ptr.vmem [resolvable:$true] %s637
          %640 = dma.hbm_to_vmem [thread:$0]  %s13, 16, %s638, [#allocation15]
        $region56: #{net0_forward.1} parent=11 // pred_fallthru
          _
        // Predicated region
        $region57: #{net0_forward.1} parent=11 // pred_check
          %p641 = pneg %p369
        $region58: #{net0_forward.1} parent=11 // pred_check_branch
          %643 = sbr.rel (%p641) target = $region60
        $region59: #{net0_forward.1} parent=11 // pred_region
          _
        $region60: #{net0_forward.1} parent=11 // pred_fallthru
          _
        // Predicated region
        $region61: #{net0_forward.1} parent=11 // pred_check
          %p644 = pneg %p390
        $region62: #{net0_forward.1} parent=11 // pred_check_branch
          %646 = sbr.rel (%p644) target = $region64
        $region63: #{net0_forward.1} parent=11 // pred_region
          _
        $region64: #{net0_forward.1} parent=11 // pred_fallthru
          _
        // Predicated region
        $region65: #{net0_forward.1} parent=11 // pred_check
          %p647 = pneg %p411
        $region66: #{net0_forward.1} parent=11 // pred_check_branch
          %649 = sbr.rel (%p647) target = $region68
        $region67: #{net0_forward.1} parent=11 // pred_region
          %s651 = ssub.s32 16, 16
          %652 = vsyncadd [#allocation18], %s651
          %s654 = sshll.u32 [#allocation17], 4
          %s655 = int_to_ptr.vmem [resolvable:$true] %s654
          %657 = dma.hbm_to_vmem [thread:$0]  %s16, 16, %s655, [#allocation18]
        $region68: #{net0_forward.1} parent=11 // pred_fallthru
          _
        // Predicated region
        $region69: #{net0_forward.1} parent=11 // pred_check
          %p658 = pneg %p432
        $region70: #{net0_forward.1} parent=11 // pred_check_branch
          %660 = sbr.rel (%p658) target = $region72
        $region71: #{net0_forward.1} parent=11 // pred_region
          _
        $region72: #{net0_forward.1} parent=11 // pred_fallthru
          _
        // Predicated region
        $region73: #{net0_forward.1} parent=11 // pred_check
          %p661 = pneg %p453
        $region74: #{net0_forward.1} parent=11 // pred_check_branch
          %663 = sbr.rel (%p661) target = $region76
        $region75: #{net0_forward.1} parent=11 // pred_region
          %s665 = ssub.s32 16, 16
          %666 = vsyncadd [#allocation18], %s665
          %s668 = sshll.u32 [#allocation19], 4
          %s669 = int_to_ptr.vmem [resolvable:$true] %s668
          %671 = dma.hbm_to_vmem [thread:$0]  %s18, 16, %s669, [#allocation18]
        $region76: #{net0_forward.1} parent=11 // pred_fallthru
          _
        // Predicated region
        $region77: #{net0_forward.1} parent=11 // pred_check
          %p672 = pneg %p474
        $region78: #{net0_forward.1} parent=11 // pred_check_branch
          %674 = sbr.rel (%p672) target = $region80
        $region79: #{net0_forward.1} parent=11 // pred_region
          _
        $region80: #{net0_forward.1} parent=11 // pred_fallthru
          _
        // Predicated region
        $region81: #{net0_forward.1} parent=11 // pred_check
          %p675 = pneg %p495
        $region82: #{net0_forward.1} parent=11 // pred_check_branch
          %677 = sbr.rel (%p675) target = $region84
        $region83: #{net0_forward.1} parent=11 // pred_region
          %s679 = ssub.s32 16, 16
          %680 = vsyncadd [#allocation21], %s679
          %s682 = sshll.u32 [#allocation20], 4
          %s683 = int_to_ptr.vmem [resolvable:$true] %s682
          %685 = dma.hbm_to_vmem [thread:$0]  %s20, 16, %s683, [#allocation21]
        $region84: #{net0_forward.1} parent=11 // pred_fallthru
          _
      $region12: #{net0_forward.1} parent=5 // pred_fallthru
        _
      %p686 = scmp.lt.s32.totalorder %s39, 2
      // Predicated region
      $region85: #{net0_forward.1} parent=5 // pred_check
        %p687 = pneg %p686
      $region86: #{net0_forward.1} parent=5 // pred_check_branch
        %689 = sbr.rel (%p687) target = $region88
      $region87: #{net0_forward.1} parent=5 // pred_region
        // Predicated region
        $region89: #{net0_forward.1} parent=87 // pred_check
          %p690 = pneg %p59
        $region90: #{net0_forward.1} parent=87 // pred_check_branch
          %692 = sbr.rel (%p690) target = $region92
        $region91: #{net0_forward.1} parent=87 // pred_region
          %p693 = scmp.lt.s32.totalorder %s39, 1
          %s694 = scalar_select %p693, %s39, 1
          %s695 = smul.addr %s694, 2
          %s696 = smul.addr %s695, 8
          %s697 = scalar_lea.vmem %s0, %s696
        $region92: #{net0_forward.1} parent=87 // pred_fallthru
          _
        // Predicated region
        $region93: #{net0_forward.1} parent=87 // pred_check
          %p698 = pneg %p85
        $region94: #{net0_forward.1} parent=87 // pred_check_branch
          %700 = sbr.rel (%p698) target = $region96
        $region95: #{net0_forward.1} parent=87 // pred_region
          %s701 = sand.u32 %s75, 1
          %s702 = scalar_lea.sflag [#allocation3], %s701
          %s703 = sand.u32 %s75, 1
          %s704 = smul.addr %s703, 16
          %s705 = scalar_lea.vmem [#allocation2], %s704
          %s707 = ssub.s32 256, 256
          %708 = vsyncadd %s702, %s707
          %s709 = smul.addr %s39, 2
          %s710 = smul.addr %s709, 128
          %s711 = scalar_lea.hbm %s1, %s710
          %s712 = sshll.u32 %s705, 4
          %s713 = int_to_ptr.vmem [resolvable:$true] %s712
          %718 = dma.hbm_to_vmem [thread:$0]  %s711, 256, %s713, %s702, 128, 128, 8
        $region96: #{net0_forward.1} parent=87 // pred_fallthru
          _
        // Predicated region
        $region97: #{net0_forward.1} parent=87 // pred_check
          %p719 = pneg %p111
        $region98: #{net0_forward.1} parent=87 // pred_check_branch
          %721 = sbr.rel (%p719) target = $region100
        $region99: #{net0_forward.1} parent=87 // pred_region
          %p722 = scmp.lt.s32.totalorder %s39, 1
          %s723 = scalar_select %p722, %s39, 1
          %s724 = smul.addr %s723, 2
          %s725 = smul.addr %s724, 8
          %s726 = scalar_lea.vmem %s2, %s725
        $region100: #{net0_forward.1} parent=87 // pred_fallthru
          _
      $region88: #{net0_forward.1} parent=5 // pred_fallthru
        _
      %p727 = scmp.le.s32.totalorder 1, %s39
      %p728 = scmp.lt.s32.totalorder %s39, 3
      %p729 = pnand %p727, %p728
      %p730 = pneg %p729
      // Predicated region
      $region101: #{net0_forward.1} parent=5 // pred_check
        _
      $region102: #{net0_forward.1} parent=5 // pred_check_branch
        %732 = sbr.rel (%p729) target = $region104
      $region103: #{net0_forward.1} parent=5 // pred_region
        %s733 = ssub.s32 %s39, 1
        %s734 = sand.u32 %s78, 1
        %s735 = scalar_lea.sflag [#allocation3], %s734
        %s736 = sand.u32 %s78, 1
        %s737 = smul.addr %s736, 16
        %s738 = scalar_lea.vmem [#allocation2], %s737
        // Predicated region
        $region105: #{net0_forward.1} parent=103 // pred_check
          %p739 = pneg %p91
        $region106: #{net0_forward.1} parent=103 // pred_check_branch
          %741 = sbr.rel (%p739) target = $region108
        $region107: #{net0_forward.1} parent=103 // pred_region
          %742 = dma.done %s735, 256
        $region108: #{net0_forward.1} parent=103 // pred_fallthru
          _
        // Predicated region
        $region109: #{net0_forward.1} parent=103 // pred_check
          %p743 = pneg %p138
        $region110: #{net0_forward.1} parent=103 // pred_check_branch
          %745 = sbr.rel (%p743) target = $region112
        $region111: #{net0_forward.1} parent=103 // pred_region
          %746 = dma.done [#allocation6], 256
        $region112: #{net0_forward.1} parent=103 // pred_fallthru
          _
        // Predicated region
        $region113: #{net0_forward.1} parent=103 // pred_check
          %p747 = pneg %p159
        $region114: #{net0_forward.1} parent=103 // pred_check_branch
          %749 = sbr.rel (%p747) target = $region116
        $region115: #{net0_forward.1} parent=103 // pred_region
          %750 = dma.done [#allocation6], 16
        $region116: #{net0_forward.1} parent=103 // pred_fallthru
          _
        // Predicated region
        $region117: #{net0_forward.1} parent=103 // pred_check
          %p751 = pneg %p201
        $region118: #{net0_forward.1} parent=103 // pred_check_branch
          %753 = sbr.rel (%p751) target = $region120
        $region119: #{net0_forward.1} parent=103 // pred_region
          %754 = dma.done [#allocation9], 2048
        $region120: #{net0_forward.1} parent=103 // pred_fallthru
          _
        // Predicated region
        $region121: #{net0_forward.1} parent=103 // pred_check
          %p755 = pneg %p222
        $region122: #{net0_forward.1} parent=103 // pred_check_branch
          %757 = sbr.rel (%p755) target = $region124
        $region123: #{net0_forward.1} parent=103 // pred_region
          %758 = dma.done [#allocation9], 16
        $region124: #{net0_forward.1} parent=103 // pred_fallthru
          _
        // Predicated region
        $region125: #{net0_forward.1} parent=103 // pred_check
          %p759 = pneg %p264
        $region126: #{net0_forward.1} parent=103 // pred_check_branch
          %761 = sbr.rel (%p759) target = $region128
        $region127: #{net0_forward.1} parent=103 // pred_region
          %762 = dma.done [#allocation12], 2048
        $region128: #{net0_forward.1} parent=103 // pred_fallthru
          _
        // Predicated region
        $region129: #{net0_forward.1} parent=103 // pred_check
          %p763 = pneg %p285
        $region130: #{net0_forward.1} parent=103 // pred_check_branch
          %765 = sbr.rel (%p763) target = $region132
        $region131: #{net0_forward.1} parent=103 // pred_region
          %766 = dma.done [#allocation12], 16
        $region132: #{net0_forward.1} parent=103 // pred_fallthru
          _
        // Predicated region
        $region133: #{net0_forward.1} parent=103 // pred_check
          %p767 = pneg %p327
        $region134: #{net0_forward.1} parent=103 // pred_check_branch
          %769 = sbr.rel (%p767) target = $region136
        $region135: #{net0_forward.1} parent=103 // pred_region
          %770 = dma.done [#allocation15], 2048
        $region136: #{net0_forward.1} parent=103 // pred_fallthru
          _
        // Predicated region
        $region137: #{net0_forward.1} parent=103 // pred_check
          %p771 = pneg %p348
        $region138: #{net0_forward.1} parent=103 // pred_check_branch
          %773 = sbr.rel (%p771) target = $region140
        $region139: #{net0_forward.1} parent=103 // pred_region
          %774 = dma.done [#allocation15], 16
        $region140: #{net0_forward.1} parent=103 // pred_fallthru
          _
        // Predicated region
        $region141: #{net0_forward.1} parent=103 // pred_check
          %p775 = pneg %p411
        $region142: #{net0_forward.1} parent=103 // pred_check_branch
          %777 = sbr.rel (%p775) target = $region144
        $region143: #{net0_forward.1} parent=103 // pred_region
          %778 = dma.done [#allocation18], 16
        $region144: #{net0_forward.1} parent=103 // pred_fallthru
          _
        // Predicated region
        $region145: #{net0_forward.1} parent=103 // pred_check
          %p779 = pneg %p453
        $region146: #{net0_forward.1} parent=103 // pred_check_branch
          %781 = sbr.rel (%p779) target = $region148
        $region147: #{net0_forward.1} parent=103 // pred_region
          %782 = dma.done [#allocation18], 16
        $region148: #{net0_forward.1} parent=103 // pred_fallthru
          _
        // Predicated region
        $region149: #{net0_forward.1} parent=103 // pred_check
          %p783 = pneg %p495
        $region150: #{net0_forward.1} parent=103 // pred_check_branch
          %785 = sbr.rel (%p783) target = $region152
        $region151: #{net0_forward.1} parent=103 // pred_region
          %786 = dma.done [#allocation21], 16
        $region152: #{net0_forward.1} parent=103 // pred_fallthru
          _
        %p787 = scmp.lt.s32.totalorder %s44, 1
        %s788 = scalar_select %p787, %s44, 1
        %s789 = smul.addr %s788, 2
        %s790 = smul.addr %s789, 8
        %s791 = scalar_lea.vmem %s0, %s790
        %p792 = pneg %p65
        %p793 = pneg %p62
        %s794 = sand.u32 %s78, 1
        %s795 = scalar_lea.sflag [#allocation3], %s794
        %s796 = sand.u32 %s78, 1
        %s797 = smul.addr %s796, 16
        %s798 = scalar_lea.vmem [#allocation2], %s797
        %p799 = pneg %p91
        %p800 = pneg %p88
        %p801 = scmp.lt.s32.totalorder %s44, 1
        %s802 = scalar_select %p801, %s44, 1
        %s803 = smul.addr %s802, 2
        %s804 = smul.addr %s803, 8
        %s805 = scalar_lea.vmem %s2, %s804
        %p806 = pneg %p117
        %p807 = pneg %p114
        %p808 = pneg %p138
        %p809 = pneg %p135
        %p810 = pneg %p159
        %p811 = pneg %p156
        %p812 = pneg %p180
        %p813 = pneg %p177
        %p814 = pneg %p201
        %p815 = pneg %p198
        %p816 = pneg %p222
        %p817 = pneg %p219
        %p818 = pneg %p243
        %p819 = pneg %p240
        %p820 = pneg %p264
        %p821 = pneg %p261
        %p822 = pneg %p285
        %p823 = pneg %p282
        %p824 = pneg %p306
        %p825 = pneg %p303
        %p826 = pneg %p327
        %p827 = pneg %p324
        %p828 = pneg %p348
        %p829 = pneg %p345
        %p830 = pneg %p369
        %p831 = pneg %p366
        %p832 = pneg %p390
        %p833 = pneg %p387
        %p834 = pneg %p411
        %p835 = pneg %p408
        %p836 = pneg %p432
        %p837 = pneg %p429
        %p838 = pneg %p453
        %p839 = pneg %p450
        %p840 = pneg %p474
        %p841 = pneg %p471
        %p842 = pneg %p495
        %p843 = pneg %p492
        %p844 = pneg %p521
        %p845 = pneg %p518
        %s846 = sand.u32 %s508, 1
        %s847 = scalar_lea.sflag [#allocation4], %s846
        %s848 = sand.u32 %s508, 1
        %s849 = scalar_lea.vmem [#allocation22], %s848
        %p850 = scmp.lt.s32.totalorder %s44, 1
        %s851 = scalar_select %p850, %s44, 1
        %s852 = smul.addr %s851, 2
        %s853 = smul.addr %s852, 8
        %s854 = scalar_lea.vmem %s0, %s853
        %p855 = scmp.lt.s32.totalorder %s44, 1
        %s856 = scalar_select %p855, %s44, 1
        %s857 = smul.addr %s856, 2
        %s858 = smul.addr %s857, 8
        %s859 = scalar_lea.vmem %s2, %s858
        %v860 = vld [vmem:[%s854] sm:$0xff]
        %v861 = vld [vmem:[%s854 + $0x8] sm:$0xff]
        %v862 = vld [vmem:[%s738] sm:$0xff]
        %v863 = vld [vmem:[%s738 + $0x8] sm:$0xff]
        %v864 = vld [vmem:[%s859] sm:$0xff]
        %v865 = vld [vmem:[%s859 + $0x8] sm:$0xff]
        %v866 = vlaneseq
        %v867 = vshrl.u32 %v866, 7
        %v868 = vadd.s32 %v867, 8
        %v869 = vlaneseq
        %v870 = vand.u32 %v869, 127
        %vm871 = vcmp.lt.s32.totalorder %v870, %v867
        %vm872 = vcmp.lt.s32.totalorder %v870, %v868
        %v873 = vsel %vm871, 1, 0
        %v874 = vsel %vm872, 1, 0
        %v875 = vcvt.s32.f32 %v873
        %v876 = vcvt.s32.f32 %v874
        %v877 = vld [vmem:[#allocation5] sm:$0xff]
        %v878 = vld [vmem:[#allocation5 + $0x8] sm:$0xff]
        %v879 = vld [vmem:[#allocation7] sm:$0x1]
        %v880 = vld [vmem:[%s5] sm:$0x1]
        %883 = vset.pattern.permute.xlu0 0
        %884 = vperm.xlu0 %883, %v864
        %v885 = vpop.permute.xlu0 %884
        %886 = vset.pattern.permute.xlu0 0
        %887 = vperm.xlu0 %886, %v865
        %v888 = vpop.permute.xlu0 %887
        %v889 = vlaneseq
        %v890 = vshrl.u32 %v889, 7
        %v891 = vsub.s32 %v870, %v890
        %v892 = vrot.slane %v885, %v891
        %v893 = vadd.s32 %v870, 4294967288
        %v894 = vlaneseq
        %v895 = vshrl.u32 %v894, 7
        %v896 = vsub.s32 %v893, %v895
        %v897 = vrot.slane %v888, %v896
        %vm898 = vcmask 130112
        %v899 = vsel %vm898, %v897, %v892
        %vm900 = vcmask 1041409
        %vm901 = vcmask 1042434
        %v902 = vsel %vm901, %v899, %v899
        %vm903 = vcmask 1043459
        %v904 = vsel %vm903, %v899, %v902
        %vm905 = vcmask 1044484
        %v906 = vsel %vm905, %v899, %v904
        %vm907 = vcmask 1045509
        %v908 = vsel %vm907, %v899, %v906
        %vm909 = vcmask 1046534
        %v910 = vsel %vm909, %v899, %v908
        %vm911 = vcmask 1047559
        %v912 = vsel %vm911, %v899, %v910
        %v914 = vmul.f32 %v862, %v912
        %v915 = vmul.f32 %v863, %v912
        %vm916 = vcmask 130048
        %v917 = vsel %vm916, %v914, 0.0
        %918 = vadd.xlane.f32.xlu0 %v917
        %v919 = vpop.xlane.xlu0 %918
        %v920 = vsel %vm916, %v915, 0.0
        %921 = vadd.xlane.f32.xlu0 %v920
        %v922 = vpop.xlane.xlu0 %921
        %v923 = vadd.f32 %v919, %v864
        %v924 = vadd.f32 %v922, %v865
        %vm925 = vcmp.gt.f32.partialorder %v923, 0.0
        %vm926 = vcmp.gt.f32.partialorder %v924, 0.0
        %v927 = vrsqrt.pop %v923
        %v928 = vrsqrt.pop %v924
        %v929 = vsel %vm925, %v927, 0.0
        %v930 = vsel %vm926, %v928, 0.0
        %v932 = vsel %vm916, %v860, 0
        %v935 = vsel %vm916, %v861, 0
        %937 = vmatprep.subr.mxu0 0.0
        %938 = vmatpush1.msra.mxu0 0.0
        %939 = vmatprep.subr.mxu0 0.0
        %940 = vmatpush1.msra.mxu0 0.0
        %941 = vmatprep.subr.mxu0 0.0
        %942 = vmatpush1.msra.mxu0 0.0
        %943 = vmatprep.subr.mxu0 0.0
        %944 = vmatpush1.msra.mxu0 0.0
        %945 = vmatprep.subr.mxu0 0.0
        %946 = vmatpush1.msra.mxu0 0.0
        %947 = vmatprep.subr.mxu0 0.0
        %948 = vmatpush1.msra.mxu0 0.0
        %949 = vmatprep.subr.mxu0 0.0
        %950 = vmatpush1.msra.mxu0 0.0
        %951 = vmatprep.subr.mxu0 0.0
        %952 = vmatpush1.msra.mxu0 0.0
        %953 = vmatprep.subr.mxu0 0.0
        %954 = vmatpush1.msra.mxu0 0.0
        %955 = vmatprep.subr.mxu0 0.0
        %956 = vmatpush1.msra.mxu0 0.0
        %957 = vmatprep.subr.mxu0 0.0
        %958 = vmatpush1.msra.mxu0 0.0
        %959 = vmatprep.subr.mxu0 0.0
        %960 = vmatpush1.msra.mxu0 0.0
        %961 = vmatprep.subr.mxu0 0.0
        %962 = vmatpush1.msra.mxu0 0.0
        %963 = vmatprep.subr.mxu0 0.0
        %964 = vmatpush1.msra.mxu0 0.0
        %965 = vmatprep.subr.mxu0 0.0
        %966 = vmatpush1.msra.mxu0 %v878
        %967 = vmatprep.subr.mxu0 0.0
        %968 = vmatpush1.msra.mxu0 %v877
        %969 = vmatprep.subr.mxu0 0.0
        %970 = vmatpush2.msra.mxu0 0.0
        %971 = vmatprep.subr.mxu0 0.0
        %972 = vmatpush2.msra.mxu0 0.0
        %973 = vmatprep.subr.mxu0 0.0
        %974 = vmatpush2.msra.mxu0 0.0
        %975 = vmatprep.subr.mxu0 0.0
        %976 = vmatpush2.msra.mxu0 0.0
        %977 = vmatprep.subr.mxu0 0.0
        %978 = vmatpush2.msra.mxu0 0.0
        %979 = vmatprep.subr.mxu0 0.0
        %980 = vmatpush2.msra.mxu0 0.0
        %981 = vmatprep.subr.mxu0 0.0
        %982 = vmatpush2.msra.mxu0 0.0
        %983 = vmatprep.subr.mxu0 0.0
        %984 = vmatpush2.msra.mxu0 0.0
        %985 = vmatprep.subr.mxu0 0.0
        %986 = vmatpush2.msra.mxu0 0.0
        %987 = vmatprep.subr.mxu0 0.0
        %988 = vmatpush2.msra.mxu0 0.0
        %989 = vmatprep.subr.mxu0 0.0
        %990 = vmatpush2.msra.mxu0 0.0
        %991 = vmatprep.subr.mxu0 0.0
        %992 = vmatpush2.msra.mxu0 0.0
        %993 = vmatprep.subr.mxu0 0.0
        %994 = vmatpush2.msra.mxu0 0.0
        %995 = vmatprep.subr.mxu0 0.0
        %996 = vmatpush2.msra.mxu0 0.0
        %997 = vmatprep.subr.mxu0 0.0
        %998 = vmatpush2.msra.mxu0 0.0
        %999 = vmatprep.subr.mxu0 0.0
        %1000 = vmatpush2.msra.mxu0 0.0
        %1001 = vmatprep.mubr.f32.mxu0 0.0
        %1002 = vmatmul.mubr.f32.gmra.mxu0 %v932
        %v1003 = vpop.f32.mrf.mxu0
        %v1004 = vadd.f32 0.0, %v1003
        %v1005 = vpop.f32.mrf.mxu0
        %1006 = vmatprep.mubr.f32.mxu0 0.0
        %1007 = vmatmul.mubr.f32.gmra.mxu0 %v935
        %v1008 = vpop.f32.mrf.mxu0
        %v1009 = vadd.f32 0.0, %v1008
        %v1010 = vpop.f32.mrf.mxu0
        %1011 = vdwg.mxu0
        %1013 = vset.pattern.permute.xlu0 0
        %1014 = vperm.xlu0 %1013, %v929
        %v1015 = vpop.permute.xlu0 %1014
        %1018 = vset.pattern.permute.xlu0 0
        %1019 = vperm.xlu0 %1018, %v930
        %v1020 = vpop.permute.xlu0 %1019
        %v1022 = vmul.f32 %v1015, %v1004
        %v1023 = vmul.f32 %v1020, %v1009
        %v1025 = vsel %vm916, %v862, 0
        %v1028 = vsel %vm916, %v863, 0
        %1030 = vmatprep.subr.mxu0 0.0
        %1031 = vmatpush1.msra.mxu0 0.0
        %1032 = vmatprep.subr.mxu0 0.0
        %1033 = vmatpush1.msra.mxu0 0.0
        %1034 = vmatprep.subr.mxu0 0.0
        %1035 = vmatpush1.msra.mxu0 0.0
        %1036 = vmatprep.subr.mxu0 0.0
        %1037 = vmatpush1.msra.mxu0 0.0
        %1038 = vmatprep.subr.mxu0 0.0
        %1039 = vmatpush1.msra.mxu0 0.0
        %1040 = vmatprep.subr.mxu0 0.0
        %1041 = vmatpush1.msra.mxu0 0.0
        %1042 = vmatprep.subr.mxu0 0.0
        %1043 = vmatpush1.msra.mxu0 0.0
        %1044 = vmatprep.subr.mxu0 0.0
        %1045 = vmatpush1.msra.mxu0 0.0
        %1046 = vmatprep.subr.mxu0 0.0
        %1047 = vmatpush1.msra.mxu0 0.0
        %1048 = vmatprep.subr.mxu0 0.0
        %1049 = vmatpush1.msra.mxu0 0.0
        %1050 = vmatprep.subr.mxu0 0.0
        %1051 = vmatpush1.msra.mxu0 0.0
        %1052 = vmatprep.subr.mxu0 0.0
        %1053 = vmatpush1.msra.mxu0 0.0
        %1054 = vmatprep.subr.mxu0 0.0
        %1055 = vmatpush1.msra.mxu0 0.0
        %1056 = vmatprep.subr.mxu0 0.0
        %1057 = vmatpush1.msra.mxu0 0.0
        %1058 = vmatprep.subr.mxu0 0.0
        %1059 = vmatpush1.msra.mxu0 %v1023
        %1060 = vmatprep.subr.mxu0 0.0
        %1061 = vmatpush1.msra.mxu0 %v1022
        %1062 = vmatprep.subr.mxu0 0.0
        %1063 = vmatpush2.msra.mxu0 0.0
        %1064 = vmatprep.subr.mxu0 0.0
        %1065 = vmatpush2.msra.mxu0 0.0
        %1066 = vmatprep.subr.mxu0 0.0
        %1067 = vmatpush2.msra.mxu0 0.0
        %1068 = vmatprep.subr.mxu0 0.0
        %1069 = vmatpush2.msra.mxu0 0.0
        %1070 = vmatprep.subr.mxu0 0.0
        %1071 = vmatpush2.msra.mxu0 0.0
        %1072 = vmatprep.subr.mxu0 0.0
        %1073 = vmatpush2.msra.mxu0 0.0
        %1074 = vmatprep.subr.mxu0 0.0
        %1075 = vmatpush2.msra.mxu0 0.0
        %1076 = vmatprep.subr.mxu0 0.0
        %1077 = vmatpush2.msra.mxu0 0.0
        %1078 = vmatprep.subr.mxu0 0.0
        %1079 = vmatpush2.msra.mxu0 0.0
        %1080 = vmatprep.subr.mxu0 0.0
        %1081 = vmatpush2.msra.mxu0 0.0
        %1082 = vmatprep.subr.mxu0 0.0
        %1083 = vmatpush2.msra.mxu0 0.0
        %1084 = vmatprep.subr.mxu0 0.0
        %1085 = vmatpush2.msra.mxu0 0.0
        %1086 = vmatprep.subr.mxu0 0.0
        %1087 = vmatpush2.msra.mxu0 0.0
        %1088 = vmatprep.subr.mxu0 0.0
        %1089 = vmatpush2.msra.mxu0 0.0
        %1090 = vmatprep.subr.mxu0 0.0
        %1091 = vmatpush2.msra.mxu0 0.0
        %1092 = vmatprep.subr.mxu0 0.0
        %1093 = vmatpush2.msra.mxu0 0.0
        %1094 = vmatprep.mubr.f32.mxu0 0.0
        %1095 = vmatmul.mubr.f32.gmra.mxu0 %v1025
        %v1096 = vpop.f32.mrf.mxu0
        %v1097 = vadd.f32 0.0, %v1096
        %v1098 = vpop.f32.mrf.mxu0
        %1099 = vmatprep.mubr.f32.mxu0 0.0
        %1100 = vmatmul.mubr.f32.gmra.mxu0 %v1028
        %v1101 = vpop.f32.mrf.mxu0
        %v1102 = vadd.f32 0.0, %v1101
        %v1103 = vpop.f32.mrf.mxu0
        %1104 = vdwg.mxu0
        %v1107 = vmul.f32 %v885, %v1022
        %v1108 = vmul.f32 %v888, %v1023
        %v1109 = vadd.f32 %v1097, %v1107
        %v1110 = vadd.f32 %v1102, %v1108
        %v1111 = vmul.f32 %v1015, %v1109
        %v1112 = vmul.f32 %v1020, %v1110
        %v1114 = vlaneseq
        %v1115 = vshrl.u32 %v1114, 7
        %v1116 = vsub.s32 0, %v1115
        %v1117 = vrot.slane %v879, %v1116
        %v1119 = vadd.f32 %v1111, %v1117
        %v1120 = vadd.f32 %v1112, %v1117
        %v1121 = vmax.f32 %v1119, 0.0
        %v1122 = vmax.f32 %v1120, 0.0
        %v1123 = vmul.f32 %v1121, %v885
        %v1124 = vmul.f32 %v1122, %v888
        %v1126 = vlaneseq
        %v1127 = vshrl.u32 %v1126, 7
        %v1128 = vsub.s32 0, %v1127
        %v1129 = vrot.slane %v880, %v1128
        %v1131 = vmul.f32 %v1123, %v1129
        %v1132 = vmul.f32 %v1124, %v1129
        %1133 = vadd.xlane.f32.xlu0 %v1131
        %v1134 = vpop.xlane.xlu0 %1133
        %1135 = vadd.xlane.f32.xlu0 %v1132
        %v1136 = vpop.xlane.xlu0 %1135
        %v1139 = vlaneseq
        %v1140 = vshrl.u32 %v1139, 7
        %v1141 = vsub.s32 0, %v1140
        %v1142 = vrot.slane %v1134, %v1141
        %v1143 = vlaneseq
        %v1144 = vshrl.u32 %v1143, 7
        %v1145 = vsub.s32 1, %v1144
        %v1146 = vrot.slane %v1134, %v1145
        %v1147 = vlaneseq
        %v1148 = vshrl.u32 %v1147, 7
        %v1149 = vsub.s32 2, %v1148
        %v1150 = vrot.slane %v1134, %v1149
        %v1151 = vlaneseq
        %v1152 = vshrl.u32 %v1151, 7
        %v1153 = vsub.s32 3, %v1152
        %v1154 = vrot.slane %v1134, %v1153
        %v1155 = vlaneseq
        %v1156 = vshrl.u32 %v1155, 7
        %v1157 = vsub.s32 4, %v1156
        %v1158 = vrot.slane %v1134, %v1157
        %v1159 = vlaneseq
        %v1160 = vshrl.u32 %v1159, 7
        %v1161 = vsub.s32 5, %v1160
        %v1162 = vrot.slane %v1134, %v1161
        %v1163 = vlaneseq
        %v1164 = vshrl.u32 %v1163, 7
        %v1165 = vsub.s32 6, %v1164
        %v1166 = vrot.slane %v1134, %v1165
        %v1167 = vlaneseq
        %v1168 = vshrl.u32 %v1167, 7
        %v1169 = vsub.s32 7, %v1168
        %v1170 = vrot.slane %v1134, %v1169
        %v1171 = vlaneseq
        %v1172 = vshrl.u32 %v1171, 7
        %v1173 = vsub.s32 0, %v1172
        %v1174 = vrot.slane %v1136, %v1173
        %v1175 = vlaneseq
        %v1176 = vshrl.u32 %v1175, 7
        %v1177 = vsub.s32 1, %v1176
        %v1178 = vrot.slane %v1136, %v1177
        %v1179 = vlaneseq
        %v1180 = vshrl.u32 %v1179, 7
        %v1181 = vsub.s32 2, %v1180
        %v1182 = vrot.slane %v1136, %v1181
        %v1183 = vlaneseq
        %v1184 = vshrl.u32 %v1183, 7
        %v1185 = vsub.s32 3, %v1184
        %v1186 = vrot.slane %v1136, %v1185
        %v1187 = vlaneseq
        %v1188 = vshrl.u32 %v1187, 7
        %v1189 = vsub.s32 4, %v1188
        %v1190 = vrot.slane %v1136, %v1189
        %v1191 = vlaneseq
        %v1192 = vshrl.u32 %v1191, 7
        %v1193 = vsub.s32 5, %v1192
        %v1194 = vrot.slane %v1136, %v1193
        %v1195 = vlaneseq
        %v1196 = vshrl.u32 %v1195, 7
        %v1197 = vsub.s32 6, %v1196
        %v1198 = vrot.slane %v1136, %v1197
        %v1199 = vlaneseq
        %v1200 = vshrl.u32 %v1199, 7
        %v1201 = vsub.s32 7, %v1200
        %v1202 = vrot.slane %v1136, %v1201
        %vm1219 = vcmp.gt.f32.partialorder %v1134, %v1142
        %vm1220 = vcmp.gt.f32.partialorder %v1136, %v1142
        %vm1221 = vcmp.gt.f32.partialorder %v1134, %v1146
        %vm1222 = vcmp.gt.f32.partialorder %v1136, %v1146
        %vm1223 = vcmp.gt.f32.partialorder %v1134, %v1150
        %vm1224 = vcmp.gt.f32.partialorder %v1136, %v1150
        %vm1225 = vcmp.gt.f32.partialorder %v1134, %v1154
        %vm1226 = vcmp.gt.f32.partialorder %v1136, %v1154
        %vm1227 = vcmp.gt.f32.partialorder %v1134, %v1158
        %vm1228 = vcmp.gt.f32.partialorder %v1136, %v1158
        %vm1229 = vcmp.gt.f32.partialorder %v1134, %v1162
        %vm1230 = vcmp.gt.f32.partialorder %v1136, %v1162
        %vm1231 = vcmp.gt.f32.partialorder %v1134, %v1166
        %vm1232 = vcmp.gt.f32.partialorder %v1136, %v1166
        %vm1233 = vcmp.gt.f32.partialorder %v1134, %v1170
        %vm1234 = vcmp.gt.f32.partialorder %v1136, %v1170
        %vm1235 = vcmp.gt.f32.partialorder %v1134, %v1174
        %vm1236 = vcmp.gt.f32.partialorder %v1136, %v1174
        %vm1237 = vcmp.gt.f32.partialorder %v1134, %v1178
        %vm1238 = vcmp.gt.f32.partialorder %v1136, %v1178
        %vm1239 = vcmp.gt.f32.partialorder %v1134, %v1182
        %vm1240 = vcmp.gt.f32.partialorder %v1136, %v1182
        %vm1241 = vcmp.gt.f32.partialorder %v1134, %v1186
        %vm1242 = vcmp.gt.f32.partialorder %v1136, %v1186
        %vm1243 = vcmp.gt.f32.partialorder %v1134, %v1190
        %vm1244 = vcmp.gt.f32.partialorder %v1136, %v1190
        %vm1245 = vcmp.gt.f32.partialorder %v1134, %v1194
        %vm1246 = vcmp.gt.f32.partialorder %v1136, %v1194
        %vm1247 = vcmp.gt.f32.partialorder %v1134, %v1198
        %vm1248 = vcmp.gt.f32.partialorder %v1136, %v1198
        %vm1249 = vcmp.gt.f32.partialorder %v1134, %v1202
        %vm1250 = vcmp.gt.f32.partialorder %v1136, %v1202
        %v1251 = vsel %vm1219, 1, 0
        %v1252 = vsel %vm1220, 1, 0
        %v1253 = vsel %vm1221, 1, 0
        %v1254 = vsel %vm1222, 1, 0
        %v1255 = vsel %vm1223, 1, 0
        %v1256 = vsel %vm1224, 1, 0
        %v1257 = vsel %vm1225, 1, 0
        %v1258 = vsel %vm1226, 1, 0
        %v1259 = vsel %vm1227, 1, 0
        %v1260 = vsel %vm1228, 1, 0
        %v1261 = vsel %vm1229, 1, 0
        %v1262 = vsel %vm1230, 1, 0
        %v1263 = vsel %vm1231, 1, 0
        %v1264 = vsel %vm1232, 1, 0
        %v1265 = vsel %vm1233, 1, 0
        %v1266 = vsel %vm1234, 1, 0
        %v1267 = vsel %vm1235, 1, 0
        %v1268 = vsel %vm1236, 1, 0
        %v1269 = vsel %vm1237, 1, 0
        %v1270 = vsel %vm1238, 1, 0
        %v1271 = vsel %vm1239, 1, 0
        %v1272 = vsel %vm1240, 1, 0
        %v1273 = vsel %vm1241, 1, 0
        %v1274 = vsel %vm1242, 1, 0
        %v1275 = vsel %vm1243, 1, 0
        %v1276 = vsel %vm1244, 1, 0
        %v1277 = vsel %vm1245, 1, 0
        %v1278 = vsel %vm1246, 1, 0
        %v1279 = vsel %vm1247, 1, 0
        %v1280 = vsel %vm1248, 1, 0
        %v1281 = vsel %vm1249, 1, 0
        %v1282 = vsel %vm1250, 1, 0
        %v1283 = vcvt.s32.f32 %v1251
        %v1284 = vcvt.s32.f32 %v1252
        %v1285 = vcvt.s32.f32 %v1253
        %v1286 = vcvt.s32.f32 %v1254
        %v1287 = vcvt.s32.f32 %v1255
        %v1288 = vcvt.s32.f32 %v1256
        %v1289 = vcvt.s32.f32 %v1257
        %v1290 = vcvt.s32.f32 %v1258
        %v1291 = vcvt.s32.f32 %v1259
        %v1292 = vcvt.s32.f32 %v1260
        %v1293 = vcvt.s32.f32 %v1261
        %v1294 = vcvt.s32.f32 %v1262
        %v1295 = vcvt.s32.f32 %v1263
        %v1296 = vcvt.s32.f32 %v1264
        %v1297 = vcvt.s32.f32 %v1265
        %v1298 = vcvt.s32.f32 %v1266
        %v1299 = vcvt.s32.f32 %v1267
        %v1300 = vcvt.s32.f32 %v1268
        %v1301 = vcvt.s32.f32 %v1269
        %v1302 = vcvt.s32.f32 %v1270
        %v1303 = vcvt.s32.f32 %v1271
        %v1304 = vcvt.s32.f32 %v1272
        %v1305 = vcvt.s32.f32 %v1273
        %v1306 = vcvt.s32.f32 %v1274
        %v1307 = vcvt.s32.f32 %v1275
        %v1308 = vcvt.s32.f32 %v1276
        %v1309 = vcvt.s32.f32 %v1277
        %v1310 = vcvt.s32.f32 %v1278
        %v1311 = vcvt.s32.f32 %v1279
        %v1312 = vcvt.s32.f32 %v1280
        %v1313 = vcvt.s32.f32 %v1281
        %v1314 = vcvt.s32.f32 %v1282
        %vm1315 = vcmp.eq.f32.partialorder %v1134, %v1142
        %vm1316 = vcmp.eq.f32.partialorder %v1136, %v1142
        %vm1317 = vcmp.eq.f32.partialorder %v1134, %v1146
        %vm1318 = vcmp.eq.f32.partialorder %v1136, %v1146
        %vm1319 = vcmp.eq.f32.partialorder %v1134, %v1150
        %vm1320 = vcmp.eq.f32.partialorder %v1136, %v1150
        %vm1321 = vcmp.eq.f32.partialorder %v1134, %v1154
        %vm1322 = vcmp.eq.f32.partialorder %v1136, %v1154
        %vm1323 = vcmp.eq.f32.partialorder %v1134, %v1158
        %vm1324 = vcmp.eq.f32.partialorder %v1136, %v1158
        %vm1325 = vcmp.eq.f32.partialorder %v1134, %v1162
        %vm1326 = vcmp.eq.f32.partialorder %v1136, %v1162
        %vm1327 = vcmp.eq.f32.partialorder %v1134, %v1166
        %vm1328 = vcmp.eq.f32.partialorder %v1136, %v1166
        %vm1329 = vcmp.eq.f32.partialorder %v1134, %v1170
        %vm1330 = vcmp.eq.f32.partialorder %v1136, %v1170
        %vm1331 = vcmp.eq.f32.partialorder %v1134, %v1174
        %vm1332 = vcmp.eq.f32.partialorder %v1136, %v1174
        %vm1333 = vcmp.eq.f32.partialorder %v1134, %v1178
        %vm1334 = vcmp.eq.f32.partialorder %v1136, %v1178
        %vm1335 = vcmp.eq.f32.partialorder %v1134, %v1182
        %vm1336 = vcmp.eq.f32.partialorder %v1136, %v1182
        %vm1337 = vcmp.eq.f32.partialorder %v1134, %v1186
        %vm1338 = vcmp.eq.f32.partialorder %v1136, %v1186
        %vm1339 = vcmp.eq.f32.partialorder %v1134, %v1190
        %vm1340 = vcmp.eq.f32.partialorder %v1136, %v1190
        %vm1341 = vcmp.eq.f32.partialorder %v1134, %v1194
        %vm1342 = vcmp.eq.f32.partialorder %v1136, %v1194
        %vm1343 = vcmp.eq.f32.partialorder %v1134, %v1198
        %vm1344 = vcmp.eq.f32.partialorder %v1136, %v1198
        %vm1345 = vcmp.eq.f32.partialorder %v1134, %v1202
        %vm1346 = vcmp.eq.f32.partialorder %v1136, %v1202
        %v1347 = vsel %vm1315, 1, 0
        %v1348 = vsel %vm1316, 1, 0
        %v1349 = vsel %vm1317, 1, 0
        %v1350 = vsel %vm1318, 1, 0
        %v1351 = vsel %vm1319, 1, 0
        %v1352 = vsel %vm1320, 1, 0
        %v1353 = vsel %vm1321, 1, 0
        %v1354 = vsel %vm1322, 1, 0
        %v1355 = vsel %vm1323, 1, 0
        %v1356 = vsel %vm1324, 1, 0
        %v1357 = vsel %vm1325, 1, 0
        %v1358 = vsel %vm1326, 1, 0
        %v1359 = vsel %vm1327, 1, 0
        %v1360 = vsel %vm1328, 1, 0
        %v1361 = vsel %vm1329, 1, 0
        %v1362 = vsel %vm1330, 1, 0
        %v1363 = vsel %vm1331, 1, 0
        %v1364 = vsel %vm1332, 1, 0
        %v1365 = vsel %vm1333, 1, 0
        %v1366 = vsel %vm1334, 1, 0
        %v1367 = vsel %vm1335, 1, 0
        %v1368 = vsel %vm1336, 1, 0
        %v1369 = vsel %vm1337, 1, 0
        %v1370 = vsel %vm1338, 1, 0
        %v1371 = vsel %vm1339, 1, 0
        %v1372 = vsel %vm1340, 1, 0
        %v1373 = vsel %vm1341, 1, 0
        %v1374 = vsel %vm1342, 1, 0
        %v1375 = vsel %vm1343, 1, 0
        %v1376 = vsel %vm1344, 1, 0
        %v1377 = vsel %vm1345, 1, 0
        %v1378 = vsel %vm1346, 1, 0
        %v1379 = vcvt.s32.f32 %v1347
        %v1380 = vcvt.s32.f32 %v1348
        %v1381 = vcvt.s32.f32 %v1349
        %v1382 = vcvt.s32.f32 %v1350
        %v1383 = vcvt.s32.f32 %v1351
        %v1384 = vcvt.s32.f32 %v1352
        %v1385 = vcvt.s32.f32 %v1353
        %v1386 = vcvt.s32.f32 %v1354
        %v1387 = vcvt.s32.f32 %v1355
        %v1388 = vcvt.s32.f32 %v1356
        %v1389 = vcvt.s32.f32 %v1357
        %v1390 = vcvt.s32.f32 %v1358
        %v1391 = vcvt.s32.f32 %v1359
        %v1392 = vcvt.s32.f32 %v1360
        %v1393 = vcvt.s32.f32 %v1361
        %v1394 = vcvt.s32.f32 %v1362
        %v1395 = vcvt.s32.f32 %v1363
        %v1396 = vcvt.s32.f32 %v1364
        %v1397 = vcvt.s32.f32 %v1365
        %v1398 = vcvt.s32.f32 %v1366
        %v1399 = vcvt.s32.f32 %v1367
        %v1400 = vcvt.s32.f32 %v1368
        %v1401 = vcvt.s32.f32 %v1369
        %v1402 = vcvt.s32.f32 %v1370
        %v1403 = vcvt.s32.f32 %v1371
        %v1404 = vcvt.s32.f32 %v1372
        %v1405 = vcvt.s32.f32 %v1373
        %v1406 = vcvt.s32.f32 %v1374
        %v1407 = vcvt.s32.f32 %v1375
        %v1408 = vcvt.s32.f32 %v1376
        %v1409 = vcvt.s32.f32 %v1377
        %v1410 = vcvt.s32.f32 %v1378
        %v1413 = vlaneseq
        %v1414 = vshrl.u32 %v1413, 7
        %v1415 = vsub.s32 0, %v1414
        %v1416 = vrot.slane %v875, %v1415
        %1418 = vbcast.lane.b32.xlu0 %v1416, 256
        %v1419 = vpop.permute.xlu0 %1418
        %s1421 = sor.u32 256, 8
        %1422 = vbcast.lane.b32.xlu0 %v1416, %s1421
        %v1423 = vpop.permute.xlu0 %1422
        %v1424 = vlaneseq
        %v1425 = vshrl.u32 %v1424, 7
        %v1426 = vsub.s32 1, %v1425
        %v1427 = vrot.slane %v875, %v1426
        %1429 = vbcast.lane.b32.xlu0 %v1427, 256
        %v1430 = vpop.permute.xlu0 %1429
        %s1432 = sor.u32 256, 8
        %1433 = vbcast.lane.b32.xlu0 %v1427, %s1432
        %v1434 = vpop.permute.xlu0 %1433
        %v1435 = vlaneseq
        %v1436 = vshrl.u32 %v1435, 7
        %v1437 = vsub.s32 2, %v1436
        %v1438 = vrot.slane %v875, %v1437
        %1440 = vbcast.lane.b32.xlu0 %v1438, 256
        %v1441 = vpop.permute.xlu0 %1440
        %s1443 = sor.u32 256, 8
        %1444 = vbcast.lane.b32.xlu0 %v1438, %s1443
        %v1445 = vpop.permute.xlu0 %1444
        %v1446 = vlaneseq
        %v1447 = vshrl.u32 %v1446, 7
        %v1448 = vsub.s32 3, %v1447
        %v1449 = vrot.slane %v875, %v1448
        %1451 = vbcast.lane.b32.xlu0 %v1449, 256
        %v1452 = vpop.permute.xlu0 %1451
        %s1454 = sor.u32 256, 8
        %1455 = vbcast.lane.b32.xlu0 %v1449, %s1454
        %v1456 = vpop.permute.xlu0 %1455
        %v1457 = vlaneseq
        %v1458 = vshrl.u32 %v1457, 7
        %v1459 = vsub.s32 4, %v1458
        %v1460 = vrot.slane %v875, %v1459
        %1462 = vbcast.lane.b32.xlu0 %v1460, 256
        %v1463 = vpop.permute.xlu0 %1462
        %s1465 = sor.u32 256, 8
        %1466 = vbcast.lane.b32.xlu0 %v1460, %s1465
        %v1467 = vpop.permute.xlu0 %1466
        %v1468 = vlaneseq
        %v1469 = vshrl.u32 %v1468, 7
        %v1470 = vsub.s32 5, %v1469
        %v1471 = vrot.slane %v875, %v1470
        %1473 = vbcast.lane.b32.xlu0 %v1471, 256
        %v1474 = vpop.permute.xlu0 %1473
        %s1476 = sor.u32 256, 8
        %1477 = vbcast.lane.b32.xlu0 %v1471, %s1476
        %v1478 = vpop.permute.xlu0 %1477
        %v1479 = vlaneseq
        %v1480 = vshrl.u32 %v1479, 7
        %v1481 = vsub.s32 6, %v1480
        %v1482 = vrot.slane %v875, %v1481
        %1484 = vbcast.lane.b32.xlu0 %v1482, 256
        %v1485 = vpop.permute.xlu0 %1484
        %s1487 = sor.u32 256, 8
        %1488 = vbcast.lane.b32.xlu0 %v1482, %s1487
        %v1489 = vpop.permute.xlu0 %1488
        %v1490 = vlaneseq
        %v1491 = vshrl.u32 %v1490, 7
        %v1492 = vsub.s32 7, %v1491
        %v1493 = vrot.slane %v875, %v1492
        %1495 = vbcast.lane.b32.xlu0 %v1493, 256
        %v1496 = vpop.permute.xlu0 %1495
        %s1498 = sor.u32 256, 8
        %1499 = vbcast.lane.b32.xlu0 %v1493, %s1498
        %v1500 = vpop.permute.xlu0 %1499
        %v1501 = vlaneseq
        %v1502 = vshrl.u32 %v1501, 7
        %v1503 = vsub.s32 0, %v1502
        %v1504 = vrot.slane %v876, %v1503
        %1506 = vbcast.lane.b32.xlu0 %v1504, 256
        %v1507 = vpop.permute.xlu0 %1506
        %s1509 = sor.u32 256, 8
        %1510 = vbcast.lane.b32.xlu0 %v1504, %s1509
        %v1511 = vpop.permute.xlu0 %1510
        %v1512 = vlaneseq
        %v1513 = vshrl.u32 %v1512, 7
        %v1514 = vsub.s32 1, %v1513
        %v1515 = vrot.slane %v876, %v1514
        %1517 = vbcast.lane.b32.xlu0 %v1515, 256
        %v1518 = vpop.permute.xlu0 %1517
        %s1520 = sor.u32 256, 8
        %1521 = vbcast.lane.b32.xlu0 %v1515, %s1520
        %v1522 = vpop.permute.xlu0 %1521
        %v1523 = vlaneseq
        %v1524 = vshrl.u32 %v1523, 7
        %v1525 = vsub.s32 2, %v1524
        %v1526 = vrot.slane %v876, %v1525
        %1528 = vbcast.lane.b32.xlu0 %v1526, 256
        %v1529 = vpop.permute.xlu0 %1528
        %s1531 = sor.u32 256, 8
        %1532 = vbcast.lane.b32.xlu0 %v1526, %s1531
        %v1533 = vpop.permute.xlu0 %1532
        %v1534 = vlaneseq
        %v1535 = vshrl.u32 %v1534, 7
        %v1536 = vsub.s32 3, %v1535
        %v1537 = vrot.slane %v876, %v1536
        %1539 = vbcast.lane.b32.xlu0 %v1537, 256
        %v1540 = vpop.permute.xlu0 %1539
        %s1542 = sor.u32 256, 8
        %1543 = vbcast.lane.b32.xlu0 %v1537, %s1542
        %v1544 = vpop.permute.xlu0 %1543
        %v1545 = vlaneseq
        %v1546 = vshrl.u32 %v1545, 7
        %v1547 = vsub.s32 4, %v1546
        %v1548 = vrot.slane %v876, %v1547
        %1550 = vbcast.lane.b32.xlu0 %v1548, 256
        %v1551 = vpop.permute.xlu0 %1550
        %s1553 = sor.u32 256, 8
        %1554 = vbcast.lane.b32.xlu0 %v1548, %s1553
        %v1555 = vpop.permute.xlu0 %1554
        %v1556 = vlaneseq
        %v1557 = vshrl.u32 %v1556, 7
        %v1558 = vsub.s32 5, %v1557
        %v1559 = vrot.slane %v876, %v1558
        %1561 = vbcast.lane.b32.xlu0 %v1559, 256
        %v1562 = vpop.permute.xlu0 %1561
        %s1564 = sor.u32 256, 8
        %1565 = vbcast.lane.b32.xlu0 %v1559, %s1564
        %v1566 = vpop.permute.xlu0 %1565
        %v1567 = vlaneseq
        %v1568 = vshrl.u32 %v1567, 7
        %v1569 = vsub.s32 6, %v1568
        %v1570 = vrot.slane %v876, %v1569
        %1572 = vbcast.lane.b32.xlu0 %v1570, 256
        %v1573 = vpop.permute.xlu0 %1572
        %s1575 = sor.u32 256, 8
        %1576 = vbcast.lane.b32.xlu0 %v1570, %s1575
        %v1577 = vpop.permute.xlu0 %1576
        %v1578 = vlaneseq
        %v1579 = vshrl.u32 %v1578, 7
        %v1580 = vsub.s32 7, %v1579
        %v1581 = vrot.slane %v876, %v1580
        %1583 = vbcast.lane.b32.xlu0 %v1581, 256
        %v1584 = vpop.permute.xlu0 %1583
        %s1586 = sor.u32 256, 8
        %1587 = vbcast.lane.b32.xlu0 %v1581, %s1586
        %v1588 = vpop.permute.xlu0 %1587
        %v1621 = vmul.f32 %v1379, %v1419
        %v1622 = vmul.f32 %v1380, %v1423
        %v1623 = vmul.f32 %v1381, %v1430
        %v1624 = vmul.f32 %v1382, %v1434
        %v1625 = vmul.f32 %v1383, %v1441
        %v1626 = vmul.f32 %v1384, %v1445
        %v1627 = vmul.f32 %v1385, %v1452
        %v1628 = vmul.f32 %v1386, %v1456
        %v1629 = vmul.f32 %v1387, %v1463
        %v1630 = vmul.f32 %v1388, %v1467
        %v1631 = vmul.f32 %v1389, %v1474
        %v1632 = vmul.f32 %v1390, %v1478
        %v1633 = vmul.f32 %v1391, %v1485
        %v1634 = vmul.f32 %v1392, %v1489
        %v1635 = vmul.f32 %v1393, %v1496
        %v1636 = vmul.f32 %v1394, %v1500
        %v1637 = vmul.f32 %v1395, %v1507
        %v1638 = vmul.f32 %v1396, %v1511
        %v1639 = vmul.f32 %v1397, %v1518
        %v1640 = vmul.f32 %v1398, %v1522
        %v1641 = vmul.f32 %v1399, %v1529
        %v1642 = vmul.f32 %v1400, %v1533
        %v1643 = vmul.f32 %v1401, %v1540
        %v1644 = vmul.f32 %v1402, %v1544
        %v1645 = vmul.f32 %v1403, %v1551
        %v1646 = vmul.f32 %v1404, %v1555
        %v1647 = vmul.f32 %v1405, %v1562
        %v1648 = vmul.f32 %v1406, %v1566
        %v1649 = vmul.f32 %v1407, %v1573
        %v1650 = vmul.f32 %v1408, %v1577
        %v1651 = vmul.f32 %v1409, %v1584
        %v1652 = vmul.f32 %v1410, %v1588
        %v1653 = vadd.f32 %v1283, %v1621
        %v1654 = vadd.f32 %v1284, %v1622
        %v1655 = vadd.f32 %v1285, %v1623
        %v1656 = vadd.f32 %v1286, %v1624
        %v1657 = vadd.f32 %v1287, %v1625
        %v1658 = vadd.f32 %v1288, %v1626
        %v1659 = vadd.f32 %v1289, %v1627
        %v1660 = vadd.f32 %v1290, %v1628
        %v1661 = vadd.f32 %v1291, %v1629
        %v1662 = vadd.f32 %v1292, %v1630
        %v1663 = vadd.f32 %v1293, %v1631
        %v1664 = vadd.f32 %v1294, %v1632
        %v1665 = vadd.f32 %v1295, %v1633
        %v1666 = vadd.f32 %v1296, %v1634
        %v1667 = vadd.f32 %v1297, %v1635
        %v1668 = vadd.f32 %v1298, %v1636
        %v1669 = vadd.f32 %v1299, %v1637
        %v1670 = vadd.f32 %v1300, %v1638
        %v1671 = vadd.f32 %v1301, %v1639
        %v1672 = vadd.f32 %v1302, %v1640
        %v1673 = vadd.f32 %v1303, %v1641
        %v1674 = vadd.f32 %v1304, %v1642
        %v1675 = vadd.f32 %v1305, %v1643
        %v1676 = vadd.f32 %v1306, %v1644
        %v1677 = vadd.f32 %v1307, %v1645
        %v1678 = vadd.f32 %v1308, %v1646
        %v1679 = vadd.f32 %v1309, %v1647
        %v1680 = vadd.f32 %v1310, %v1648
        %v1681 = vadd.f32 %v1311, %v1649
        %v1682 = vadd.f32 %v1312, %v1650
        %v1683 = vadd.f32 %v1313, %v1651
        %v1684 = vadd.f32 %v1314, %v1652
        %v1685 = vmul.f32 %v864, %v1653
        %v1686 = vmul.f32 %v865, %v1654
        %v1687 = vmul.f32 %v864, %v1655
        %v1688 = vmul.f32 %v865, %v1656
        %v1689 = vmul.f32 %v864, %v1657
        %v1690 = vmul.f32 %v865, %v1658
        %v1691 = vmul.f32 %v864, %v1659
        %v1692 = vmul.f32 %v865, %v1660
        %v1693 = vmul.f32 %v864, %v1661
        %v1694 = vmul.f32 %v865, %v1662
        %v1695 = vmul.f32 %v864, %v1663
        %v1696 = vmul.f32 %v865, %v1664
        %v1697 = vmul.f32 %v864, %v1665
        %v1698 = vmul.f32 %v865, %v1666
        %v1699 = vmul.f32 %v864, %v1667
        %v1700 = vmul.f32 %v865, %v1668
        %v1701 = vmul.f32 %v864, %v1669
        %v1702 = vmul.f32 %v865, %v1670
        %v1703 = vmul.f32 %v864, %v1671
        %v1704 = vmul.f32 %v865, %v1672
        %v1705 = vmul.f32 %v864, %v1673
        %v1706 = vmul.f32 %v865, %v1674
        %v1707 = vmul.f32 %v864, %v1675
        %v1708 = vmul.f32 %v865, %v1676
        %v1709 = vmul.f32 %v864, %v1677
        %v1710 = vmul.f32 %v865, %v1678
        %v1711 = vmul.f32 %v864, %v1679
        %v1712 = vmul.f32 %v865, %v1680
        %v1713 = vmul.f32 %v864, %v1681
        %v1714 = vmul.f32 %v865, %v1682
        %v1715 = vmul.f32 %v864, %v1683
        %v1716 = vmul.f32 %v865, %v1684
        %1749 = vset.pattern.permute.xlu0 0
        %1750 = vperm.xlu0 %1749, %v1685
        %v1751 = vpop.permute.xlu0 %1750
        %1752 = vset.pattern.permute.xlu0 0
        %1753 = vperm.xlu0 %1752, %v1686
        %v1754 = vpop.permute.xlu0 %1753
        %1755 = vset.pattern.permute.xlu0 0
        %1756 = vperm.xlu0 %1755, %v1687
        %v1757 = vpop.permute.xlu0 %1756
        %1758 = vset.pattern.permute.xlu0 0
        %1759 = vperm.xlu0 %1758, %v1688
        %v1760 = vpop.permute.xlu0 %1759
        %1761 = vset.pattern.permute.xlu0 0
        %1762 = vperm.xlu0 %1761, %v1689
        %v1763 = vpop.permute.xlu0 %1762
        %1764 = vset.pattern.permute.xlu0 0
        %1765 = vperm.xlu0 %1764, %v1690
        %v1766 = vpop.permute.xlu0 %1765
        %1767 = vset.pattern.permute.xlu0 0
        %1768 = vperm.xlu0 %1767, %v1691
        %v1769 = vpop.permute.xlu0 %1768
        %1770 = vset.pattern.permute.xlu0 0
        %1771 = vperm.xlu0 %1770, %v1692
        %v1772 = vpop.permute.xlu0 %1771
        %1773 = vset.pattern.permute.xlu0 0
        %1774 = vperm.xlu0 %1773, %v1693
        %v1775 = vpop.permute.xlu0 %1774
        %1776 = vset.pattern.permute.xlu0 0
        %1777 = vperm.xlu0 %1776, %v1694
        %v1778 = vpop.permute.xlu0 %1777
        %1779 = vset.pattern.permute.xlu0 0
        %1780 = vperm.xlu0 %1779, %v1695
        %v1781 = vpop.permute.xlu0 %1780
        %1782 = vset.pattern.permute.xlu0 0
        %1783 = vperm.xlu0 %1782, %v1696
        %v1784 = vpop.permute.xlu0 %1783
        %1785 = vset.pattern.permute.xlu0 0
        %1786 = vperm.xlu0 %1785, %v1697
        %v1787 = vpop.permute.xlu0 %1786
        %1788 = vset.pattern.permute.xlu0 0
        %1789 = vperm.xlu0 %1788, %v1698
        %v1790 = vpop.permute.xlu0 %1789
        %1791 = vset.pattern.permute.xlu0 0
        %1792 = vperm.xlu0 %1791, %v1699
        %v1793 = vpop.permute.xlu0 %1792
        %1794 = vset.pattern.permute.xlu0 0
        %1795 = vperm.xlu0 %1794, %v1700
        %v1796 = vpop.permute.xlu0 %1795
        %1797 = vset.pattern.permute.xlu0 0
        %1798 = vperm.xlu0 %1797, %v1701
        %v1799 = vpop.permute.xlu0 %1798
        %1800 = vset.pattern.permute.xlu0 0
        %1801 = vperm.xlu0 %1800, %v1702
        %v1802 = vpop.permute.xlu0 %1801
        %1803 = vset.pattern.permute.xlu0 0
        %1804 = vperm.xlu0 %1803, %v1703
        %v1805 = vpop.permute.xlu0 %1804
        %1806 = vset.pattern.permute.xlu0 0
        %1807 = vperm.xlu0 %1806, %v1704
        %v1808 = vpop.permute.xlu0 %1807
        %1809 = vset.pattern.permute.xlu0 0
        %1810 = vperm.xlu0 %1809, %v1705
        %v1811 = vpop.permute.xlu0 %1810
        %1812 = vset.pattern.permute.xlu0 0
        %1813 = vperm.xlu0 %1812, %v1706
        %v1814 = vpop.permute.xlu0 %1813
        %1815 = vset.pattern.permute.xlu0 0
        %1816 = vperm.xlu0 %1815, %v1707
        %v1817 = vpop.permute.xlu0 %1816
        %1818 = vset.pattern.permute.xlu0 0
        %1819 = vperm.xlu0 %1818, %v1708
        %v1820 = vpop.permute.xlu0 %1819
        %1821 = vset.pattern.permute.xlu0 0
        %1822 = vperm.xlu0 %1821, %v1709
        %v1823 = vpop.permute.xlu0 %1822
        %1824 = vset.pattern.permute.xlu0 0
        %1825 = vperm.xlu0 %1824, %v1710
        %v1826 = vpop.permute.xlu0 %1825
        %1827 = vset.pattern.permute.xlu0 0
        %1828 = vperm.xlu0 %1827, %v1711
        %v1829 = vpop.permute.xlu0 %1828
        %1830 = vset.pattern.permute.xlu0 0
        %1831 = vperm.xlu0 %1830, %v1712
        %v1832 = vpop.permute.xlu0 %1831
        %1833 = vset.pattern.permute.xlu0 0
        %1834 = vperm.xlu0 %1833, %v1713
        %v1835 = vpop.permute.xlu0 %1834
        %1836 = vset.pattern.permute.xlu0 0
        %1837 = vperm.xlu0 %1836, %v1714
        %v1838 = vpop.permute.xlu0 %1837
        %1839 = vset.pattern.permute.xlu0 0
        %1840 = vperm.xlu0 %1839, %v1715
        %v1841 = vpop.permute.xlu0 %1840
        %1842 = vset.pattern.permute.xlu0 0
        %1843 = vperm.xlu0 %1842, %v1716
        %v1844 = vpop.permute.xlu0 %1843
        %v1845 = vlaneseq
        %v1846 = vshrl.u32 %v1845, 7
        %v1847 = vsub.s32 %v870, %v1846
        %v1848 = vrot.slane %v1751, %v1847
        %v1849 = vlaneseq
        %v1850 = vshrl.u32 %v1849, 7
        %v1851 = vsub.s32 %v893, %v1850
        %v1852 = vrot.slane %v1754, %v1851
        %v1853 = vsel %vm898, %v1852, %v1848
        %v1854 = vlaneseq
        %v1855 = vshrl.u32 %v1854, 7
        %v1856 = vsub.s32 %v870, %v1855
        %v1857 = vrot.slane %v1757, %v1856
        %v1858 = vlaneseq
        %v1859 = vshrl.u32 %v1858, 7
        %v1860 = vsub.s32 %v893, %v1859
        %v1861 = vrot.slane %v1760, %v1860
        %v1862 = vsel %vm898, %v1861, %v1857
        %v1863 = vlaneseq
        %v1864 = vshrl.u32 %v1863, 7
        %v1865 = vsub.s32 %v870, %v1864
        %v1866 = vrot.slane %v1763, %v1865
        %v1867 = vlaneseq
        %v1868 = vshrl.u32 %v1867, 7
        %v1869 = vsub.s32 %v893, %v1868
        %v1870 = vrot.slane %v1766, %v1869
        %v1871 = vsel %vm898, %v1870, %v1866
        %v1872 = vlaneseq
        %v1873 = vshrl.u32 %v1872, 7
        %v1874 = vsub.s32 %v870, %v1873
        %v1875 = vrot.slane %v1769, %v1874
        %v1876 = vlaneseq
        %v1877 = vshrl.u32 %v1876, 7
        %v1878 = vsub.s32 %v893, %v1877
        %v1879 = vrot.slane %v1772, %v1878
        %v1880 = vsel %vm898, %v1879, %v1875
        %v1881 = vlaneseq
        %v1882 = vshrl.u32 %v1881, 7
        %v1883 = vsub.s32 %v870, %v1882
        %v1884 = vrot.slane %v1775, %v1883
        %v1885 = vlaneseq
        %v1886 = vshrl.u32 %v1885, 7
        %v1887 = vsub.s32 %v893, %v1886
        %v1888 = vrot.slane %v1778, %v1887
        %v1889 = vsel %vm898, %v1888, %v1884
        %v1890 = vlaneseq
        %v1891 = vshrl.u32 %v1890, 7
        %v1892 = vsub.s32 %v870, %v1891
        %v1893 = vrot.slane %v1781, %v1892
        %v1894 = vlaneseq
        %v1895 = vshrl.u32 %v1894, 7
        %v1896 = vsub.s32 %v893, %v1895
        %v1897 = vrot.slane %v1784, %v1896
        %v1898 = vsel %vm898, %v1897, %v1893
        %v1899 = vlaneseq
        %v1900 = vshrl.u32 %v1899, 7
        %v1901 = vsub.s32 %v870, %v1900
        %v1902 = vrot.slane %v1787, %v1901
        %v1903 = vlaneseq
        %v1904 = vshrl.u32 %v1903, 7
        %v1905 = vsub.s32 %v893, %v1904
        %v1906 = vrot.slane %v1790, %v1905
        %v1907 = vsel %vm898, %v1906, %v1902
        %v1908 = vlaneseq
        %v1909 = vshrl.u32 %v1908, 7
        %v1910 = vsub.s32 %v870, %v1909
        %v1911 = vrot.slane %v1793, %v1910
        %v1912 = vlaneseq
        %v1913 = vshrl.u32 %v1912, 7
        %v1914 = vsub.s32 %v893, %v1913
        %v1915 = vrot.slane %v1796, %v1914
        %v1916 = vsel %vm898, %v1915, %v1911
        %v1917 = vlaneseq
        %v1918 = vshrl.u32 %v1917, 7
        %v1919 = vsub.s32 %v870, %v1918
        %v1920 = vrot.slane %v1799, %v1919
        %v1921 = vlaneseq
        %v1922 = vshrl.u32 %v1921, 7
        %v1923 = vsub.s32 %v893, %v1922
        %v1924 = vrot.slane %v1802, %v1923
        %v1925 = vsel %vm898, %v1924, %v1920
        %v1926 = vlaneseq
        %v1927 = vshrl.u32 %v1926, 7
        %v1928 = vsub.s32 %v870, %v1927
        %v1929 = vrot.slane %v1805, %v1928
        %v1930 = vlaneseq
        %v1931 = vshrl.u32 %v1930, 7
        %v1932 = vsub.s32 %v893, %v1931
        %v1933 = vrot.slane %v1808, %v1932
        %v1934 = vsel %vm898, %v1933, %v1929
        %v1935 = vlaneseq
        %v1936 = vshrl.u32 %v1935, 7
        %v1937 = vsub.s32 %v870, %v1936
        %v1938 = vrot.slane %v1811, %v1937
        %v1939 = vlaneseq
        %v1940 = vshrl.u32 %v1939, 7
        %v1941 = vsub.s32 %v893, %v1940
        %v1942 = vrot.slane %v1814, %v1941
        %v1943 = vsel %vm898, %v1942, %v1938
        %v1944 = vlaneseq
        %v1945 = vshrl.u32 %v1944, 7
        %v1946 = vsub.s32 %v870, %v1945
        %v1947 = vrot.slane %v1817, %v1946
        %v1948 = vlaneseq
        %v1949 = vshrl.u32 %v1948, 7
        %v1950 = vsub.s32 %v893, %v1949
        %v1951 = vrot.slane %v1820, %v1950
        %v1952 = vsel %vm898, %v1951, %v1947
        %v1953 = vlaneseq
        %v1954 = vshrl.u32 %v1953, 7
        %v1955 = vsub.s32 %v870, %v1954
        %v1956 = vrot.slane %v1823, %v1955
        %v1957 = vlaneseq
        %v1958 = vshrl.u32 %v1957, 7
        %v1959 = vsub.s32 %v893, %v1958
        %v1960 = vrot.slane %v1826, %v1959
        %v1961 = vsel %vm898, %v1960, %v1956
        %v1962 = vlaneseq
        %v1963 = vshrl.u32 %v1962, 7
        %v1964 = vsub.s32 %v870, %v1963
        %v1965 = vrot.slane %v1829, %v1964
        %v1966 = vlaneseq
        %v1967 = vshrl.u32 %v1966, 7
        %v1968 = vsub.s32 %v893, %v1967
        %v1969 = vrot.slane %v1832, %v1968
        %v1970 = vsel %vm898, %v1969, %v1965
        %v1971 = vlaneseq
        %v1972 = vshrl.u32 %v1971, 7
        %v1973 = vsub.s32 %v870, %v1972
        %v1974 = vrot.slane %v1835, %v1973
        %v1975 = vlaneseq
        %v1976 = vshrl.u32 %v1975, 7
        %v1977 = vsub.s32 %v893, %v1976
        %v1978 = vrot.slane %v1838, %v1977
        %v1979 = vsel %vm898, %v1978, %v1974
        %v1980 = vlaneseq
        %v1981 = vshrl.u32 %v1980, 7
        %v1982 = vsub.s32 %v870, %v1981
        %v1983 = vrot.slane %v1841, %v1982
        %v1984 = vlaneseq
        %v1985 = vshrl.u32 %v1984, 7
        %v1986 = vsub.s32 %v893, %v1985
        %v1987 = vrot.slane %v1844, %v1986
        %v1988 = vsel %vm898, %v1987, %v1983
        %v1989 = vsel %vm900, %v1862, %v1853
        %v1990 = vsel %vm901, %v1871, %v1989
        %v1991 = vsel %vm903, %v1880, %v1990
        %v1992 = vsel %vm905, %v1889, %v1991
        %v1993 = vsel %vm907, %v1898, %v1992
        %v1994 = vsel %vm909, %v1907, %v1993
        %v1995 = vsel %vm911, %v1916, %v1994
        %v1996 = vsel %vm900, %v1934, %v1925
        %v1997 = vsel %vm901, %v1943, %v1996
        %v1998 = vsel %vm903, %v1952, %v1997
        %v1999 = vsel %vm905, %v1961, %v1998
        %v2000 = vsel %vm907, %v1970, %v1999
        %v2001 = vsel %vm909, %v1979, %v2000
        %v2002 = vsel %vm911, %v1988, %v2001
        %v2005 = vsel %vm916, %v1995, 0.0
        %2006 = vadd.xlane.f32.xlu0 %v2005
        %v2007 = vpop.xlane.xlu0 %2006
        %v2008 = vsel %vm916, %v2002, 0.0
        %2009 = vadd.xlane.f32.xlu0 %v2008
        %v2010 = vpop.xlane.xlu0 %2009
        %vm2011 = vcmask 7168
        %v2012 = vsel %vm2011, %v864, 0.0
        %v2013 = vsel %vm2011, %v865, 0.0
        %v2014 = vadd.f32 %v2012, %v2013
        %v2015 = vrot.slane %v2014, 4
        %v2016 = vadd.f32 %v2014, %v2015
        %v2017 = vrot.slane %v2016, 2
        %v2018 = vadd.f32 %v2016, %v2017
        %v2019 = vrot.slane %v2018, 1
        %v2020 = vadd.f32 %v2018, %v2019
        %v2021 = vmul.f32 %v2020, 0.8
        %v2022 = vceil.f32 %v2021
        %vm2023 = vcmp.lt.f32.partialorder %v2007, %v2022
        %vm2024 = vcmp.lt.f32.partialorder %v2010, %v2022
        %v2025 = vsel %vm2023, 1, 0
        %v2026 = vsel %vm2024, 1, 0
        %v2027 = vcvt.s32.f32 %v2025
        %v2028 = vcvt.s32.f32 %v2026
        %v2029 = vmul.f32 %v864, %v2027
        %v2030 = vmul.f32 %v865, %v2028
        %v2031 = vtanh.pop %v1134
        %v2032 = vtanh.pop %v1136
        %v2033 = vmul.f32 %v1123, %v2031
        %v2034 = vmul.f32 %v1124, %v2032
        %2036 = vset.pattern.permute.xlu0 0
        %2037 = vperm.xlu0 %2036, %v2029
        %v2038 = vpop.permute.xlu0 %2037
        %2041 = vset.pattern.permute.xlu0 0
        %2042 = vperm.xlu0 %2041, %v2030
        %v2043 = vpop.permute.xlu0 %2042
        %v2045 = vmul.f32 %v2033, %v2038
        %v2046 = vmul.f32 %v2034, %v2043
        %v2047 = vsel %vm2011, %v2029, 0.0
        %v2048 = vsel %vm2011, %v2030, 0.0
        %v2049 = vadd.f32 %v2047, %v2048
        %v2050 = vrot.slane %v2049, 4
        %v2051 = vadd.f32 %v2049, %v2050
        %v2052 = vrot.slane %v2051, 2
        %v2053 = vadd.f32 %v2051, %v2052
        %v2054 = vrot.slane %v2053, 1
        %v2055 = vadd.f32 %v2053, %v2054
        %v2056 = vadd.f32 %v2045, %v2046
        %v2057 = vrot.slane %v2056, 4
        %v2058 = vadd.f32 %v2056, %v2057
        %v2059 = vrot.slane %v2058, 2
        %v2060 = vadd.f32 %v2058, %v2059
        %v2061 = vrot.slane %v2060, 1
        %v2062 = vadd.f32 %v2060, %v2061
        %v2063 = vmax.f32 %v2055, 1.0
        %2065 = vset.pattern.permute.xlu0 0
        %2066 = vperm.xlu0 %2065, %v2063
        %v2067 = vpop.permute.xlu0 %2066
        %v2069 = vrcp.pop %v2067
        %v2070 = vmul.f32 %v2062, %v2069
        %vm2071 = vcmp.gt.f32.partialorder %v2029, 0.5
        %vm2072 = vcmp.gt.f32.partialorder %v2030, 0.5
        %v2073 = vsel %vm2071, 1, 0
        %v2074 = vsel %vm2072, 1, 0
        %2075 = vset.pattern.permute.xlu0 0
        %2076 = vperm.xlu0 %2075, %v2073
        %v2077 = vpop.permute.xlu0 %2076
        %2078 = vset.pattern.permute.xlu0 0
        %2079 = vperm.xlu0 %2078, %v2074
        %v2080 = vpop.permute.xlu0 %2079
        %vm2081 = vcmp.eq.s32.totalorder %v2077, 1
        %vm2082 = vcmp.eq.s32.totalorder %v2080, 1
        %v2083 = vsel %vm2081, %v2045, -1e+30
        %v2084 = vsel %vm2082, %v2046, -1e+30
        %v2085 = vmax.f32 %v2083, %v2084
        %v2086 = vrot.slane %v2085, 4
        %v2087 = vmax.f32 %v2085, %v2086
        %v2088 = vrot.slane %v2087, 2
        %v2089 = vmax.f32 %v2087, %v2088
        %v2090 = vrot.slane %v2089, 1
        %v2091 = vmax.f32 %v2089, %v2090
        %vm2092 = vcmp.gt.f32.partialorder %v2055, 0.0
        %v2093 = vsel %vm2092, 1, 0
        %2094 = vset.pattern.permute.xlu0 0
        %2095 = vperm.xlu0 %2094, %v2093
        %v2096 = vpop.permute.xlu0 %2095
        %vm2097 = vcmp.eq.s32.totalorder %v2096, 1
        %v2098 = vsel %vm2097, %v2091, 0.0
        %v2099 = vadd.f32 %v2098, 0.0
        %v2100 = vadd.f32 %v2070, 0.0
        %v2101 = vld [vmem:[#allocation8] sm:$0xff]
        %v2102 = vld [vmem:[#allocation8 + $0x8] sm:$0xff]
        %v2103 = vld [vmem:[#allocation8 + $0x10] sm:$0xff]
        %v2104 = vld [vmem:[#allocation8 + $0x18] sm:$0xff]
        %v2105 = vld [vmem:[#allocation8 + $0x20] sm:$0xff]
        %v2106 = vld [vmem:[#allocation8 + $0x28] sm:$0xff]
        %v2107 = vld [vmem:[#allocation8 + $0x30] sm:$0xff]
        %v2108 = vld [vmem:[#allocation8 + $0x38] sm:$0xff]
        %v2109 = vld [vmem:[#allocation8 + $0x40] sm:$0xff]
        %v2110 = vld [vmem:[#allocation8 + $0x48] sm:$0xff]
        %v2111 = vld [vmem:[#allocation8 + $0x50] sm:$0xff]
        %v2112 = vld [vmem:[#allocation8 + $0x58] sm:$0xff]
        %v2113 = vld [vmem:[#allocation8 + $0x60] sm:$0xff]
        %v2114 = vld [vmem:[#allocation8 + $0x68] sm:$0xff]
        %v2115 = vld [vmem:[#allocation8 + $0x70] sm:$0xff]
        %v2116 = vld [vmem:[#allocation8 + $0x78] sm:$0xff]
        %v2117 = vld [vmem:[#allocation10] sm:$0x1]
        %v2118 = vld [vmem:[%s8] sm:$0x1]
        %v2119 = vlaneseq
        %v2120 = vshrl.u32 %v2119, 7
        %v2121 = vsub.s32 %v870, %v2120
        %v2122 = vrot.slane %v2038, %v2121
        %v2123 = vlaneseq
        %v2124 = vshrl.u32 %v2123, 7
        %v2125 = vsub.s32 %v893, %v2124
        %v2126 = vrot.slane %v2043, %v2125
        %v2127 = vsel %vm898, %v2126, %v2122
        %v2128 = vsel %vm901, %v2127, %v2127
        %v2129 = vsel %vm903, %v2127, %v2128
        %v2130 = vsel %vm905, %v2127, %v2129
        %v2131 = vsel %vm907, %v2127, %v2130
        %v2132 = vsel %vm909, %v2127, %v2131
        %v2133 = vsel %vm911, %v2127, %v2132
        %v2135 = vmul.f32 %v862, %v2133
        %v2136 = vmul.f32 %v863, %v2133
        %v2137 = vsel %vm916, %v2135, 0.0
        %2138 = vadd.xlane.f32.xlu0 %v2137
        %v2139 = vpop.xlane.xlu0 %2138
        %v2140 = vsel %vm916, %v2136, 0.0
        %2141 = vadd.xlane.f32.xlu0 %v2140
        %v2142 = vpop.xlane.xlu0 %2141
        %v2143 = vadd.f32 %v2139, %v2029
        %v2144 = vadd.f32 %v2142, %v2030
        %vm2145 = vcmp.gt.f32.partialorder %v2143, 0.0
        %vm2146 = vcmp.gt.f32.partialorder %v2144, 0.0
        %v2147 = vrsqrt.pop %v2143
        %v2148 = vrsqrt.pop %v2144
        %v2149 = vsel %vm2145, %v2147, 0.0
        %v2150 = vsel %vm2146, %v2148, 0.0
        %2151 = vmatprep.subr.mxu0 0.0
        %2152 = vmatpush1.msra.mxu0 %v2116
        %2153 = vmatprep.subr.mxu0 0.0
        %2154 = vmatpush1.msra.mxu0 %v2115
        %2155 = vmatprep.subr.mxu0 0.0
        %2156 = vmatpush1.msra.mxu0 %v2114
        %2157 = vmatprep.subr.mxu0 0.0
        %2158 = vmatpush1.msra.mxu0 %v2113
        %2159 = vmatprep.subr.mxu0 0.0
        %2160 = vmatpush1.msra.mxu0 %v2112
        %2161 = vmatprep.subr.mxu0 0.0
        %2162 = vmatpush1.msra.mxu0 %v2111
        %2163 = vmatprep.subr.mxu0 0.0
        %2164 = vmatpush1.msra.mxu0 %v2110
        %2165 = vmatprep.subr.mxu0 0.0
        %2166 = vmatpush1.msra.mxu0 %v2109
        %2167 = vmatprep.subr.mxu0 0.0
        %2168 = vmatpush1.msra.mxu0 %v2108
        %2169 = vmatprep.subr.mxu0 0.0
        %2170 = vmatpush1.msra.mxu0 %v2107
        %2171 = vmatprep.subr.mxu0 0.0
        %2172 = vmatpush1.msra.mxu0 %v2106
        %2173 = vmatprep.subr.mxu0 0.0
        %2174 = vmatpush1.msra.mxu0 %v2105
        %2175 = vmatprep.subr.mxu0 0.0
        %2176 = vmatpush1.msra.mxu0 %v2104
        %2177 = vmatprep.subr.mxu0 0.0
        %2178 = vmatpush1.msra.mxu0 %v2103
        %2179 = vmatprep.subr.mxu0 0.0
        %2180 = vmatpush1.msra.mxu0 %v2102
        %2181 = vmatprep.subr.mxu0 0.0
        %2182 = vmatpush1.msra.mxu0 %v2101
        %2183 = vmatprep.subr.mxu0 0.0
        %2184 = vmatpush2.msra.mxu0 0.0
        %2185 = vmatprep.subr.mxu0 0.0
        %2186 = vmatpush2.msra.mxu0 0.0
        %2187 = vmatprep.subr.mxu0 0.0
        %2188 = vmatpush2.msra.mxu0 0.0
        %2189 = vmatprep.subr.mxu0 0.0
        %2190 = vmatpush2.msra.mxu0 0.0
        %2191 = vmatprep.subr.mxu0 0.0
        %2192 = vmatpush2.msra.mxu0 0.0
        %2193 = vmatprep.subr.mxu0 0.0
        %2194 = vmatpush2.msra.mxu0 0.0
        %2195 = vmatprep.subr.mxu0 0.0
        %2196 = vmatpush2.msra.mxu0 0.0
        %2197 = vmatprep.subr.mxu0 0.0
        %2198 = vmatpush2.msra.mxu0 0.0
        %2199 = vmatprep.subr.mxu0 0.0
        %2200 = vmatpush2.msra.mxu0 0.0
        %2201 = vmatprep.subr.mxu0 0.0
        %2202 = vmatpush2.msra.mxu0 0.0
        %2203 = vmatprep.subr.mxu0 0.0
        %2204 = vmatpush2.msra.mxu0 0.0
        %2205 = vmatprep.subr.mxu0 0.0
        %2206 = vmatpush2.msra.mxu0 0.0
        %2207 = vmatprep.subr.mxu0 0.0
        %2208 = vmatpush2.msra.mxu0 0.0
        %2209 = vmatprep.subr.mxu0 0.0
        %2210 = vmatpush2.msra.mxu0 0.0
        %2211 = vmatprep.subr.mxu0 0.0
        %2212 = vmatpush2.msra.mxu0 0.0
        %2213 = vmatprep.subr.mxu0 0.0
        %2214 = vmatpush2.msra.mxu0 0.0
        %2215 = vmatprep.mubr.f32.mxu0 0.0
        %2216 = vmatmul.mubr.f32.gmra.mxu0 %v2045
        %v2217 = vpop.f32.mrf.mxu0
        %v2218 = vadd.f32 0.0, %v2217
        %v2219 = vpop.f32.mrf.mxu0
        %2220 = vmatprep.mubr.f32.mxu0 0.0
        %2221 = vmatmul.mubr.f32.gmra.mxu0 %v2046
        %v2222 = vpop.f32.mrf.mxu0
        %v2223 = vadd.f32 0.0, %v2222
        %v2224 = vpop.f32.mrf.mxu0
        %2225 = vdwg.mxu0
        %2227 = vset.pattern.permute.xlu0 0
        %2228 = vperm.xlu0 %2227, %v2149
        %v2229 = vpop.permute.xlu0 %2228
        %2232 = vset.pattern.permute.xlu0 0
        %2233 = vperm.xlu0 %2232, %v2150
        %v2234 = vpop.permute.xlu0 %2233
        %v2236 = vmul.f32 %v2229, %v2218
        %v2237 = vmul.f32 %v2234, %v2223
        %2238 = vmatprep.subr.mxu0 0.0
        %2239 = vmatpush1.msra.mxu0 0.0
        %2240 = vmatprep.subr.mxu0 0.0
        %2241 = vmatpush1.msra.mxu0 0.0
        %2242 = vmatprep.subr.mxu0 0.0
        %2243 = vmatpush1.msra.mxu0 0.0
        %2244 = vmatprep.subr.mxu0 0.0
        %2245 = vmatpush1.msra.mxu0 0.0
        %2246 = vmatprep.subr.mxu0 0.0
        %2247 = vmatpush1.msra.mxu0 0.0
        %2248 = vmatprep.subr.mxu0 0.0
        %2249 = vmatpush1.msra.mxu0 0.0
        %2250 = vmatprep.subr.mxu0 0.0
        %2251 = vmatpush1.msra.mxu0 0.0
        %2252 = vmatprep.subr.mxu0 0.0
        %2253 = vmatpush1.msra.mxu0 0.0
        %2254 = vmatprep.subr.mxu0 0.0
        %2255 = vmatpush1.msra.mxu0 0.0
        %2256 = vmatprep.subr.mxu0 0.0
        %2257 = vmatpush1.msra.mxu0 0.0
        %2258 = vmatprep.subr.mxu0 0.0
        %2259 = vmatpush1.msra.mxu0 0.0
        %2260 = vmatprep.subr.mxu0 0.0
        %2261 = vmatpush1.msra.mxu0 0.0
        %2262 = vmatprep.subr.mxu0 0.0
        %2263 = vmatpush1.msra.mxu0 0.0
        %2264 = vmatprep.subr.mxu0 0.0
        %2265 = vmatpush1.msra.mxu0 0.0
        %2266 = vmatprep.subr.mxu0 0.0
        %2267 = vmatpush1.msra.mxu0 %v2237
        %2268 = vmatprep.subr.mxu0 0.0
        %2269 = vmatpush1.msra.mxu0 %v2236
        %2270 = vmatprep.subr.mxu0 0.0
        %2271 = vmatpush2.msra.mxu0 0.0
        %2272 = vmatprep.subr.mxu0 0.0
        %2273 = vmatpush2.msra.mxu0 0.0
        %2274 = vmatprep.subr.mxu0 0.0
        %2275 = vmatpush2.msra.mxu0 0.0
        %2276 = vmatprep.subr.mxu0 0.0
        %2277 = vmatpush2.msra.mxu0 0.0
        %2278 = vmatprep.subr.mxu0 0.0
        %2279 = vmatpush2.msra.mxu0 0.0
        %2280 = vmatprep.subr.mxu0 0.0
        %2281 = vmatpush2.msra.mxu0 0.0
        %2282 = vmatprep.subr.mxu0 0.0
        %2283 = vmatpush2.msra.mxu0 0.0
        %2284 = vmatprep.subr.mxu0 0.0
        %2285 = vmatpush2.msra.mxu0 0.0
        %2286 = vmatprep.subr.mxu0 0.0
        %2287 = vmatpush2.msra.mxu0 0.0
        %2288 = vmatprep.subr.mxu0 0.0
        %2289 = vmatpush2.msra.mxu0 0.0
        %2290 = vmatprep.subr.mxu0 0.0
        %2291 = vmatpush2.msra.mxu0 0.0
        %2292 = vmatprep.subr.mxu0 0.0
        %2293 = vmatpush2.msra.mxu0 0.0
        %2294 = vmatprep.subr.mxu0 0.0
        %2295 = vmatpush2.msra.mxu0 0.0
        %2296 = vmatprep.subr.mxu0 0.0
        %2297 = vmatpush2.msra.mxu0 0.0
        %2298 = vmatprep.subr.mxu0 0.0
        %2299 = vmatpush2.msra.mxu0 0.0
        %2300 = vmatprep.subr.mxu0 0.0
        %2301 = vmatpush2.msra.mxu0 0.0
        %2302 = vmatprep.mubr.f32.mxu0 0.0
        %2303 = vmatmul.mubr.f32.gmra.mxu0 %v1025
        %v2304 = vpop.f32.mrf.mxu0
        %v2305 = vadd.f32 0.0, %v2304
        %v2306 = vpop.f32.mrf.mxu0
        %2307 = vmatprep.mubr.f32.mxu0 0.0
        %2308 = vmatmul.mubr.f32.gmra.mxu0 %v1028
        %v2309 = vpop.f32.mrf.mxu0
        %v2310 = vadd.f32 0.0, %v2309
        %v2311 = vpop.f32.mrf.mxu0
        %2312 = vdwg.mxu0
        %v2313 = vmul.f32 %v2038, %v2236
        %v2314 = vmul.f32 %v2043, %v2237
        %v2315 = vadd.f32 %v2305, %v2313
        %v2316 = vadd.f32 %v2310, %v2314
        %v2317 = vmul.f32 %v2229, %v2315
        %v2318 = vmul.f32 %v2234, %v2316
        %v2320 = vlaneseq
        %v2321 = vshrl.u32 %v2320, 7
        %v2322 = vsub.s32 0, %v2321
        %v2323 = vrot.slane %v2117, %v2322
        %v2325 = vadd.f32 %v2317, %v2323
        %v2326 = vadd.f32 %v2318, %v2323
        %v2327 = vmax.f32 %v2325, 0.0
        %v2328 = vmax.f32 %v2326, 0.0
        %v2329 = vmul.f32 %v2327, %v2038
        %v2330 = vmul.f32 %v2328, %v2043
        %v2332 = vlaneseq
        %v2333 = vshrl.u32 %v2332, 7
        %v2334 = vsub.s32 0, %v2333
        %v2335 = vrot.slane %v2118, %v2334
        %v2337 = vmul.f32 %v2329, %v2335
        %v2338 = vmul.f32 %v2330, %v2335
        %2339 = vadd.xlane.f32.xlu0 %v2337
        %v2340 = vpop.xlane.xlu0 %2339
        %2341 = vadd.xlane.f32.xlu0 %v2338
        %v2342 = vpop.xlane.xlu0 %2341
        %v2345 = vlaneseq
        %v2346 = vshrl.u32 %v2345, 7
        %v2347 = vsub.s32 0, %v2346
        %v2348 = vrot.slane %v2340, %v2347
        %v2349 = vlaneseq
        %v2350 = vshrl.u32 %v2349, 7
        %v2351 = vsub.s32 1, %v2350
        %v2352 = vrot.slane %v2340, %v2351
        %v2353 = vlaneseq
        %v2354 = vshrl.u32 %v2353, 7
        %v2355 = vsub.s32 2, %v2354
        %v2356 = vrot.slane %v2340, %v2355
        %v2357 = vlaneseq
        %v2358 = vshrl.u32 %v2357, 7
        %v2359 = vsub.s32 3, %v2358
        %v2360 = vrot.slane %v2340, %v2359
        %v2361 = vlaneseq
        %v2362 = vshrl.u32 %v2361, 7
        %v2363 = vsub.s32 4, %v2362
        %v2364 = vrot.slane %v2340, %v2363
        %v2365 = vlaneseq
        %v2366 = vshrl.u32 %v2365, 7
        %v2367 = vsub.s32 5, %v2366
        %v2368 = vrot.slane %v2340, %v2367
        %v2369 = vlaneseq
        %v2370 = vshrl.u32 %v2369, 7
        %v2371 = vsub.s32 6, %v2370
        %v2372 = vrot.slane %v2340, %v2371
        %v2373 = vlaneseq
        %v2374 = vshrl.u32 %v2373, 7
        %v2375 = vsub.s32 7, %v2374
        %v2376 = vrot.slane %v2340, %v2375
        %v2377 = vlaneseq
        %v2378 = vshrl.u32 %v2377, 7
        %v2379 = vsub.s32 0, %v2378
        %v2380 = vrot.slane %v2342, %v2379
        %v2381 = vlaneseq
        %v2382 = vshrl.u32 %v2381, 7
        %v2383 = vsub.s32 1, %v2382
        %v2384 = vrot.slane %v2342, %v2383
        %v2385 = vlaneseq
        %v2386 = vshrl.u32 %v2385, 7
        %v2387 = vsub.s32 2, %v2386
        %v2388 = vrot.slane %v2342, %v2387
        %v2389 = vlaneseq
        %v2390 = vshrl.u32 %v2389, 7
        %v2391 = vsub.s32 3, %v2390
        %v2392 = vrot.slane %v2342, %v2391
        %v2393 = vlaneseq
        %v2394 = vshrl.u32 %v2393, 7
        %v2395 = vsub.s32 4, %v2394
        %v2396 = vrot.slane %v2342, %v2395
        %v2397 = vlaneseq
        %v2398 = vshrl.u32 %v2397, 7
        %v2399 = vsub.s32 5, %v2398
        %v2400 = vrot.slane %v2342, %v2399
        %v2401 = vlaneseq
        %v2402 = vshrl.u32 %v2401, 7
        %v2403 = vsub.s32 6, %v2402
        %v2404 = vrot.slane %v2342, %v2403
        %v2405 = vlaneseq
        %v2406 = vshrl.u32 %v2405, 7
        %v2407 = vsub.s32 7, %v2406
        %v2408 = vrot.slane %v2342, %v2407
        %vm2425 = vcmp.gt.f32.partialorder %v2340, %v2348
        %vm2426 = vcmp.gt.f32.partialorder %v2342, %v2348
        %vm2427 = vcmp.gt.f32.partialorder %v2340, %v2352
        %vm2428 = vcmp.gt.f32.partialorder %v2342, %v2352
        %vm2429 = vcmp.gt.f32.partialorder %v2340, %v2356
        %vm2430 = vcmp.gt.f32.partialorder %v2342, %v2356
        %vm2431 = vcmp.gt.f32.partialorder %v2340, %v2360
        %vm2432 = vcmp.gt.f32.partialorder %v2342, %v2360
        %vm2433 = vcmp.gt.f32.partialorder %v2340, %v2364
        %vm2434 = vcmp.gt.f32.partialorder %v2342, %v2364
        %vm2435 = vcmp.gt.f32.partialorder %v2340, %v2368
        %vm2436 = vcmp.gt.f32.partialorder %v2342, %v2368
        %vm2437 = vcmp.gt.f32.partialorder %v2340, %v2372
        %vm2438 = vcmp.gt.f32.partialorder %v2342, %v2372
        %vm2439 = vcmp.gt.f32.partialorder %v2340, %v2376
        %vm2440 = vcmp.gt.f32.partialorder %v2342, %v2376
        %vm2441 = vcmp.gt.f32.partialorder %v2340, %v2380
        %vm2442 = vcmp.gt.f32.partialorder %v2342, %v2380
        %vm2443 = vcmp.gt.f32.partialorder %v2340, %v2384
        %vm2444 = vcmp.gt.f32.partialorder %v2342, %v2384
        %vm2445 = vcmp.gt.f32.partialorder %v2340, %v2388
        %vm2446 = vcmp.gt.f32.partialorder %v2342, %v2388
        %vm2447 = vcmp.gt.f32.partialorder %v2340, %v2392
        %vm2448 = vcmp.gt.f32.partialorder %v2342, %v2392
        %vm2449 = vcmp.gt.f32.partialorder %v2340, %v2396
        %vm2450 = vcmp.gt.f32.partialorder %v2342, %v2396
        %vm2451 = vcmp.gt.f32.partialorder %v2340, %v2400
        %vm2452 = vcmp.gt.f32.partialorder %v2342, %v2400
        %vm2453 = vcmp.gt.f32.partialorder %v2340, %v2404
        %vm2454 = vcmp.gt.f32.partialorder %v2342, %v2404
        %vm2455 = vcmp.gt.f32.partialorder %v2340, %v2408
        %vm2456 = vcmp.gt.f32.partialorder %v2342, %v2408
        %v2457 = vsel %vm2425, 1, 0
        %v2458 = vsel %vm2426, 1, 0
        %v2459 = vsel %vm2427, 1, 0
        %v2460 = vsel %vm2428, 1, 0
        %v2461 = vsel %vm2429, 1, 0
        %v2462 = vsel %vm2430, 1, 0
        %v2463 = vsel %vm2431, 1, 0
        %v2464 = vsel %vm2432, 1, 0
        %v2465 = vsel %vm2433, 1, 0
        %v2466 = vsel %vm2434, 1, 0
        %v2467 = vsel %vm2435, 1, 0
        %v2468 = vsel %vm2436, 1, 0
        %v2469 = vsel %vm2437, 1, 0
        %v2470 = vsel %vm2438, 1, 0
        %v2471 = vsel %vm2439, 1, 0
        %v2472 = vsel %vm2440, 1, 0
        %v2473 = vsel %vm2441, 1, 0
        %v2474 = vsel %vm2442, 1, 0
        %v2475 = vsel %vm2443, 1, 0
        %v2476 = vsel %vm2444, 1, 0
        %v2477 = vsel %vm2445, 1, 0
        %v2478 = vsel %vm2446, 1, 0
        %v2479 = vsel %vm2447, 1, 0
        %v2480 = vsel %vm2448, 1, 0
        %v2481 = vsel %vm2449, 1, 0
        %v2482 = vsel %vm2450, 1, 0
        %v2483 = vsel %vm2451, 1, 0
        %v2484 = vsel %vm2452, 1, 0
        %v2485 = vsel %vm2453, 1, 0
        %v2486 = vsel %vm2454, 1, 0
        %v2487 = vsel %vm2455, 1, 0
        %v2488 = vsel %vm2456, 1, 0
        %v2489 = vcvt.s32.f32 %v2457
        %v2490 = vcvt.s32.f32 %v2458
        %v2491 = vcvt.s32.f32 %v2459
        %v2492 = vcvt.s32.f32 %v2460
        %v2493 = vcvt.s32.f32 %v2461
        %v2494 = vcvt.s32.f32 %v2462
        %v2495 = vcvt.s32.f32 %v2463
        %v2496 = vcvt.s32.f32 %v2464
        %v2497 = vcvt.s32.f32 %v2465
        %v2498 = vcvt.s32.f32 %v2466
        %v2499 = vcvt.s32.f32 %v2467
        %v2500 = vcvt.s32.f32 %v2468
        %v2501 = vcvt.s32.f32 %v2469
        %v2502 = vcvt.s32.f32 %v2470
        %v2503 = vcvt.s32.f32 %v2471
        %v2504 = vcvt.s32.f32 %v2472
        %v2505 = vcvt.s32.f32 %v2473
        %v2506 = vcvt.s32.f32 %v2474
        %v2507 = vcvt.s32.f32 %v2475
        %v2508 = vcvt.s32.f32 %v2476
        %v2509 = vcvt.s32.f32 %v2477
        %v2510 = vcvt.s32.f32 %v2478
        %v2511 = vcvt.s32.f32 %v2479
        %v2512 = vcvt.s32.f32 %v2480
        %v2513 = vcvt.s32.f32 %v2481
        %v2514 = vcvt.s32.f32 %v2482
        %v2515 = vcvt.s32.f32 %v2483
        %v2516 = vcvt.s32.f32 %v2484
        %v2517 = vcvt.s32.f32 %v2485
        %v2518 = vcvt.s32.f32 %v2486
        %v2519 = vcvt.s32.f32 %v2487
        %v2520 = vcvt.s32.f32 %v2488
        %vm2521 = vcmp.eq.f32.partialorder %v2340, %v2348
        %vm2522 = vcmp.eq.f32.partialorder %v2342, %v2348
        %vm2523 = vcmp.eq.f32.partialorder %v2340, %v2352
        %vm2524 = vcmp.eq.f32.partialorder %v2342, %v2352
        %vm2525 = vcmp.eq.f32.partialorder %v2340, %v2356
        %vm2526 = vcmp.eq.f32.partialorder %v2342, %v2356
        %vm2527 = vcmp.eq.f32.partialorder %v2340, %v2360
        %vm2528 = vcmp.eq.f32.partialorder %v2342, %v2360
        %vm2529 = vcmp.eq.f32.partialorder %v2340, %v2364
        %vm2530 = vcmp.eq.f32.partialorder %v2342, %v2364
        %vm2531 = vcmp.eq.f32.partialorder %v2340, %v2368
        %vm2532 = vcmp.eq.f32.partialorder %v2342, %v2368
        %vm2533 = vcmp.eq.f32.partialorder %v2340, %v2372
        %vm2534 = vcmp.eq.f32.partialorder %v2342, %v2372
        %vm2535 = vcmp.eq.f32.partialorder %v2340, %v2376
        %vm2536 = vcmp.eq.f32.partialorder %v2342, %v2376
        %vm2537 = vcmp.eq.f32.partialorder %v2340, %v2380
        %vm2538 = vcmp.eq.f32.partialorder %v2342, %v2380
        %vm2539 = vcmp.eq.f32.partialorder %v2340, %v2384
        %vm2540 = vcmp.eq.f32.partialorder %v2342, %v2384
        %vm2541 = vcmp.eq.f32.partialorder %v2340, %v2388
        %vm2542 = vcmp.eq.f32.partialorder %v2342, %v2388
        %vm2543 = vcmp.eq.f32.partialorder %v2340, %v2392
        %vm2544 = vcmp.eq.f32.partialorder %v2342, %v2392
        %vm2545 = vcmp.eq.f32.partialorder %v2340, %v2396
        %vm2546 = vcmp.eq.f32.partialorder %v2342, %v2396
        %vm2547 = vcmp.eq.f32.partialorder %v2340, %v2400
        %vm2548 = vcmp.eq.f32.partialorder %v2342, %v2400
        %vm2549 = vcmp.eq.f32.partialorder %v2340, %v2404
        %vm2550 = vcmp.eq.f32.partialorder %v2342, %v2404
        %vm2551 = vcmp.eq.f32.partialorder %v2340, %v2408
        %vm2552 = vcmp.eq.f32.partialorder %v2342, %v2408
        %v2553 = vsel %vm2521, 1, 0
        %v2554 = vsel %vm2522, 1, 0
        %v2555 = vsel %vm2523, 1, 0
        %v2556 = vsel %vm2524, 1, 0
        %v2557 = vsel %vm2525, 1, 0
        %v2558 = vsel %vm2526, 1, 0
        %v2559 = vsel %vm2527, 1, 0
        %v2560 = vsel %vm2528, 1, 0
        %v2561 = vsel %vm2529, 1, 0
        %v2562 = vsel %vm2530, 1, 0
        %v2563 = vsel %vm2531, 1, 0
        %v2564 = vsel %vm2532, 1, 0
        %v2565 = vsel %vm2533, 1, 0
        %v2566 = vsel %vm2534, 1, 0
        %v2567 = vsel %vm2535, 1, 0
        %v2568 = vsel %vm2536, 1, 0
        %v2569 = vsel %vm2537, 1, 0
        %v2570 = vsel %vm2538, 1, 0
        %v2571 = vsel %vm2539, 1, 0
        %v2572 = vsel %vm2540, 1, 0
        %v2573 = vsel %vm2541, 1, 0
        %v2574 = vsel %vm2542, 1, 0
        %v2575 = vsel %vm2543, 1, 0
        %v2576 = vsel %vm2544, 1, 0
        %v2577 = vsel %vm2545, 1, 0
        %v2578 = vsel %vm2546, 1, 0
        %v2579 = vsel %vm2547, 1, 0
        %v2580 = vsel %vm2548, 1, 0
        %v2581 = vsel %vm2549, 1, 0
        %v2582 = vsel %vm2550, 1, 0
        %v2583 = vsel %vm2551, 1, 0
        %v2584 = vsel %vm2552, 1, 0
        %v2585 = vcvt.s32.f32 %v2553
        %v2586 = vcvt.s32.f32 %v2554
        %v2587 = vcvt.s32.f32 %v2555
        %v2588 = vcvt.s32.f32 %v2556
        %v2589 = vcvt.s32.f32 %v2557
        %v2590 = vcvt.s32.f32 %v2558
        %v2591 = vcvt.s32.f32 %v2559
        %v2592 = vcvt.s32.f32 %v2560
        %v2593 = vcvt.s32.f32 %v2561
        %v2594 = vcvt.s32.f32 %v2562
        %v2595 = vcvt.s32.f32 %v2563
        %v2596 = vcvt.s32.f32 %v2564
        %v2597 = vcvt.s32.f32 %v2565
        %v2598 = vcvt.s32.f32 %v2566
        %v2599 = vcvt.s32.f32 %v2567
        %v2600 = vcvt.s32.f32 %v2568
        %v2601 = vcvt.s32.f32 %v2569
        %v2602 = vcvt.s32.f32 %v2570
        %v2603 = vcvt.s32.f32 %v2571
        %v2604 = vcvt.s32.f32 %v2572
        %v2605 = vcvt.s32.f32 %v2573
        %v2606 = vcvt.s32.f32 %v2574
        %v2607 = vcvt.s32.f32 %v2575
        %v2608 = vcvt.s32.f32 %v2576
        %v2609 = vcvt.s32.f32 %v2577
        %v2610 = vcvt.s32.f32 %v2578
        %v2611 = vcvt.s32.f32 %v2579
        %v2612 = vcvt.s32.f32 %v2580
        %v2613 = vcvt.s32.f32 %v2581
        %v2614 = vcvt.s32.f32 %v2582
        %v2615 = vcvt.s32.f32 %v2583
        %v2616 = vcvt.s32.f32 %v2584
        %v2617 = vmul.f32 %v2585, %v1419
        %v2618 = vmul.f32 %v2586, %v1423
        %v2619 = vmul.f32 %v2587, %v1430
        %v2620 = vmul.f32 %v2588, %v1434
        %v2621 = vmul.f32 %v2589, %v1441
        %v2622 = vmul.f32 %v2590, %v1445
        %v2623 = vmul.f32 %v2591, %v1452
        %v2624 = vmul.f32 %v2592, %v1456
        %v2625 = vmul.f32 %v2593, %v1463
        %v2626 = vmul.f32 %v2594, %v1467
        %v2627 = vmul.f32 %v2595, %v1474
        %v2628 = vmul.f32 %v2596, %v1478
        %v2629 = vmul.f32 %v2597, %v1485
        %v2630 = vmul.f32 %v2598, %v1489
        %v2631 = vmul.f32 %v2599, %v1496
        %v2632 = vmul.f32 %v2600, %v1500
        %v2633 = vmul.f32 %v2601, %v1507
        %v2634 = vmul.f32 %v2602, %v1511
        %v2635 = vmul.f32 %v2603, %v1518
        %v2636 = vmul.f32 %v2604, %v1522
        %v2637 = vmul.f32 %v2605, %v1529
        %v2638 = vmul.f32 %v2606, %v1533
        %v2639 = vmul.f32 %v2607, %v1540
        %v2640 = vmul.f32 %v2608, %v1544
        %v2641 = vmul.f32 %v2609, %v1551
        %v2642 = vmul.f32 %v2610, %v1555
        %v2643 = vmul.f32 %v2611, %v1562
        %v2644 = vmul.f32 %v2612, %v1566
        %v2645 = vmul.f32 %v2613, %v1573
        %v2646 = vmul.f32 %v2614, %v1577
        %v2647 = vmul.f32 %v2615, %v1584
        %v2648 = vmul.f32 %v2616, %v1588
        %v2649 = vadd.f32 %v2489, %v2617
        %v2650 = vadd.f32 %v2490, %v2618
        %v2651 = vadd.f32 %v2491, %v2619
        %v2652 = vadd.f32 %v2492, %v2620
        %v2653 = vadd.f32 %v2493, %v2621
        %v2654 = vadd.f32 %v2494, %v2622
        %v2655 = vadd.f32 %v2495, %v2623
        %v2656 = vadd.f32 %v2496, %v2624
        %v2657 = vadd.f32 %v2497, %v2625
        %v2658 = vadd.f32 %v2498, %v2626
        %v2659 = vadd.f32 %v2499, %v2627
        %v2660 = vadd.f32 %v2500, %v2628
        %v2661 = vadd.f32 %v2501, %v2629
        %v2662 = vadd.f32 %v2502, %v2630
        %v2663 = vadd.f32 %v2503, %v2631
        %v2664 = vadd.f32 %v2504, %v2632
        %v2665 = vadd.f32 %v2505, %v2633
        %v2666 = vadd.f32 %v2506, %v2634
        %v2667 = vadd.f32 %v2507, %v2635
        %v2668 = vadd.f32 %v2508, %v2636
        %v2669 = vadd.f32 %v2509, %v2637
        %v2670 = vadd.f32 %v2510, %v2638
        %v2671 = vadd.f32 %v2511, %v2639
        %v2672 = vadd.f32 %v2512, %v2640
        %v2673 = vadd.f32 %v2513, %v2641
        %v2674 = vadd.f32 %v2514, %v2642
        %v2675 = vadd.f32 %v2515, %v2643
        %v2676 = vadd.f32 %v2516, %v2644
        %v2677 = vadd.f32 %v2517, %v2645
        %v2678 = vadd.f32 %v2518, %v2646
        %v2679 = vadd.f32 %v2519, %v2647
        %v2680 = vadd.f32 %v2520, %v2648
        %v2681 = vmul.f32 %v2029, %v2649
        %v2682 = vmul.f32 %v2030, %v2650
        %v2683 = vmul.f32 %v2029, %v2651
        %v2684 = vmul.f32 %v2030, %v2652
        %v2685 = vmul.f32 %v2029, %v2653
        %v2686 = vmul.f32 %v2030, %v2654
        %v2687 = vmul.f32 %v2029, %v2655
        %v2688 = vmul.f32 %v2030, %v2656
        %v2689 = vmul.f32 %v2029, %v2657
        %v2690 = vmul.f32 %v2030, %v2658
        %v2691 = vmul.f32 %v2029, %v2659
        %v2692 = vmul.f32 %v2030, %v2660
        %v2693 = vmul.f32 %v2029, %v2661
        %v2694 = vmul.f32 %v2030, %v2662
        %v2695 = vmul.f32 %v2029, %v2663
        %v2696 = vmul.f32 %v2030, %v2664
        %v2697 = vmul.f32 %v2029, %v2665
        %v2698 = vmul.f32 %v2030, %v2666
        %v2699 = vmul.f32 %v2029, %v2667
        %v2700 = vmul.f32 %v2030, %v2668
        %v2701 = vmul.f32 %v2029, %v2669
        %v2702 = vmul.f32 %v2030, %v2670
        %v2703 = vmul.f32 %v2029, %v2671
        %v2704 = vmul.f32 %v2030, %v2672
        %v2705 = vmul.f32 %v2029, %v2673
        %v2706 = vmul.f32 %v2030, %v2674
        %v2707 = vmul.f32 %v2029, %v2675
        %v2708 = vmul.f32 %v2030, %v2676
        %v2709 = vmul.f32 %v2029, %v2677
        %v2710 = vmul.f32 %v2030, %v2678
        %v2711 = vmul.f32 %v2029, %v2679
        %v2712 = vmul.f32 %v2030, %v2680
        %2745 = vset.pattern.permute.xlu0 0
        %2746 = vperm.xlu0 %2745, %v2681
        %v2747 = vpop.permute.xlu0 %2746
        %2748 = vset.pattern.permute.xlu0 0
        %2749 = vperm.xlu0 %2748, %v2682
        %v2750 = vpop.permute.xlu0 %2749
        %2751 = vset.pattern.permute.xlu0 0
        %2752 = vperm.xlu0 %2751, %v2683
        %v2753 = vpop.permute.xlu0 %2752
        %2754 = vset.pattern.permute.xlu0 0
        %2755 = vperm.xlu0 %2754, %v2684
        %v2756 = vpop.permute.xlu0 %2755
        %2757 = vset.pattern.permute.xlu0 0
        %2758 = vperm.xlu0 %2757, %v2685
        %v2759 = vpop.permute.xlu0 %2758
        %2760 = vset.pattern.permute.xlu0 0
        %2761 = vperm.xlu0 %2760, %v2686
        %v2762 = vpop.permute.xlu0 %2761
        %2763 = vset.pattern.permute.xlu0 0
        %2764 = vperm.xlu0 %2763, %v2687
        %v2765 = vpop.permute.xlu0 %2764
        %2766 = vset.pattern.permute.xlu0 0
        %2767 = vperm.xlu0 %2766, %v2688
        %v2768 = vpop.permute.xlu0 %2767
        %2769 = vset.pattern.permute.xlu0 0
        %2770 = vperm.xlu0 %2769, %v2689
        %v2771 = vpop.permute.xlu0 %2770
        %2772 = vset.pattern.permute.xlu0 0
        %2773 = vperm.xlu0 %2772, %v2690
        %v2774 = vpop.permute.xlu0 %2773
        %2775 = vset.pattern.permute.xlu0 0
        %2776 = vperm.xlu0 %2775, %v2691
        %v2777 = vpop.permute.xlu0 %2776
        %2778 = vset.pattern.permute.xlu0 0
        %2779 = vperm.xlu0 %2778, %v2692
        %v2780 = vpop.permute.xlu0 %2779
        %2781 = vset.pattern.permute.xlu0 0
        %2782 = vperm.xlu0 %2781, %v2693
        %v2783 = vpop.permute.xlu0 %2782
        %2784 = vset.pattern.permute.xlu0 0
        %2785 = vperm.xlu0 %2784, %v2694
        %v2786 = vpop.permute.xlu0 %2785
        %2787 = vset.pattern.permute.xlu0 0
        %2788 = vperm.xlu0 %2787, %v2695
        %v2789 = vpop.permute.xlu0 %2788
        %2790 = vset.pattern.permute.xlu0 0
        %2791 = vperm.xlu0 %2790, %v2696
        %v2792 = vpop.permute.xlu0 %2791
        %2793 = vset.pattern.permute.xlu0 0
        %2794 = vperm.xlu0 %2793, %v2697
        %v2795 = vpop.permute.xlu0 %2794
        %2796 = vset.pattern.permute.xlu0 0
        %2797 = vperm.xlu0 %2796, %v2698
        %v2798 = vpop.permute.xlu0 %2797
        %2799 = vset.pattern.permute.xlu0 0
        %2800 = vperm.xlu0 %2799, %v2699
        %v2801 = vpop.permute.xlu0 %2800
        %2802 = vset.pattern.permute.xlu0 0
        %2803 = vperm.xlu0 %2802, %v2700
        %v2804 = vpop.permute.xlu0 %2803
        %2805 = vset.pattern.permute.xlu0 0
        %2806 = vperm.xlu0 %2805, %v2701
        %v2807 = vpop.permute.xlu0 %2806
        %2808 = vset.pattern.permute.xlu0 0
        %2809 = vperm.xlu0 %2808, %v2702
        %v2810 = vpop.permute.xlu0 %2809
        %2811 = vset.pattern.permute.xlu0 0
        %2812 = vperm.xlu0 %2811, %v2703
        %v2813 = vpop.permute.xlu0 %2812
        %2814 = vset.pattern.permute.xlu0 0
        %2815 = vperm.xlu0 %2814, %v2704
        %v2816 = vpop.permute.xlu0 %2815
        %2817 = vset.pattern.permute.xlu0 0
        %2818 = vperm.xlu0 %2817, %v2705
        %v2819 = vpop.permute.xlu0 %2818
        %2820 = vset.pattern.permute.xlu0 0
        %2821 = vperm.xlu0 %2820, %v2706
        %v2822 = vpop.permute.xlu0 %2821
        %2823 = vset.pattern.permute.xlu0 0
        %2824 = vperm.xlu0 %2823, %v2707
        %v2825 = vpop.permute.xlu0 %2824
        %2826 = vset.pattern.permute.xlu0 0
        %2827 = vperm.xlu0 %2826, %v2708
        %v2828 = vpop.permute.xlu0 %2827
        %2829 = vset.pattern.permute.xlu0 0
        %2830 = vperm.xlu0 %2829, %v2709
        %v2831 = vpop.permute.xlu0 %2830
        %2832 = vset.pattern.permute.xlu0 0
        %2833 = vperm.xlu0 %2832, %v2710
        %v2834 = vpop.permute.xlu0 %2833
        %2835 = vset.pattern.permute.xlu0 0
        %2836 = vperm.xlu0 %2835, %v2711
        %v2837 = vpop.permute.xlu0 %2836
        %2838 = vset.pattern.permute.xlu0 0
        %2839 = vperm.xlu0 %2838, %v2712
        %v2840 = vpop.permute.xlu0 %2839
        %v2841 = vlaneseq
        %v2842 = vshrl.u32 %v2841, 7
        %v2843 = vsub.s32 %v870, %v2842
        %v2844 = vrot.slane %v2747, %v2843
        %v2845 = vlaneseq
        %v2846 = vshrl.u32 %v2845, 7
        %v2847 = vsub.s32 %v893, %v2846
        %v2848 = vrot.slane %v2750, %v2847
        %v2849 = vsel %vm898, %v2848, %v2844
        %v2850 = vlaneseq
        %v2851 = vshrl.u32 %v2850, 7
        %v2852 = vsub.s32 %v870, %v2851
        %v2853 = vrot.slane %v2753, %v2852
        %v2854 = vlaneseq
        %v2855 = vshrl.u32 %v2854, 7
        %v2856 = vsub.s32 %v893, %v2855
        %v2857 = vrot.slane %v2756, %v2856
        %v2858 = vsel %vm898, %v2857, %v2853
        %v2859 = vlaneseq
        %v2860 = vshrl.u32 %v2859, 7
        %v2861 = vsub.s32 %v870, %v2860
        %v2862 = vrot.slane %v2759, %v2861
        %v2863 = vlaneseq
        %v2864 = vshrl.u32 %v2863, 7
        %v2865 = vsub.s32 %v893, %v2864
        %v2866 = vrot.slane %v2762, %v2865
        %v2867 = vsel %vm898, %v2866, %v2862
        %v2868 = vlaneseq
        %v2869 = vshrl.u32 %v2868, 7
        %v2870 = vsub.s32 %v870, %v2869
        %v2871 = vrot.slane %v2765, %v2870
        %v2872 = vlaneseq
        %v2873 = vshrl.u32 %v2872, 7
        %v2874 = vsub.s32 %v893, %v2873
        %v2875 = vrot.slane %v2768, %v2874
        %v2876 = vsel %vm898, %v2875, %v2871
        %v2877 = vlaneseq
        %v2878 = vshrl.u32 %v2877, 7
        %v2879 = vsub.s32 %v870, %v2878
        %v2880 = vrot.slane %v2771, %v2879
        %v2881 = vlaneseq
        %v2882 = vshrl.u32 %v2881, 7
        %v2883 = vsub.s32 %v893, %v2882
        %v2884 = vrot.slane %v2774, %v2883
        %v2885 = vsel %vm898, %v2884, %v2880
        %v2886 = vlaneseq
        %v2887 = vshrl.u32 %v2886, 7
        %v2888 = vsub.s32 %v870, %v2887
        %v2889 = vrot.slane %v2777, %v2888
        %v2890 = vlaneseq
        %v2891 = vshrl.u32 %v2890, 7
        %v2892 = vsub.s32 %v893, %v2891
        %v2893 = vrot.slane %v2780, %v2892
        %v2894 = vsel %vm898, %v2893, %v2889
        %v2895 = vlaneseq
        %v2896 = vshrl.u32 %v2895, 7
        %v2897 = vsub.s32 %v870, %v2896
        %v2898 = vrot.slane %v2783, %v2897
        %v2899 = vlaneseq
        %v2900 = vshrl.u32 %v2899, 7
        %v2901 = vsub.s32 %v893, %v2900
        %v2902 = vrot.slane %v2786, %v2901
        %v2903 = vsel %vm898, %v2902, %v2898
        %v2904 = vlaneseq
        %v2905 = vshrl.u32 %v2904, 7
        %v2906 = vsub.s32 %v870, %v2905
        %v2907 = vrot.slane %v2789, %v2906
        %v2908 = vlaneseq
        %v2909 = vshrl.u32 %v2908, 7
        %v2910 = vsub.s32 %v893, %v2909
        %v2911 = vrot.slane %v2792, %v2910
        %v2912 = vsel %vm898, %v2911, %v2907
        %v2913 = vlaneseq
        %v2914 = vshrl.u32 %v2913, 7
        %v2915 = vsub.s32 %v870, %v2914
        %v2916 = vrot.slane %v2795, %v2915
        %v2917 = vlaneseq
        %v2918 = vshrl.u32 %v2917, 7
        %v2919 = vsub.s32 %v893, %v2918
        %v2920 = vrot.slane %v2798, %v2919
        %v2921 = vsel %vm898, %v2920, %v2916
        %v2922 = vlaneseq
        %v2923 = vshrl.u32 %v2922, 7
        %v2924 = vsub.s32 %v870, %v2923
        %v2925 = vrot.slane %v2801, %v2924
        %v2926 = vlaneseq
        %v2927 = vshrl.u32 %v2926, 7
        %v2928 = vsub.s32 %v893, %v2927
        %v2929 = vrot.slane %v2804, %v2928
        %v2930 = vsel %vm898, %v2929, %v2925
        %v2931 = vlaneseq
        %v2932 = vshrl.u32 %v2931, 7
        %v2933 = vsub.s32 %v870, %v2932
        %v2934 = vrot.slane %v2807, %v2933
        %v2935 = vlaneseq
        %v2936 = vshrl.u32 %v2935, 7
        %v2937 = vsub.s32 %v893, %v2936
        %v2938 = vrot.slane %v2810, %v2937
        %v2939 = vsel %vm898, %v2938, %v2934
        %v2940 = vlaneseq
        %v2941 = vshrl.u32 %v2940, 7
        %v2942 = vsub.s32 %v870, %v2941
        %v2943 = vrot.slane %v2813, %v2942
        %v2944 = vlaneseq
        %v2945 = vshrl.u32 %v2944, 7
        %v2946 = vsub.s32 %v893, %v2945
        %v2947 = vrot.slane %v2816, %v2946
        %v2948 = vsel %vm898, %v2947, %v2943
        %v2949 = vlaneseq
        %v2950 = vshrl.u32 %v2949, 7
        %v2951 = vsub.s32 %v870, %v2950
        %v2952 = vrot.slane %v2819, %v2951
        %v2953 = vlaneseq
        %v2954 = vshrl.u32 %v2953, 7
        %v2955 = vsub.s32 %v893, %v2954
        %v2956 = vrot.slane %v2822, %v2955
        %v2957 = vsel %vm898, %v2956, %v2952
        %v2958 = vlaneseq
        %v2959 = vshrl.u32 %v2958, 7
        %v2960 = vsub.s32 %v870, %v2959
        %v2961 = vrot.slane %v2825, %v2960
        %v2962 = vlaneseq
        %v2963 = vshrl.u32 %v2962, 7
        %v2964 = vsub.s32 %v893, %v2963
        %v2965 = vrot.slane %v2828, %v2964
        %v2966 = vsel %vm898, %v2965, %v2961
        %v2967 = vlaneseq
        %v2968 = vshrl.u32 %v2967, 7
        %v2969 = vsub.s32 %v870, %v2968
        %v2970 = vrot.slane %v2831, %v2969
        %v2971 = vlaneseq
        %v2972 = vshrl.u32 %v2971, 7
        %v2973 = vsub.s32 %v893, %v2972
        %v2974 = vrot.slane %v2834, %v2973
        %v2975 = vsel %vm898, %v2974, %v2970
        %v2976 = vlaneseq
        %v2977 = vshrl.u32 %v2976, 7
        %v2978 = vsub.s32 %v870, %v2977
        %v2979 = vrot.slane %v2837, %v2978
        %v2980 = vlaneseq
        %v2981 = vshrl.u32 %v2980, 7
        %v2982 = vsub.s32 %v893, %v2981
        %v2983 = vrot.slane %v2840, %v2982
        %v2984 = vsel %vm898, %v2983, %v2979
        %v2985 = vsel %vm900, %v2858, %v2849
        %v2986 = vsel %vm901, %v2867, %v2985
        %v2987 = vsel %vm903, %v2876, %v2986
        %v2988 = vsel %vm905, %v2885, %v2987
        %v2989 = vsel %vm907, %v2894, %v2988
        %v2990 = vsel %vm909, %v2903, %v2989
        %v2991 = vsel %vm911, %v2912, %v2990
        %v2992 = vsel %vm900, %v2930, %v2921
        %v2993 = vsel %vm901, %v2939, %v2992
        %v2994 = vsel %vm903, %v2948, %v2993
        %v2995 = vsel %vm905, %v2957, %v2994
        %v2996 = vsel %vm907, %v2966, %v2995
        %v2997 = vsel %vm909, %v2975, %v2996
        %v2998 = vsel %vm911, %v2984, %v2997
        %v3001 = vsel %vm916, %v2991, 0.0
        %3002 = vadd.xlane.f32.xlu0 %v3001
        %v3003 = vpop.xlane.xlu0 %3002
        %v3004 = vsel %vm916, %v2998, 0.0
        %3005 = vadd.xlane.f32.xlu0 %v3004
        %v3006 = vpop.xlane.xlu0 %3005
        %v3007 = vmul.f32 %v2055, 0.8
        %v3008 = vceil.f32 %v3007
        %vm3009 = vcmp.lt.f32.partialorder %v3003, %v3008
        %vm3010 = vcmp.lt.f32.partialorder %v3006, %v3008
        %v3011 = vsel %vm3009, 1, 0
        %v3012 = vsel %vm3010, 1, 0
        %v3013 = vcvt.s32.f32 %v3011
        %v3014 = vcvt.s32.f32 %v3012
        %v3015 = vmul.f32 %v2029, %v3013
        %v3016 = vmul.f32 %v2030, %v3014
        %v3017 = vtanh.pop %v2340
        %v3018 = vtanh.pop %v2342
        %v3019 = vmul.f32 %v2329, %v3017
        %v3020 = vmul.f32 %v2330, %v3018
        %3022 = vset.pattern.permute.xlu0 0
        %3023 = vperm.xlu0 %3022, %v3015
        %v3024 = vpop.permute.xlu0 %3023
        %3027 = vset.pattern.permute.xlu0 0
        %3028 = vperm.xlu0 %3027, %v3016
        %v3029 = vpop.permute.xlu0 %3028
        %v3031 = vmul.f32 %v3019, %v3024
        %v3032 = vmul.f32 %v3020, %v3029
        %v3033 = vsel %vm2011, %v3015, 0.0
        %v3034 = vsel %vm2011, %v3016, 0.0
        %v3035 = vadd.f32 %v3033, %v3034
        %v3036 = vrot.slane %v3035, 4
        %v3037 = vadd.f32 %v3035, %v3036
        %v3038 = vrot.slane %v3037, 2
        %v3039 = vadd.f32 %v3037, %v3038
        %v3040 = vrot.slane %v3039, 1
        %v3041 = vadd.f32 %v3039, %v3040
        %v3042 = vadd.f32 %v3031, %v3032
        %v3043 = vrot.slane %v3042, 4
        %v3044 = vadd.f32 %v3042, %v3043
        %v3045 = vrot.slane %v3044, 2
        %v3046 = vadd.f32 %v3044, %v3045
        %v3047 = vrot.slane %v3046, 1
        %v3048 = vadd.f32 %v3046, %v3047
        %v3049 = vmax.f32 %v3041, 1.0
        %3051 = vset.pattern.permute.xlu0 0
        %3052 = vperm.xlu0 %3051, %v3049
        %v3053 = vpop.permute.xlu0 %3052
        %v3055 = vrcp.pop %v3053
        %v3056 = vmul.f32 %v3048, %v3055
        %vm3057 = vcmp.gt.f32.partialorder %v3015, 0.5
        %vm3058 = vcmp.gt.f32.partialorder %v3016, 0.5
        %v3059 = vsel %vm3057, 1, 0
        %v3060 = vsel %vm3058, 1, 0
        %3061 = vset.pattern.permute.xlu0 0
        %3062 = vperm.xlu0 %3061, %v3059
        %v3063 = vpop.permute.xlu0 %3062
        %3064 = vset.pattern.permute.xlu0 0
        %3065 = vperm.xlu0 %3064, %v3060
        %v3066 = vpop.permute.xlu0 %3065
        %vm3067 = vcmp.eq.s32.totalorder %v3063, 1
        %vm3068 = vcmp.eq.s32.totalorder %v3066, 1
        %v3069 = vsel %vm3067, %v3031, -1e+30
        %v3070 = vsel %vm3068, %v3032, -1e+30
        %v3071 = vmax.f32 %v3069, %v3070
        %v3072 = vrot.slane %v3071, 4
        %v3073 = vmax.f32 %v3071, %v3072
        %v3074 = vrot.slane %v3073, 2
        %v3075 = vmax.f32 %v3073, %v3074
        %v3076 = vrot.slane %v3075, 1
        %v3077 = vmax.f32 %v3075, %v3076
        %vm3078 = vcmp.gt.f32.partialorder %v3041, 0.0
        %v3079 = vsel %vm3078, 1, 0
        %3080 = vset.pattern.permute.xlu0 0
        %3081 = vperm.xlu0 %3080, %v3079
        %v3082 = vpop.permute.xlu0 %3081
        %vm3083 = vcmp.eq.s32.totalorder %v3082, 1
        %v3084 = vsel %vm3083, %v3077, 0.0
        %v3085 = vadd.f32 %v2099, %v3084
        %v3086 = vadd.f32 %v2100, %v3056
        %v3087 = vld [vmem:[#allocation11] sm:$0xff]
        %v3088 = vld [vmem:[#allocation11 + $0x8] sm:$0xff]
        %v3089 = vld [vmem:[#allocation11 + $0x10] sm:$0xff]
        %v3090 = vld [vmem:[#allocation11 + $0x18] sm:$0xff]
        %v3091 = vld [vmem:[#allocation11 + $0x20] sm:$0xff]
        %v3092 = vld [vmem:[#allocation11 + $0x28] sm:$0xff]
        %v3093 = vld [vmem:[#allocation11 + $0x30] sm:$0xff]
        %v3094 = vld [vmem:[#allocation11 + $0x38] sm:$0xff]
        %v3095 = vld [vmem:[#allocation11 + $0x40] sm:$0xff]
        %v3096 = vld [vmem:[#allocation11 + $0x48] sm:$0xff]
        %v3097 = vld [vmem:[#allocation11 + $0x50] sm:$0xff]
        %v3098 = vld [vmem:[#allocation11 + $0x58] sm:$0xff]
        %v3099 = vld [vmem:[#allocation11 + $0x60] sm:$0xff]
        %v3100 = vld [vmem:[#allocation11 + $0x68] sm:$0xff]
        %v3101 = vld [vmem:[#allocation11 + $0x70] sm:$0xff]
        %v3102 = vld [vmem:[#allocation11 + $0x78] sm:$0xff]
        %v3103 = vld [vmem:[#allocation13] sm:$0x1]
        %v3104 = vld [vmem:[%s11] sm:$0x1]
        %v3105 = vlaneseq
        %v3106 = vshrl.u32 %v3105, 7
        %v3107 = vsub.s32 %v870, %v3106
        %v3108 = vrot.slane %v3024, %v3107
        %v3109 = vlaneseq
        %v3110 = vshrl.u32 %v3109, 7
        %v3111 = vsub.s32 %v893, %v3110
        %v3112 = vrot.slane %v3029, %v3111
        %v3113 = vsel %vm898, %v3112, %v3108
        %v3114 = vsel %vm901, %v3113, %v3113
        %v3115 = vsel %vm903, %v3113, %v3114
        %v3116 = vsel %vm905, %v3113, %v3115
        %v3117 = vsel %vm907, %v3113, %v3116
        %v3118 = vsel %vm909, %v3113, %v3117
        %v3119 = vsel %vm911, %v3113, %v3118
        %v3121 = vmul.f32 %v862, %v3119
        %v3122 = vmul.f32 %v863, %v3119
        %v3123 = vsel %vm916, %v3121, 0.0
        %3124 = vadd.xlane.f32.xlu0 %v3123
        %v3125 = vpop.xlane.xlu0 %3124
        %v3126 = vsel %vm916, %v3122, 0.0
        %3127 = vadd.xlane.f32.xlu0 %v3126
        %v3128 = vpop.xlane.xlu0 %3127
        %v3129 = vadd.f32 %v3125, %v3015
        %v3130 = vadd.f32 %v3128, %v3016
        %vm3131 = vcmp.gt.f32.partialorder %v3129, 0.0
        %vm3132 = vcmp.gt.f32.partialorder %v3130, 0.0
        %v3133 = vrsqrt.pop %v3129
        %v3134 = vrsqrt.pop %v3130
        %v3135 = vsel %vm3131, %v3133, 0.0
        %v3136 = vsel %vm3132, %v3134, 0.0
        %3137 = vmatprep.subr.mxu0 0.0
        %3138 = vmatpush1.msra.mxu0 %v3102
        %3139 = vmatprep.subr.mxu0 0.0
        %3140 = vmatpush1.msra.mxu0 %v3101
        %3141 = vmatprep.subr.mxu0 0.0
        %3142 = vmatpush1.msra.mxu0 %v3100
        %3143 = vmatprep.subr.mxu0 0.0
        %3144 = vmatpush1.msra.mxu0 %v3099
        %3145 = vmatprep.subr.mxu0 0.0
        %3146 = vmatpush1.msra.mxu0 %v3098
        %3147 = vmatprep.subr.mxu0 0.0
        %3148 = vmatpush1.msra.mxu0 %v3097
        %3149 = vmatprep.subr.mxu0 0.0
        %3150 = vmatpush1.msra.mxu0 %v3096
        %3151 = vmatprep.subr.mxu0 0.0
        %3152 = vmatpush1.msra.mxu0 %v3095
        %3153 = vmatprep.subr.mxu0 0.0
        %3154 = vmatpush1.msra.mxu0 %v3094
        %3155 = vmatprep.subr.mxu0 0.0
        %3156 = vmatpush1.msra.mxu0 %v3093
        %3157 = vmatprep.subr.mxu0 0.0
        %3158 = vmatpush1.msra.mxu0 %v3092
        %3159 = vmatprep.subr.mxu0 0.0
        %3160 = vmatpush1.msra.mxu0 %v3091
        %3161 = vmatprep.subr.mxu0 0.0
        %3162 = vmatpush1.msra.mxu0 %v3090
        %3163 = vmatprep.subr.mxu0 0.0
        %3164 = vmatpush1.msra.mxu0 %v3089
        %3165 = vmatprep.subr.mxu0 0.0
        %3166 = vmatpush1.msra.mxu0 %v3088
        %3167 = vmatprep.subr.mxu0 0.0
        %3168 = vmatpush1.msra.mxu0 %v3087
        %3169 = vmatprep.subr.mxu0 0.0
        %3170 = vmatpush2.msra.mxu0 0.0
        %3171 = vmatprep.subr.mxu0 0.0
        %3172 = vmatpush2.msra.mxu0 0.0
        %3173 = vmatprep.subr.mxu0 0.0
        %3174 = vmatpush2.msra.mxu0 0.0
        %3175 = vmatprep.subr.mxu0 0.0
        %3176 = vmatpush2.msra.mxu0 0.0
        %3177 = vmatprep.subr.mxu0 0.0
        %3178 = vmatpush2.msra.mxu0 0.0
        %3179 = vmatprep.subr.mxu0 0.0
        %3180 = vmatpush2.msra.mxu0 0.0
        %3181 = vmatprep.subr.mxu0 0.0
        %3182 = vmatpush2.msra.mxu0 0.0
        %3183 = vmatprep.subr.mxu0 0.0
        %3184 = vmatpush2.msra.mxu0 0.0
        %3185 = vmatprep.subr.mxu0 0.0
        %3186 = vmatpush2.msra.mxu0 0.0
        %3187 = vmatprep.subr.mxu0 0.0
        %3188 = vmatpush2.msra.mxu0 0.0
        %3189 = vmatprep.subr.mxu0 0.0
        %3190 = vmatpush2.msra.mxu0 0.0
        %3191 = vmatprep.subr.mxu0 0.0
        %3192 = vmatpush2.msra.mxu0 0.0
        %3193 = vmatprep.subr.mxu0 0.0
        %3194 = vmatpush2.msra.mxu0 0.0
        %3195 = vmatprep.subr.mxu0 0.0
        %3196 = vmatpush2.msra.mxu0 0.0
        %3197 = vmatprep.subr.mxu0 0.0
        %3198 = vmatpush2.msra.mxu0 0.0
        %3199 = vmatprep.subr.mxu0 0.0
        %3200 = vmatpush2.msra.mxu0 0.0
        %3201 = vmatprep.mubr.f32.mxu0 0.0
        %3202 = vmatmul.mubr.f32.gmra.mxu0 %v3031
        %v3203 = vpop.f32.mrf.mxu0
        %v3204 = vadd.f32 0.0, %v3203
        %v3205 = vpop.f32.mrf.mxu0
        %3206 = vmatprep.mubr.f32.mxu0 0.0
        %3207 = vmatmul.mubr.f32.gmra.mxu0 %v3032
        %v3208 = vpop.f32.mrf.mxu0
        %v3209 = vadd.f32 0.0, %v3208
        %v3210 = vpop.f32.mrf.mxu0
        %3211 = vdwg.mxu0
        %3213 = vset.pattern.permute.xlu0 0
        %3214 = vperm.xlu0 %3213, %v3135
        %v3215 = vpop.permute.xlu0 %3214
        %3218 = vset.pattern.permute.xlu0 0
        %3219 = vperm.xlu0 %3218, %v3136
        %v3220 = vpop.permute.xlu0 %3219
        %v3222 = vmul.f32 %v3215, %v3204
        %v3223 = vmul.f32 %v3220, %v3209
        %3224 = vmatprep.subr.mxu0 0.0
        %3225 = vmatpush1.msra.mxu0 0.0
        %3226 = vmatprep.subr.mxu0 0.0
        %3227 = vmatpush1.msra.mxu0 0.0
        %3228 = vmatprep.subr.mxu0 0.0
        %3229 = vmatpush1.msra.mxu0 0.0
        %3230 = vmatprep.subr.mxu0 0.0
        %3231 = vmatpush1.msra.mxu0 0.0
        %3232 = vmatprep.subr.mxu0 0.0
        %3233 = vmatpush1.msra.mxu0 0.0
        %3234 = vmatprep.subr.mxu0 0.0
        %3235 = vmatpush1.msra.mxu0 0.0
        %3236 = vmatprep.subr.mxu0 0.0
        %3237 = vmatpush1.msra.mxu0 0.0
        %3238 = vmatprep.subr.mxu0 0.0
        %3239 = vmatpush1.msra.mxu0 0.0
        %3240 = vmatprep.subr.mxu0 0.0
        %3241 = vmatpush1.msra.mxu0 0.0
        %3242 = vmatprep.subr.mxu0 0.0
        %3243 = vmatpush1.msra.mxu0 0.0
        %3244 = vmatprep.subr.mxu0 0.0
        %3245 = vmatpush1.msra.mxu0 0.0
        %3246 = vmatprep.subr.mxu0 0.0
        %3247 = vmatpush1.msra.mxu0 0.0
        %3248 = vmatprep.subr.mxu0 0.0
        %3249 = vmatpush1.msra.mxu0 0.0
        %3250 = vmatprep.subr.mxu0 0.0
        %3251 = vmatpush1.msra.mxu0 0.0
        %3252 = vmatprep.subr.mxu0 0.0
        %3253 = vmatpush1.msra.mxu0 %v3223
        %3254 = vmatprep.subr.mxu0 0.0
        %3255 = vmatpush1.msra.mxu0 %v3222
        %3256 = vmatprep.subr.mxu0 0.0
        %3257 = vmatpush2.msra.mxu0 0.0
        %3258 = vmatprep.subr.mxu0 0.0
        %3259 = vmatpush2.msra.mxu0 0.0
        %3260 = vmatprep.subr.mxu0 0.0
        %3261 = vmatpush2.msra.mxu0 0.0
        %3262 = vmatprep.subr.mxu0 0.0
        %3263 = vmatpush2.msra.mxu0 0.0
        %3264 = vmatprep.subr.mxu0 0.0
        %3265 = vmatpush2.msra.mxu0 0.0
        %3266 = vmatprep.subr.mxu0 0.0
        %3267 = vmatpush2.msra.mxu0 0.0
        %3268 = vmatprep.subr.mxu0 0.0
        %3269 = vmatpush2.msra.mxu0 0.0
        %3270 = vmatprep.subr.mxu0 0.0
        %3271 = vmatpush2.msra.mxu0 0.0
        %3272 = vmatprep.subr.mxu0 0.0
        %3273 = vmatpush2.msra.mxu0 0.0
        %3274 = vmatprep.subr.mxu0 0.0
        %3275 = vmatpush2.msra.mxu0 0.0
        %3276 = vmatprep.subr.mxu0 0.0
        %3277 = vmatpush2.msra.mxu0 0.0
        %3278 = vmatprep.subr.mxu0 0.0
        %3279 = vmatpush2.msra.mxu0 0.0
        %3280 = vmatprep.subr.mxu0 0.0
        %3281 = vmatpush2.msra.mxu0 0.0
        %3282 = vmatprep.subr.mxu0 0.0
        %3283 = vmatpush2.msra.mxu0 0.0
        %3284 = vmatprep.subr.mxu0 0.0
        %3285 = vmatpush2.msra.mxu0 0.0
        %3286 = vmatprep.subr.mxu0 0.0
        %3287 = vmatpush2.msra.mxu0 0.0
        %3288 = vmatprep.mubr.f32.mxu0 0.0
        %3289 = vmatmul.mubr.f32.gmra.mxu0 %v1025
        %v3290 = vpop.f32.mrf.mxu0
        %v3291 = vadd.f32 0.0, %v3290
        %v3292 = vpop.f32.mrf.mxu0
        %3293 = vmatprep.mubr.f32.mxu0 0.0
        %3294 = vmatmul.mubr.f32.gmra.mxu0 %v1028
        %v3295 = vpop.f32.mrf.mxu0
        %v3296 = vadd.f32 0.0, %v3295
        %v3297 = vpop.f32.mrf.mxu0
        %3298 = vdwg.mxu0
        %v3299 = vmul.f32 %v3024, %v3222
        %v3300 = vmul.f32 %v3029, %v3223
        %v3301 = vadd.f32 %v3291, %v3299
        %v3302 = vadd.f32 %v3296, %v3300
        %v3303 = vmul.f32 %v3215, %v3301
        %v3304 = vmul.f32 %v3220, %v3302
        %v3306 = vlaneseq
        %v3307 = vshrl.u32 %v3306, 7
        %v3308 = vsub.s32 0, %v3307
        %v3309 = vrot.slane %v3103, %v3308
        %v3311 = vadd.f32 %v3303, %v3309
        %v3312 = vadd.f32 %v3304, %v3309
        %v3313 = vmax.f32 %v3311, 0.0
        %v3314 = vmax.f32 %v3312, 0.0
        %v3315 = vmul.f32 %v3313, %v3024
        %v3316 = vmul.f32 %v3314, %v3029
        %v3318 = vlaneseq
        %v3319 = vshrl.u32 %v3318, 7
        %v3320 = vsub.s32 0, %v3319
        %v3321 = vrot.slane %v3104, %v3320
        %v3323 = vmul.f32 %v3315, %v3321
        %v3324 = vmul.f32 %v3316, %v3321
        %3325 = vadd.xlane.f32.xlu0 %v3323
        %v3326 = vpop.xlane.xlu0 %3325
        %3327 = vadd.xlane.f32.xlu0 %v3324
        %v3328 = vpop.xlane.xlu0 %3327
        %v3331 = vlaneseq
        %v3332 = vshrl.u32 %v3331, 7
        %v3333 = vsub.s32 0, %v3332
        %v3334 = vrot.slane %v3326, %v3333
        %v3335 = vlaneseq
        %v3336 = vshrl.u32 %v3335, 7
        %v3337 = vsub.s32 1, %v3336
        %v3338 = vrot.slane %v3326, %v3337
        %v3339 = vlaneseq
        %v3340 = vshrl.u32 %v3339, 7
        %v3341 = vsub.s32 2, %v3340
        %v3342 = vrot.slane %v3326, %v3341
        %v3343 = vlaneseq
        %v3344 = vshrl.u32 %v3343, 7
        %v3345 = vsub.s32 3, %v3344
        %v3346 = vrot.slane %v3326, %v3345
        %v3347 = vlaneseq
        %v3348 = vshrl.u32 %v3347, 7
        %v3349 = vsub.s32 4, %v3348
        %v3350 = vrot.slane %v3326, %v3349
        %v3351 = vlaneseq
        %v3352 = vshrl.u32 %v3351, 7
        %v3353 = vsub.s32 5, %v3352
        %v3354 = vrot.slane %v3326, %v3353
        %v3355 = vlaneseq
        %v3356 = vshrl.u32 %v3355, 7
        %v3357 = vsub.s32 6, %v3356
        %v3358 = vrot.slane %v3326, %v3357
        %v3359 = vlaneseq
        %v3360 = vshrl.u32 %v3359, 7
        %v3361 = vsub.s32 7, %v3360
        %v3362 = vrot.slane %v3326, %v3361
        %v3363 = vlaneseq
        %v3364 = vshrl.u32 %v3363, 7
        %v3365 = vsub.s32 0, %v3364
        %v3366 = vrot.slane %v3328, %v3365
        %v3367 = vlaneseq
        %v3368 = vshrl.u32 %v3367, 7
        %v3369 = vsub.s32 1, %v3368
        %v3370 = vrot.slane %v3328, %v3369
        %v3371 = vlaneseq
        %v3372 = vshrl.u32 %v3371, 7
        %v3373 = vsub.s32 2, %v3372
        %v3374 = vrot.slane %v3328, %v3373
        %v3375 = vlaneseq
        %v3376 = vshrl.u32 %v3375, 7
        %v3377 = vsub.s32 3, %v3376
        %v3378 = vrot.slane %v3328, %v3377
        %v3379 = vlaneseq
        %v3380 = vshrl.u32 %v3379, 7
        %v3381 = vsub.s32 4, %v3380
        %v3382 = vrot.slane %v3328, %v3381
        %v3383 = vlaneseq
        %v3384 = vshrl.u32 %v3383, 7
        %v3385 = vsub.s32 5, %v3384
        %v3386 = vrot.slane %v3328, %v3385
        %v3387 = vlaneseq
        %v3388 = vshrl.u32 %v3387, 7
        %v3389 = vsub.s32 6, %v3388
        %v3390 = vrot.slane %v3328, %v3389
        %v3391 = vlaneseq
        %v3392 = vshrl.u32 %v3391, 7
        %v3393 = vsub.s32 7, %v3392
        %v3394 = vrot.slane %v3328, %v3393
        %vm3411 = vcmp.gt.f32.partialorder %v3326, %v3334
        %vm3412 = vcmp.gt.f32.partialorder %v3328, %v3334
        %vm3413 = vcmp.gt.f32.partialorder %v3326, %v3338
        %vm3414 = vcmp.gt.f32.partialorder %v3328, %v3338
        %vm3415 = vcmp.gt.f32.partialorder %v3326, %v3342
        %vm3416 = vcmp.gt.f32.partialorder %v3328, %v3342
        %vm3417 = vcmp.gt.f32.partialorder %v3326, %v3346
        %vm3418 = vcmp.gt.f32.partialorder %v3328, %v3346
        %vm3419 = vcmp.gt.f32.partialorder %v3326, %v3350
        %vm3420 = vcmp.gt.f32.partialorder %v3328, %v3350
        %vm3421 = vcmp.gt.f32.partialorder %v3326, %v3354
        %vm3422 = vcmp.gt.f32.partialorder %v3328, %v3354
        %vm3423 = vcmp.gt.f32.partialorder %v3326, %v3358
        %vm3424 = vcmp.gt.f32.partialorder %v3328, %v3358
        %vm3425 = vcmp.gt.f32.partialorder %v3326, %v3362
        %vm3426 = vcmp.gt.f32.partialorder %v3328, %v3362
        %vm3427 = vcmp.gt.f32.partialorder %v3326, %v3366
        %vm3428 = vcmp.gt.f32.partialorder %v3328, %v3366
        %vm3429 = vcmp.gt.f32.partialorder %v3326, %v3370
        %vm3430 = vcmp.gt.f32.partialorder %v3328, %v3370
        %vm3431 = vcmp.gt.f32.partialorder %v3326, %v3374
        %vm3432 = vcmp.gt.f32.partialorder %v3328, %v3374
        %vm3433 = vcmp.gt.f32.partialorder %v3326, %v3378
        %vm3434 = vcmp.gt.f32.partialorder %v3328, %v3378
        %vm3435 = vcmp.gt.f32.partialorder %v3326, %v3382
        %vm3436 = vcmp.gt.f32.partialorder %v3328, %v3382
        %vm3437 = vcmp.gt.f32.partialorder %v3326, %v3386
        %vm3438 = vcmp.gt.f32.partialorder %v3328, %v3386
        %vm3439 = vcmp.gt.f32.partialorder %v3326, %v3390
        %vm3440 = vcmp.gt.f32.partialorder %v3328, %v3390
        %vm3441 = vcmp.gt.f32.partialorder %v3326, %v3394
        %vm3442 = vcmp.gt.f32.partialorder %v3328, %v3394
        %v3443 = vsel %vm3411, 1, 0
        %v3444 = vsel %vm3412, 1, 0
        %v3445 = vsel %vm3413, 1, 0
        %v3446 = vsel %vm3414, 1, 0
        %v3447 = vsel %vm3415, 1, 0
        %v3448 = vsel %vm3416, 1, 0
        %v3449 = vsel %vm3417, 1, 0
        %v3450 = vsel %vm3418, 1, 0
        %v3451 = vsel %vm3419, 1, 0
        %v3452 = vsel %vm3420, 1, 0
        %v3453 = vsel %vm3421, 1, 0
        %v3454 = vsel %vm3422, 1, 0
        %v3455 = vsel %vm3423, 1, 0
        %v3456 = vsel %vm3424, 1, 0
        %v3457 = vsel %vm3425, 1, 0
        %v3458 = vsel %vm3426, 1, 0
        %v3459 = vsel %vm3427, 1, 0
        %v3460 = vsel %vm3428, 1, 0
        %v3461 = vsel %vm3429, 1, 0
        %v3462 = vsel %vm3430, 1, 0
        %v3463 = vsel %vm3431, 1, 0
        %v3464 = vsel %vm3432, 1, 0
        %v3465 = vsel %vm3433, 1, 0
        %v3466 = vsel %vm3434, 1, 0
        %v3467 = vsel %vm3435, 1, 0
        %v3468 = vsel %vm3436, 1, 0
        %v3469 = vsel %vm3437, 1, 0
        %v3470 = vsel %vm3438, 1, 0
        %v3471 = vsel %vm3439, 1, 0
        %v3472 = vsel %vm3440, 1, 0
        %v3473 = vsel %vm3441, 1, 0
        %v3474 = vsel %vm3442, 1, 0
        %v3475 = vcvt.s32.f32 %v3443
        %v3476 = vcvt.s32.f32 %v3444
        %v3477 = vcvt.s32.f32 %v3445
        %v3478 = vcvt.s32.f32 %v3446
        %v3479 = vcvt.s32.f32 %v3447
        %v3480 = vcvt.s32.f32 %v3448
        %v3481 = vcvt.s32.f32 %v3449
        %v3482 = vcvt.s32.f32 %v3450
        %v3483 = vcvt.s32.f32 %v3451
        %v3484 = vcvt.s32.f32 %v3452
        %v3485 = vcvt.s32.f32 %v3453
        %v3486 = vcvt.s32.f32 %v3454
        %v3487 = vcvt.s32.f32 %v3455
        %v3488 = vcvt.s32.f32 %v3456
        %v3489 = vcvt.s32.f32 %v3457
        %v3490 = vcvt.s32.f32 %v3458
        %v3491 = vcvt.s32.f32 %v3459
        %v3492 = vcvt.s32.f32 %v3460
        %v3493 = vcvt.s32.f32 %v3461
        %v3494 = vcvt.s32.f32 %v3462
        %v3495 = vcvt.s32.f32 %v3463
        %v3496 = vcvt.s32.f32 %v3464
        %v3497 = vcvt.s32.f32 %v3465
        %v3498 = vcvt.s32.f32 %v3466
        %v3499 = vcvt.s32.f32 %v3467
        %v3500 = vcvt.s32.f32 %v3468
        %v3501 = vcvt.s32.f32 %v3469
        %v3502 = vcvt.s32.f32 %v3470
        %v3503 = vcvt.s32.f32 %v3471
        %v3504 = vcvt.s32.f32 %v3472
        %v3505 = vcvt.s32.f32 %v3473
        %v3506 = vcvt.s32.f32 %v3474
        %vm3507 = vcmp.eq.f32.partialorder %v3326, %v3334
        %vm3508 = vcmp.eq.f32.partialorder %v3328, %v3334
        %vm3509 = vcmp.eq.f32.partialorder %v3326, %v3338
        %vm3510 = vcmp.eq.f32.partialorder %v3328, %v3338
        %vm3511 = vcmp.eq.f32.partialorder %v3326, %v3342
        %vm3512 = vcmp.eq.f32.partialorder %v3328, %v3342
        %vm3513 = vcmp.eq.f32.partialorder %v3326, %v3346
        %vm3514 = vcmp.eq.f32.partialorder %v3328, %v3346
        %vm3515 = vcmp.eq.f32.partialorder %v3326, %v3350
        %vm3516 = vcmp.eq.f32.partialorder %v3328, %v3350
        %vm3517 = vcmp.eq.f32.partialorder %v3326, %v3354
        %vm3518 = vcmp.eq.f32.partialorder %v3328, %v3354
        %vm3519 = vcmp.eq.f32.partialorder %v3326, %v3358
        %vm3520 = vcmp.eq.f32.partialorder %v3328, %v3358
        %vm3521 = vcmp.eq.f32.partialorder %v3326, %v3362
        %vm3522 = vcmp.eq.f32.partialorder %v3328, %v3362
        %vm3523 = vcmp.eq.f32.partialorder %v3326, %v3366
        %vm3524 = vcmp.eq.f32.partialorder %v3328, %v3366
        %vm3525 = vcmp.eq.f32.partialorder %v3326, %v3370
        %vm3526 = vcmp.eq.f32.partialorder %v3328, %v3370
        %vm3527 = vcmp.eq.f32.partialorder %v3326, %v3374
        %vm3528 = vcmp.eq.f32.partialorder %v3328, %v3374
        %vm3529 = vcmp.eq.f32.partialorder %v3326, %v3378
        %vm3530 = vcmp.eq.f32.partialorder %v3328, %v3378
        %vm3531 = vcmp.eq.f32.partialorder %v3326, %v3382
        %vm3532 = vcmp.eq.f32.partialorder %v3328, %v3382
        %vm3533 = vcmp.eq.f32.partialorder %v3326, %v3386
        %vm3534 = vcmp.eq.f32.partialorder %v3328, %v3386
        %vm3535 = vcmp.eq.f32.partialorder %v3326, %v3390
        %vm3536 = vcmp.eq.f32.partialorder %v3328, %v3390
        %vm3537 = vcmp.eq.f32.partialorder %v3326, %v3394
        %vm3538 = vcmp.eq.f32.partialorder %v3328, %v3394
        %v3539 = vsel %vm3507, 1, 0
        %v3540 = vsel %vm3508, 1, 0
        %v3541 = vsel %vm3509, 1, 0
        %v3542 = vsel %vm3510, 1, 0
        %v3543 = vsel %vm3511, 1, 0
        %v3544 = vsel %vm3512, 1, 0
        %v3545 = vsel %vm3513, 1, 0
        %v3546 = vsel %vm3514, 1, 0
        %v3547 = vsel %vm3515, 1, 0
        %v3548 = vsel %vm3516, 1, 0
        %v3549 = vsel %vm3517, 1, 0
        %v3550 = vsel %vm3518, 1, 0
        %v3551 = vsel %vm3519, 1, 0
        %v3552 = vsel %vm3520, 1, 0
        %v3553 = vsel %vm3521, 1, 0
        %v3554 = vsel %vm3522, 1, 0
        %v3555 = vsel %vm3523, 1, 0
        %v3556 = vsel %vm3524, 1, 0
        %v3557 = vsel %vm3525, 1, 0
        %v3558 = vsel %vm3526, 1, 0
        %v3559 = vsel %vm3527, 1, 0
        %v3560 = vsel %vm3528, 1, 0
        %v3561 = vsel %vm3529, 1, 0
        %v3562 = vsel %vm3530, 1, 0
        %v3563 = vsel %vm3531, 1, 0
        %v3564 = vsel %vm3532, 1, 0
        %v3565 = vsel %vm3533, 1, 0
        %v3566 = vsel %vm3534, 1, 0
        %v3567 = vsel %vm3535, 1, 0
        %v3568 = vsel %vm3536, 1, 0
        %v3569 = vsel %vm3537, 1, 0
        %v3570 = vsel %vm3538, 1, 0
        %v3571 = vcvt.s32.f32 %v3539
        %v3572 = vcvt.s32.f32 %v3540
        %v3573 = vcvt.s32.f32 %v3541
        %v3574 = vcvt.s32.f32 %v3542
        %v3575 = vcvt.s32.f32 %v3543
        %v3576 = vcvt.s32.f32 %v3544
        %v3577 = vcvt.s32.f32 %v3545
        %v3578 = vcvt.s32.f32 %v3546
        %v3579 = vcvt.s32.f32 %v3547
        %v3580 = vcvt.s32.f32 %v3548
        %v3581 = vcvt.s32.f32 %v3549
        %v3582 = vcvt.s32.f32 %v3550
        %v3583 = vcvt.s32.f32 %v3551
        %v3584 = vcvt.s32.f32 %v3552
        %v3585 = vcvt.s32.f32 %v3553
        %v3586 = vcvt.s32.f32 %v3554
        %v3587 = vcvt.s32.f32 %v3555
        %v3588 = vcvt.s32.f32 %v3556
        %v3589 = vcvt.s32.f32 %v3557
        %v3590 = vcvt.s32.f32 %v3558
        %v3591 = vcvt.s32.f32 %v3559
        %v3592 = vcvt.s32.f32 %v3560
        %v3593 = vcvt.s32.f32 %v3561
        %v3594 = vcvt.s32.f32 %v3562
        %v3595 = vcvt.s32.f32 %v3563
        %v3596 = vcvt.s32.f32 %v3564
        %v3597 = vcvt.s32.f32 %v3565
        %v3598 = vcvt.s32.f32 %v3566
        %v3599 = vcvt.s32.f32 %v3567
        %v3600 = vcvt.s32.f32 %v3568
        %v3601 = vcvt.s32.f32 %v3569
        %v3602 = vcvt.s32.f32 %v3570
        %v3603 = vmul.f32 %v3571, %v1419
        %v3604 = vmul.f32 %v3572, %v1423
        %v3605 = vmul.f32 %v3573, %v1430
        %v3606 = vmul.f32 %v3574, %v1434
        %v3607 = vmul.f32 %v3575, %v1441
        %v3608 = vmul.f32 %v3576, %v1445
        %v3609 = vmul.f32 %v3577, %v1452
        %v3610 = vmul.f32 %v3578, %v1456
        %v3611 = vmul.f32 %v3579, %v1463
        %v3612 = vmul.f32 %v3580, %v1467
        %v3613 = vmul.f32 %v3581, %v1474
        %v3614 = vmul.f32 %v3582, %v1478
        %v3615 = vmul.f32 %v3583, %v1485
        %v3616 = vmul.f32 %v3584, %v1489
        %v3617 = vmul.f32 %v3585, %v1496
        %v3618 = vmul.f32 %v3586, %v1500
        %v3619 = vmul.f32 %v3587, %v1507
        %v3620 = vmul.f32 %v3588, %v1511
        %v3621 = vmul.f32 %v3589, %v1518
        %v3622 = vmul.f32 %v3590, %v1522
        %v3623 = vmul.f32 %v3591, %v1529
        %v3624 = vmul.f32 %v3592, %v1533
        %v3625 = vmul.f32 %v3593, %v1540
        %v3626 = vmul.f32 %v3594, %v1544
        %v3627 = vmul.f32 %v3595, %v1551
        %v3628 = vmul.f32 %v3596, %v1555
        %v3629 = vmul.f32 %v3597, %v1562
        %v3630 = vmul.f32 %v3598, %v1566
        %v3631 = vmul.f32 %v3599, %v1573
        %v3632 = vmul.f32 %v3600, %v1577
        %v3633 = vmul.f32 %v3601, %v1584
        %v3634 = vmul.f32 %v3602, %v1588
        %v3635 = vadd.f32 %v3475, %v3603
        %v3636 = vadd.f32 %v3476, %v3604
        %v3637 = vadd.f32 %v3477, %v3605
        %v3638 = vadd.f32 %v3478, %v3606
        %v3639 = vadd.f32 %v3479, %v3607
        %v3640 = vadd.f32 %v3480, %v3608
        %v3641 = vadd.f32 %v3481, %v3609
        %v3642 = vadd.f32 %v3482, %v3610
        %v3643 = vadd.f32 %v3483, %v3611
        %v3644 = vadd.f32 %v3484, %v3612
        %v3645 = vadd.f32 %v3485, %v3613
        %v3646 = vadd.f32 %v3486, %v3614
        %v3647 = vadd.f32 %v3487, %v3615
        %v3648 = vadd.f32 %v3488, %v3616
        %v3649 = vadd.f32 %v3489, %v3617
        %v3650 = vadd.f32 %v3490, %v3618
        %v3651 = vadd.f32 %v3491, %v3619
        %v3652 = vadd.f32 %v3492, %v3620
        %v3653 = vadd.f32 %v3493, %v3621
        %v3654 = vadd.f32 %v3494, %v3622
        %v3655 = vadd.f32 %v3495, %v3623
        %v3656 = vadd.f32 %v3496, %v3624
        %v3657 = vadd.f32 %v3497, %v3625
        %v3658 = vadd.f32 %v3498, %v3626
        %v3659 = vadd.f32 %v3499, %v3627
        %v3660 = vadd.f32 %v3500, %v3628
        %v3661 = vadd.f32 %v3501, %v3629
        %v3662 = vadd.f32 %v3502, %v3630
        %v3663 = vadd.f32 %v3503, %v3631
        %v3664 = vadd.f32 %v3504, %v3632
        %v3665 = vadd.f32 %v3505, %v3633
        %v3666 = vadd.f32 %v3506, %v3634
        %v3667 = vmul.f32 %v3015, %v3635
        %v3668 = vmul.f32 %v3016, %v3636
        %v3669 = vmul.f32 %v3015, %v3637
        %v3670 = vmul.f32 %v3016, %v3638
        %v3671 = vmul.f32 %v3015, %v3639
        %v3672 = vmul.f32 %v3016, %v3640
        %v3673 = vmul.f32 %v3015, %v3641
        %v3674 = vmul.f32 %v3016, %v3642
        %v3675 = vmul.f32 %v3015, %v3643
        %v3676 = vmul.f32 %v3016, %v3644
        %v3677 = vmul.f32 %v3015, %v3645
        %v3678 = vmul.f32 %v3016, %v3646
        %v3679 = vmul.f32 %v3015, %v3647
        %v3680 = vmul.f32 %v3016, %v3648
        %v3681 = vmul.f32 %v3015, %v3649
        %v3682 = vmul.f32 %v3016, %v3650
        %v3683 = vmul.f32 %v3015, %v3651
        %v3684 = vmul.f32 %v3016, %v3652
        %v3685 = vmul.f32 %v3015, %v3653
        %v3686 = vmul.f32 %v3016, %v3654
        %v3687 = vmul.f32 %v3015, %v3655
        %v3688 = vmul.f32 %v3016, %v3656
        %v3689 = vmul.f32 %v3015, %v3657
        %v3690 = vmul.f32 %v3016, %v3658
        %v3691 = vmul.f32 %v3015, %v3659
        %v3692 = vmul.f32 %v3016, %v3660
        %v3693 = vmul.f32 %v3015, %v3661
        %v3694 = vmul.f32 %v3016, %v3662
        %v3695 = vmul.f32 %v3015, %v3663
        %v3696 = vmul.f32 %v3016, %v3664
        %v3697 = vmul.f32 %v3015, %v3665
        %v3698 = vmul.f32 %v3016, %v3666
        %3731 = vset.pattern.permute.xlu0 0
        %3732 = vperm.xlu0 %3731, %v3667
        %v3733 = vpop.permute.xlu0 %3732
        %3734 = vset.pattern.permute.xlu0 0
        %3735 = vperm.xlu0 %3734, %v3668
        %v3736 = vpop.permute.xlu0 %3735
        %3737 = vset.pattern.permute.xlu0 0
        %3738 = vperm.xlu0 %3737, %v3669
        %v3739 = vpop.permute.xlu0 %3738
        %3740 = vset.pattern.permute.xlu0 0
        %3741 = vperm.xlu0 %3740, %v3670
        %v3742 = vpop.permute.xlu0 %3741
        %3743 = vset.pattern.permute.xlu0 0
        %3744 = vperm.xlu0 %3743, %v3671
        %v3745 = vpop.permute.xlu0 %3744
        %3746 = vset.pattern.permute.xlu0 0
        %3747 = vperm.xlu0 %3746, %v3672
        %v3748 = vpop.permute.xlu0 %3747
        %3749 = vset.pattern.permute.xlu0 0
        %3750 = vperm.xlu0 %3749, %v3673
        %v3751 = vpop.permute.xlu0 %3750
        %3752 = vset.pattern.permute.xlu0 0
        %3753 = vperm.xlu0 %3752, %v3674
        %v3754 = vpop.permute.xlu0 %3753
        %3755 = vset.pattern.permute.xlu0 0
        %3756 = vperm.xlu0 %3755, %v3675
        %v3757 = vpop.permute.xlu0 %3756
        %3758 = vset.pattern.permute.xlu0 0
        %3759 = vperm.xlu0 %3758, %v3676
        %v3760 = vpop.permute.xlu0 %3759
        %3761 = vset.pattern.permute.xlu0 0
        %3762 = vperm.xlu0 %3761, %v3677
        %v3763 = vpop.permute.xlu0 %3762
        %3764 = vset.pattern.permute.xlu0 0
        %3765 = vperm.xlu0 %3764, %v3678
        %v3766 = vpop.permute.xlu0 %3765
        %3767 = vset.pattern.permute.xlu0 0
        %3768 = vperm.xlu0 %3767, %v3679
        %v3769 = vpop.permute.xlu0 %3768
        %3770 = vset.pattern.permute.xlu0 0
        %3771 = vperm.xlu0 %3770, %v3680
        %v3772 = vpop.permute.xlu0 %3771
        %3773 = vset.pattern.permute.xlu0 0
        %3774 = vperm.xlu0 %3773, %v3681
        %v3775 = vpop.permute.xlu0 %3774
        %3776 = vset.pattern.permute.xlu0 0
        %3777 = vperm.xlu0 %3776, %v3682
        %v3778 = vpop.permute.xlu0 %3777
        %3779 = vset.pattern.permute.xlu0 0
        %3780 = vperm.xlu0 %3779, %v3683
        %v3781 = vpop.permute.xlu0 %3780
        %3782 = vset.pattern.permute.xlu0 0
        %3783 = vperm.xlu0 %3782, %v3684
        %v3784 = vpop.permute.xlu0 %3783
        %3785 = vset.pattern.permute.xlu0 0
        %3786 = vperm.xlu0 %3785, %v3685
        %v3787 = vpop.permute.xlu0 %3786
        %3788 = vset.pattern.permute.xlu0 0
        %3789 = vperm.xlu0 %3788, %v3686
        %v3790 = vpop.permute.xlu0 %3789
        %3791 = vset.pattern.permute.xlu0 0
        %3792 = vperm.xlu0 %3791, %v3687
        %v3793 = vpop.permute.xlu0 %3792
        %3794 = vset.pattern.permute.xlu0 0
        %3795 = vperm.xlu0 %3794, %v3688
        %v3796 = vpop.permute.xlu0 %3795
        %3797 = vset.pattern.permute.xlu0 0
        %3798 = vperm.xlu0 %3797, %v3689
        %v3799 = vpop.permute.xlu0 %3798
        %3800 = vset.pattern.permute.xlu0 0
        %3801 = vperm.xlu0 %3800, %v3690
        %v3802 = vpop.permute.xlu0 %3801
        %3803 = vset.pattern.permute.xlu0 0
        %3804 = vperm.xlu0 %3803, %v3691
        %v3805 = vpop.permute.xlu0 %3804
        %3806 = vset.pattern.permute.xlu0 0
        %3807 = vperm.xlu0 %3806, %v3692
        %v3808 = vpop.permute.xlu0 %3807
        %3809 = vset.pattern.permute.xlu0 0
        %3810 = vperm.xlu0 %3809, %v3693
        %v3811 = vpop.permute.xlu0 %3810
        %3812 = vset.pattern.permute.xlu0 0
        %3813 = vperm.xlu0 %3812, %v3694
        %v3814 = vpop.permute.xlu0 %3813
        %3815 = vset.pattern.permute.xlu0 0
        %3816 = vperm.xlu0 %3815, %v3695
        %v3817 = vpop.permute.xlu0 %3816
        %3818 = vset.pattern.permute.xlu0 0
        %3819 = vperm.xlu0 %3818, %v3696
        %v3820 = vpop.permute.xlu0 %3819
        %3821 = vset.pattern.permute.xlu0 0
        %3822 = vperm.xlu0 %3821, %v3697
        %v3823 = vpop.permute.xlu0 %3822
        %3824 = vset.pattern.permute.xlu0 0
        %3825 = vperm.xlu0 %3824, %v3698
        %v3826 = vpop.permute.xlu0 %3825
        %v3827 = vlaneseq
        %v3828 = vshrl.u32 %v3827, 7
        %v3829 = vsub.s32 %v870, %v3828
        %v3830 = vrot.slane %v3733, %v3829
        %v3831 = vlaneseq
        %v3832 = vshrl.u32 %v3831, 7
        %v3833 = vsub.s32 %v893, %v3832
        %v3834 = vrot.slane %v3736, %v3833
        %v3835 = vsel %vm898, %v3834, %v3830
        %v3836 = vlaneseq
        %v3837 = vshrl.u32 %v3836, 7
        %v3838 = vsub.s32 %v870, %v3837
        %v3839 = vrot.slane %v3739, %v3838
        %v3840 = vlaneseq
        %v3841 = vshrl.u32 %v3840, 7
        %v3842 = vsub.s32 %v893, %v3841
        %v3843 = vrot.slane %v3742, %v3842
        %v3844 = vsel %vm898, %v3843, %v3839
        %v3845 = vlaneseq
        %v3846 = vshrl.u32 %v3845, 7
        %v3847 = vsub.s32 %v870, %v3846
        %v3848 = vrot.slane %v3745, %v3847
        %v3849 = vlaneseq
        %v3850 = vshrl.u32 %v3849, 7
        %v3851 = vsub.s32 %v893, %v3850
        %v3852 = vrot.slane %v3748, %v3851
        %v3853 = vsel %vm898, %v3852, %v3848
        %v3854 = vlaneseq
        %v3855 = vshrl.u32 %v3854, 7
        %v3856 = vsub.s32 %v870, %v3855
        %v3857 = vrot.slane %v3751, %v3856
        %v3858 = vlaneseq
        %v3859 = vshrl.u32 %v3858, 7
        %v3860 = vsub.s32 %v893, %v3859
        %v3861 = vrot.slane %v3754, %v3860
        %v3862 = vsel %vm898, %v3861, %v3857
        %v3863 = vlaneseq
        %v3864 = vshrl.u32 %v3863, 7
        %v3865 = vsub.s32 %v870, %v3864
        %v3866 = vrot.slane %v3757, %v3865
        %v3867 = vlaneseq
        %v3868 = vshrl.u32 %v3867, 7
        %v3869 = vsub.s32 %v893, %v3868
        %v3870 = vrot.slane %v3760, %v3869
        %v3871 = vsel %vm898, %v3870, %v3866
        %v3872 = vlaneseq
        %v3873 = vshrl.u32 %v3872, 7
        %v3874 = vsub.s32 %v870, %v3873
        %v3875 = vrot.slane %v3763, %v3874
        %v3876 = vlaneseq
        %v3877 = vshrl.u32 %v3876, 7
        %v3878 = vsub.s32 %v893, %v3877
        %v3879 = vrot.slane %v3766, %v3878
        %v3880 = vsel %vm898, %v3879, %v3875
        %v3881 = vlaneseq
        %v3882 = vshrl.u32 %v3881, 7
        %v3883 = vsub.s32 %v870, %v3882
        %v3884 = vrot.slane %v3769, %v3883
        %v3885 = vlaneseq
        %v3886 = vshrl.u32 %v3885, 7
        %v3887 = vsub.s32 %v893, %v3886
        %v3888 = vrot.slane %v3772, %v3887
        %v3889 = vsel %vm898, %v3888, %v3884
        %v3890 = vlaneseq
        %v3891 = vshrl.u32 %v3890, 7
        %v3892 = vsub.s32 %v870, %v3891
        %v3893 = vrot.slane %v3775, %v3892
        %v3894 = vlaneseq
        %v3895 = vshrl.u32 %v3894, 7
        %v3896 = vsub.s32 %v893, %v3895
        %v3897 = vrot.slane %v3778, %v3896
        %v3898 = vsel %vm898, %v3897, %v3893
        %v3899 = vlaneseq
        %v3900 = vshrl.u32 %v3899, 7
        %v3901 = vsub.s32 %v870, %v3900
        %v3902 = vrot.slane %v3781, %v3901
        %v3903 = vlaneseq
        %v3904 = vshrl.u32 %v3903, 7
        %v3905 = vsub.s32 %v893, %v3904
        %v3906 = vrot.slane %v3784, %v3905
        %v3907 = vsel %vm898, %v3906, %v3902
        %v3908 = vlaneseq
        %v3909 = vshrl.u32 %v3908, 7
        %v3910 = vsub.s32 %v870, %v3909
        %v3911 = vrot.slane %v3787, %v3910
        %v3912 = vlaneseq
        %v3913 = vshrl.u32 %v3912, 7
        %v3914 = vsub.s32 %v893, %v3913
        %v3915 = vrot.slane %v3790, %v3914
        %v3916 = vsel %vm898, %v3915, %v3911
        %v3917 = vlaneseq
        %v3918 = vshrl.u32 %v3917, 7
        %v3919 = vsub.s32 %v870, %v3918
        %v3920 = vrot.slane %v3793, %v3919
        %v3921 = vlaneseq
        %v3922 = vshrl.u32 %v3921, 7
        %v3923 = vsub.s32 %v893, %v3922
        %v3924 = vrot.slane %v3796, %v3923
        %v3925 = vsel %vm898, %v3924, %v3920
        %v3926 = vlaneseq
        %v3927 = vshrl.u32 %v3926, 7
        %v3928 = vsub.s32 %v870, %v3927
        %v3929 = vrot.slane %v3799, %v3928
        %v3930 = vlaneseq
        %v3931 = vshrl.u32 %v3930, 7
        %v3932 = vsub.s32 %v893, %v3931
        %v3933 = vrot.slane %v3802, %v3932
        %v3934 = vsel %vm898, %v3933, %v3929
        %v3935 = vlaneseq
        %v3936 = vshrl.u32 %v3935, 7
        %v3937 = vsub.s32 %v870, %v3936
        %v3938 = vrot.slane %v3805, %v3937
        %v3939 = vlaneseq
        %v3940 = vshrl.u32 %v3939, 7
        %v3941 = vsub.s32 %v893, %v3940
        %v3942 = vrot.slane %v3808, %v3941
        %v3943 = vsel %vm898, %v3942, %v3938
        %v3944 = vlaneseq
        %v3945 = vshrl.u32 %v3944, 7
        %v3946 = vsub.s32 %v870, %v3945
        %v3947 = vrot.slane %v3811, %v3946
        %v3948 = vlaneseq
        %v3949 = vshrl.u32 %v3948, 7
        %v3950 = vsub.s32 %v893, %v3949
        %v3951 = vrot.slane %v3814, %v3950
        %v3952 = vsel %vm898, %v3951, %v3947
        %v3953 = vlaneseq
        %v3954 = vshrl.u32 %v3953, 7
        %v3955 = vsub.s32 %v870, %v3954
        %v3956 = vrot.slane %v3817, %v3955
        %v3957 = vlaneseq
        %v3958 = vshrl.u32 %v3957, 7
        %v3959 = vsub.s32 %v893, %v3958
        %v3960 = vrot.slane %v3820, %v3959
        %v3961 = vsel %vm898, %v3960, %v3956
        %v3962 = vlaneseq
        %v3963 = vshrl.u32 %v3962, 7
        %v3964 = vsub.s32 %v870, %v3963
        %v3965 = vrot.slane %v3823, %v3964
        %v3966 = vlaneseq
        %v3967 = vshrl.u32 %v3966, 7
        %v3968 = vsub.s32 %v893, %v3967
        %v3969 = vrot.slane %v3826, %v3968
        %v3970 = vsel %vm898, %v3969, %v3965
        %v3971 = vsel %vm900, %v3844, %v3835
        %v3972 = vsel %vm901, %v3853, %v3971
        %v3973 = vsel %vm903, %v3862, %v3972
        %v3974 = vsel %vm905, %v3871, %v3973
        %v3975 = vsel %vm907, %v3880, %v3974
        %v3976 = vsel %vm909, %v3889, %v3975
        %v3977 = vsel %vm911, %v3898, %v3976
        %v3978 = vsel %vm900, %v3916, %v3907
        %v3979 = vsel %vm901, %v3925, %v3978
        %v3980 = vsel %vm903, %v3934, %v3979
        %v3981 = vsel %vm905, %v3943, %v3980
        %v3982 = vsel %vm907, %v3952, %v3981
        %v3983 = vsel %vm909, %v3961, %v3982
        %v3984 = vsel %vm911, %v3970, %v3983
        %v3987 = vsel %vm916, %v3977, 0.0
        %3988 = vadd.xlane.f32.xlu0 %v3987
        %v3989 = vpop.xlane.xlu0 %3988
        %v3990 = vsel %vm916, %v3984, 0.0
        %3991 = vadd.xlane.f32.xlu0 %v3990
        %v3992 = vpop.xlane.xlu0 %3991
        %v3993 = vmul.f32 %v3041, 0.8
        %v3994 = vceil.f32 %v3993
        %vm3995 = vcmp.lt.f32.partialorder %v3989, %v3994
        %vm3996 = vcmp.lt.f32.partialorder %v3992, %v3994
        %v3997 = vsel %vm3995, 1, 0
        %v3998 = vsel %vm3996, 1, 0
        %v3999 = vcvt.s32.f32 %v3997
        %v4000 = vcvt.s32.f32 %v3998
        %v4001 = vmul.f32 %v3015, %v3999
        %v4002 = vmul.f32 %v3016, %v4000
        %v4003 = vtanh.pop %v3326
        %v4004 = vtanh.pop %v3328
        %v4005 = vmul.f32 %v3315, %v4003
        %v4006 = vmul.f32 %v3316, %v4004
        %4008 = vset.pattern.permute.xlu0 0
        %4009 = vperm.xlu0 %4008, %v4001
        %v4010 = vpop.permute.xlu0 %4009
        %4013 = vset.pattern.permute.xlu0 0
        %4014 = vperm.xlu0 %4013, %v4002
        %v4015 = vpop.permute.xlu0 %4014
        %v4017 = vmul.f32 %v4005, %v4010
        %v4018 = vmul.f32 %v4006, %v4015
        %v4019 = vsel %vm2011, %v4001, 0.0
        %v4020 = vsel %vm2011, %v4002, 0.0
        %v4021 = vadd.f32 %v4019, %v4020
        %v4022 = vrot.slane %v4021, 4
        %v4023 = vadd.f32 %v4021, %v4022
        %v4024 = vrot.slane %v4023, 2
        %v4025 = vadd.f32 %v4023, %v4024
        %v4026 = vrot.slane %v4025, 1
        %v4027 = vadd.f32 %v4025, %v4026
        %v4028 = vadd.f32 %v4017, %v4018
        %v4029 = vrot.slane %v4028, 4
        %v4030 = vadd.f32 %v4028, %v4029
        %v4031 = vrot.slane %v4030, 2
        %v4032 = vadd.f32 %v4030, %v4031
        %v4033 = vrot.slane %v4032, 1
        %v4034 = vadd.f32 %v4032, %v4033
        %v4035 = vmax.f32 %v4027, 1.0
        %4037 = vset.pattern.permute.xlu0 0
        %4038 = vperm.xlu0 %4037, %v4035
        %v4039 = vpop.permute.xlu0 %4038
        %v4041 = vrcp.pop %v4039
        %v4042 = vmul.f32 %v4034, %v4041
        %vm4043 = vcmp.gt.f32.partialorder %v4001, 0.5
        %vm4044 = vcmp.gt.f32.partialorder %v4002, 0.5
        %v4045 = vsel %vm4043, 1, 0
        %v4046 = vsel %vm4044, 1, 0
        %4047 = vset.pattern.permute.xlu0 0
        %4048 = vperm.xlu0 %4047, %v4045
        %v4049 = vpop.permute.xlu0 %4048
        %4050 = vset.pattern.permute.xlu0 0
        %4051 = vperm.xlu0 %4050, %v4046
        %v4052 = vpop.permute.xlu0 %4051
        %vm4053 = vcmp.eq.s32.totalorder %v4049, 1
        %vm4054 = vcmp.eq.s32.totalorder %v4052, 1
        %v4055 = vsel %vm4053, %v4017, -1e+30
        %v4056 = vsel %vm4054, %v4018, -1e+30
        %v4057 = vmax.f32 %v4055, %v4056
        %v4058 = vrot.slane %v4057, 4
        %v4059 = vmax.f32 %v4057, %v4058
        %v4060 = vrot.slane %v4059, 2
        %v4061 = vmax.f32 %v4059, %v4060
        %v4062 = vrot.slane %v4061, 1
        %v4063 = vmax.f32 %v4061, %v4062
        %vm4064 = vcmp.gt.f32.partialorder %v4027, 0.0
        %v4065 = vsel %vm4064, 1, 0
        %4066 = vset.pattern.permute.xlu0 0
        %4067 = vperm.xlu0 %4066, %v4065
        %v4068 = vpop.permute.xlu0 %4067
        %vm4069 = vcmp.eq.s32.totalorder %v4068, 1
        %v4070 = vsel %vm4069, %v4063, 0.0
        %v4071 = vadd.f32 %v3085, %v4070
        %v4072 = vadd.f32 %v3086, %v4042
        %v4073 = vld [vmem:[#allocation14] sm:$0xff]
        %v4074 = vld [vmem:[#allocation14 + $0x8] sm:$0xff]
        %v4075 = vld [vmem:[#allocation14 + $0x10] sm:$0xff]
        %v4076 = vld [vmem:[#allocation14 + $0x18] sm:$0xff]
        %v4077 = vld [vmem:[#allocation14 + $0x20] sm:$0xff]
        %v4078 = vld [vmem:[#allocation14 + $0x28] sm:$0xff]
        %v4079 = vld [vmem:[#allocation14 + $0x30] sm:$0xff]
        %v4080 = vld [vmem:[#allocation14 + $0x38] sm:$0xff]
        %v4081 = vld [vmem:[#allocation14 + $0x40] sm:$0xff]
        %v4082 = vld [vmem:[#allocation14 + $0x48] sm:$0xff]
        %v4083 = vld [vmem:[#allocation14 + $0x50] sm:$0xff]
        %v4084 = vld [vmem:[#allocation14 + $0x58] sm:$0xff]
        %v4085 = vld [vmem:[#allocation14 + $0x60] sm:$0xff]
        %v4086 = vld [vmem:[#allocation14 + $0x68] sm:$0xff]
        %v4087 = vld [vmem:[#allocation14 + $0x70] sm:$0xff]
        %v4088 = vld [vmem:[#allocation14 + $0x78] sm:$0xff]
        %v4089 = vld [vmem:[#allocation16] sm:$0x1]
        %v4090 = vld [vmem:[%s14] sm:$0x1]
        %v4091 = vlaneseq
        %v4092 = vshrl.u32 %v4091, 7
        %v4093 = vsub.s32 %v870, %v4092
        %v4094 = vrot.slane %v4010, %v4093
        %v4095 = vlaneseq
        %v4096 = vshrl.u32 %v4095, 7
        %v4097 = vsub.s32 %v893, %v4096
        %v4098 = vrot.slane %v4015, %v4097
        %v4099 = vsel %vm898, %v4098, %v4094
        %v4100 = vsel %vm901, %v4099, %v4099
        %v4101 = vsel %vm903, %v4099, %v4100
        %v4102 = vsel %vm905, %v4099, %v4101
        %v4103 = vsel %vm907, %v4099, %v4102
        %v4104 = vsel %vm909, %v4099, %v4103
        %v4105 = vsel %vm911, %v4099, %v4104
        %v4107 = vmul.f32 %v862, %v4105
        %v4108 = vmul.f32 %v863, %v4105
        %v4109 = vsel %vm916, %v4107, 0.0
        %4110 = vadd.xlane.f32.xlu0 %v4109
        %v4111 = vpop.xlane.xlu0 %4110
        %v4112 = vsel %vm916, %v4108, 0.0
        %4113 = vadd.xlane.f32.xlu0 %v4112
        %v4114 = vpop.xlane.xlu0 %4113
        %v4115 = vadd.f32 %v4111, %v4001
        %v4116 = vadd.f32 %v4114, %v4002
        %vm4117 = vcmp.gt.f32.partialorder %v4115, 0.0
        %vm4118 = vcmp.gt.f32.partialorder %v4116, 0.0
        %v4119 = vrsqrt.pop %v4115
        %v4120 = vrsqrt.pop %v4116
        %v4121 = vsel %vm4117, %v4119, 0.0
        %v4122 = vsel %vm4118, %v4120, 0.0
        %4123 = vmatprep.subr.mxu0 0.0
        %4124 = vmatpush1.msra.mxu0 %v4088
        %4125 = vmatprep.subr.mxu0 0.0
        %4126 = vmatpush1.msra.mxu0 %v4087
        %4127 = vmatprep.subr.mxu0 0.0
        %4128 = vmatpush1.msra.mxu0 %v4086
        %4129 = vmatprep.subr.mxu0 0.0
        %4130 = vmatpush1.msra.mxu0 %v4085
        %4131 = vmatprep.subr.mxu0 0.0
        %4132 = vmatpush1.msra.mxu0 %v4084
        %4133 = vmatprep.subr.mxu0 0.0
        %4134 = vmatpush1.msra.mxu0 %v4083
        %4135 = vmatprep.subr.mxu0 0.0
        %4136 = vmatpush1.msra.mxu0 %v4082
        %4137 = vmatprep.subr.mxu0 0.0
        %4138 = vmatpush1.msra.mxu0 %v4081
        %4139 = vmatprep.subr.mxu0 0.0
        %4140 = vmatpush1.msra.mxu0 %v4080
        %4141 = vmatprep.subr.mxu0 0.0
        %4142 = vmatpush1.msra.mxu0 %v4079
        %4143 = vmatprep.subr.mxu0 0.0
        %4144 = vmatpush1.msra.mxu0 %v4078
        %4145 = vmatprep.subr.mxu0 0.0
        %4146 = vmatpush1.msra.mxu0 %v4077
        %4147 = vmatprep.subr.mxu0 0.0
        %4148 = vmatpush1.msra.mxu0 %v4076
        %4149 = vmatprep.subr.mxu0 0.0
        %4150 = vmatpush1.msra.mxu0 %v4075
        %4151 = vmatprep.subr.mxu0 0.0
        %4152 = vmatpush1.msra.mxu0 %v4074
        %4153 = vmatprep.subr.mxu0 0.0
        %4154 = vmatpush1.msra.mxu0 %v4073
        %4155 = vmatprep.subr.mxu0 0.0
        %4156 = vmatpush2.msra.mxu0 0.0
        %4157 = vmatprep.subr.mxu0 0.0
        %4158 = vmatpush2.msra.mxu0 0.0
        %4159 = vmatprep.subr.mxu0 0.0
        %4160 = vmatpush2.msra.mxu0 0.0
        %4161 = vmatprep.subr.mxu0 0.0
        %4162 = vmatpush2.msra.mxu0 0.0
        %4163 = vmatprep.subr.mxu0 0.0
        %4164 = vmatpush2.msra.mxu0 0.0
        %4165 = vmatprep.subr.mxu0 0.0
        %4166 = vmatpush2.msra.mxu0 0.0
        %4167 = vmatprep.subr.mxu0 0.0
        %4168 = vmatpush2.msra.mxu0 0.0
        %4169 = vmatprep.subr.mxu0 0.0
        %4170 = vmatpush2.msra.mxu0 0.0
        %4171 = vmatprep.subr.mxu0 0.0
        %4172 = vmatpush2.msra.mxu0 0.0
        %4173 = vmatprep.subr.mxu0 0.0
        %4174 = vmatpush2.msra.mxu0 0.0
        %4175 = vmatprep.subr.mxu0 0.0
        %4176 = vmatpush2.msra.mxu0 0.0
        %4177 = vmatprep.subr.mxu0 0.0
        %4178 = vmatpush2.msra.mxu0 0.0
        %4179 = vmatprep.subr.mxu0 0.0
        %4180 = vmatpush2.msra.mxu0 0.0
        %4181 = vmatprep.subr.mxu0 0.0
        %4182 = vmatpush2.msra.mxu0 0.0
        %4183 = vmatprep.subr.mxu0 0.0
        %4184 = vmatpush2.msra.mxu0 0.0
        %4185 = vmatprep.subr.mxu0 0.0
        %4186 = vmatpush2.msra.mxu0 0.0
        %4187 = vmatprep.mubr.f32.mxu0 0.0
        %4188 = vmatmul.mubr.f32.gmra.mxu0 %v4017
        %v4189 = vpop.f32.mrf.mxu0
        %v4190 = vadd.f32 0.0, %v4189
        %v4191 = vpop.f32.mrf.mxu0
        %4192 = vmatprep.mubr.f32.mxu0 0.0
        %4193 = vmatmul.mubr.f32.gmra.mxu0 %v4018
        %v4194 = vpop.f32.mrf.mxu0
        %v4195 = vadd.f32 0.0, %v4194
        %v4196 = vpop.f32.mrf.mxu0
        %4197 = vdwg.mxu0
        %4199 = vset.pattern.permute.xlu0 0
        %4200 = vperm.xlu0 %4199, %v4121
        %v4201 = vpop.permute.xlu0 %4200
        %4204 = vset.pattern.permute.xlu0 0
        %4205 = vperm.xlu0 %4204, %v4122
        %v4206 = vpop.permute.xlu0 %4205
        %v4208 = vmul.f32 %v4201, %v4190
        %v4209 = vmul.f32 %v4206, %v4195
        %4210 = vmatprep.subr.mxu0 0.0
        %4211 = vmatpush1.msra.mxu0 0.0
        %4212 = vmatprep.subr.mxu0 0.0
        %4213 = vmatpush1.msra.mxu0 0.0
        %4214 = vmatprep.subr.mxu0 0.0
        %4215 = vmatpush1.msra.mxu0 0.0
        %4216 = vmatprep.subr.mxu0 0.0
        %4217 = vmatpush1.msra.mxu0 0.0
        %4218 = vmatprep.subr.mxu0 0.0
        %4219 = vmatpush1.msra.mxu0 0.0
        %4220 = vmatprep.subr.mxu0 0.0
        %4221 = vmatpush1.msra.mxu0 0.0
        %4222 = vmatprep.subr.mxu0 0.0
        %4223 = vmatpush1.msra.mxu0 0.0
        %4224 = vmatprep.subr.mxu0 0.0
        %4225 = vmatpush1.msra.mxu0 0.0
        %4226 = vmatprep.subr.mxu0 0.0
        %4227 = vmatpush1.msra.mxu0 0.0
        %4228 = vmatprep.subr.mxu0 0.0
        %4229 = vmatpush1.msra.mxu0 0.0
        %4230 = vmatprep.subr.mxu0 0.0
        %4231 = vmatpush1.msra.mxu0 0.0
        %4232 = vmatprep.subr.mxu0 0.0
        %4233 = vmatpush1.msra.mxu0 0.0
        %4234 = vmatprep.subr.mxu0 0.0
        %4235 = vmatpush1.msra.mxu0 0.0
        %4236 = vmatprep.subr.mxu0 0.0
        %4237 = vmatpush1.msra.mxu0 0.0
        %4238 = vmatprep.subr.mxu0 0.0
        %4239 = vmatpush1.msra.mxu0 %v4209
        %4240 = vmatprep.subr.mxu0 0.0
        %4241 = vmatpush1.msra.mxu0 %v4208
        %4242 = vmatprep.subr.mxu0 0.0
        %4243 = vmatpush2.msra.mxu0 0.0
        %4244 = vmatprep.subr.mxu0 0.0
        %4245 = vmatpush2.msra.mxu0 0.0
        %4246 = vmatprep.subr.mxu0 0.0
        %4247 = vmatpush2.msra.mxu0 0.0
        %4248 = vmatprep.subr.mxu0 0.0
        %4249 = vmatpush2.msra.mxu0 0.0
        %4250 = vmatprep.subr.mxu0 0.0
        %4251 = vmatpush2.msra.mxu0 0.0
        %4252 = vmatprep.subr.mxu0 0.0
        %4253 = vmatpush2.msra.mxu0 0.0
        %4254 = vmatprep.subr.mxu0 0.0
        %4255 = vmatpush2.msra.mxu0 0.0
        %4256 = vmatprep.subr.mxu0 0.0
        %4257 = vmatpush2.msra.mxu0 0.0
        %4258 = vmatprep.subr.mxu0 0.0
        %4259 = vmatpush2.msra.mxu0 0.0
        %4260 = vmatprep.subr.mxu0 0.0
        %4261 = vmatpush2.msra.mxu0 0.0
        %4262 = vmatprep.subr.mxu0 0.0
        %4263 = vmatpush2.msra.mxu0 0.0
        %4264 = vmatprep.subr.mxu0 0.0
        %4265 = vmatpush2.msra.mxu0 0.0
        %4266 = vmatprep.subr.mxu0 0.0
        %4267 = vmatpush2.msra.mxu0 0.0
        %4268 = vmatprep.subr.mxu0 0.0
        %4269 = vmatpush2.msra.mxu0 0.0
        %4270 = vmatprep.subr.mxu0 0.0
        %4271 = vmatpush2.msra.mxu0 0.0
        %4272 = vmatprep.subr.mxu0 0.0
        %4273 = vmatpush2.msra.mxu0 0.0
        %4274 = vmatprep.mubr.f32.mxu0 0.0
        %4275 = vmatmul.mubr.f32.gmra.mxu0 %v1025
        %v4276 = vpop.f32.mrf.mxu0
        %v4277 = vadd.f32 0.0, %v4276
        %v4278 = vpop.f32.mrf.mxu0
        %4279 = vmatprep.mubr.f32.mxu0 0.0
        %4280 = vmatmul.mubr.f32.gmra.mxu0 %v1028
        %v4281 = vpop.f32.mrf.mxu0
        %v4282 = vadd.f32 0.0, %v4281
        %v4283 = vpop.f32.mrf.mxu0
        %4284 = vdwg.mxu0
        %v4285 = vmul.f32 %v4010, %v4208
        %v4286 = vmul.f32 %v4015, %v4209
        %v4287 = vadd.f32 %v4277, %v4285
        %v4288 = vadd.f32 %v4282, %v4286
        %v4289 = vmul.f32 %v4201, %v4287
        %v4290 = vmul.f32 %v4206, %v4288
        %v4292 = vlaneseq
        %v4293 = vshrl.u32 %v4292, 7
        %v4294 = vsub.s32 0, %v4293
        %v4295 = vrot.slane %v4089, %v4294
        %v4297 = vadd.f32 %v4289, %v4295
        %v4298 = vadd.f32 %v4290, %v4295
        %v4299 = vmax.f32 %v4297, 0.0
        %v4300 = vmax.f32 %v4298, 0.0
        %v4301 = vmul.f32 %v4299, %v4010
        %v4302 = vmul.f32 %v4300, %v4015
        %v4304 = vlaneseq
        %v4305 = vshrl.u32 %v4304, 7
        %v4306 = vsub.s32 0, %v4305
        %v4307 = vrot.slane %v4090, %v4306
        %v4309 = vmul.f32 %v4301, %v4307
        %v4310 = vmul.f32 %v4302, %v4307
        %4311 = vadd.xlane.f32.xlu0 %v4309
        %v4312 = vpop.xlane.xlu0 %4311
        %4313 = vadd.xlane.f32.xlu0 %v4310
        %v4314 = vpop.xlane.xlu0 %4313
        %v4317 = vlaneseq
        %v4318 = vshrl.u32 %v4317, 7
        %v4319 = vsub.s32 0, %v4318
        %v4320 = vrot.slane %v4312, %v4319
        %v4321 = vlaneseq
        %v4322 = vshrl.u32 %v4321, 7
        %v4323 = vsub.s32 1, %v4322
        %v4324 = vrot.slane %v4312, %v4323
        %v4325 = vlaneseq
        %v4326 = vshrl.u32 %v4325, 7
        %v4327 = vsub.s32 2, %v4326
        %v4328 = vrot.slane %v4312, %v4327
        %v4329 = vlaneseq
        %v4330 = vshrl.u32 %v4329, 7
        %v4331 = vsub.s32 3, %v4330
        %v4332 = vrot.slane %v4312, %v4331
        %v4333 = vlaneseq
        %v4334 = vshrl.u32 %v4333, 7
        %v4335 = vsub.s32 4, %v4334
        %v4336 = vrot.slane %v4312, %v4335
        %v4337 = vlaneseq
        %v4338 = vshrl.u32 %v4337, 7
        %v4339 = vsub.s32 5, %v4338
        %v4340 = vrot.slane %v4312, %v4339
        %v4341 = vlaneseq
        %v4342 = vshrl.u32 %v4341, 7
        %v4343 = vsub.s32 6, %v4342
        %v4344 = vrot.slane %v4312, %v4343
        %v4345 = vlaneseq
        %v4346 = vshrl.u32 %v4345, 7
        %v4347 = vsub.s32 7, %v4346
        %v4348 = vrot.slane %v4312, %v4347
        %v4349 = vlaneseq
        %v4350 = vshrl.u32 %v4349, 7
        %v4351 = vsub.s32 0, %v4350
        %v4352 = vrot.slane %v4314, %v4351
        %v4353 = vlaneseq
        %v4354 = vshrl.u32 %v4353, 7
        %v4355 = vsub.s32 1, %v4354
        %v4356 = vrot.slane %v4314, %v4355
        %v4357 = vlaneseq
        %v4358 = vshrl.u32 %v4357, 7
        %v4359 = vsub.s32 2, %v4358
        %v4360 = vrot.slane %v4314, %v4359
        %v4361 = vlaneseq
        %v4362 = vshrl.u32 %v4361, 7
        %v4363 = vsub.s32 3, %v4362
        %v4364 = vrot.slane %v4314, %v4363
        %v4365 = vlaneseq
        %v4366 = vshrl.u32 %v4365, 7
        %v4367 = vsub.s32 4, %v4366
        %v4368 = vrot.slane %v4314, %v4367
        %v4369 = vlaneseq
        %v4370 = vshrl.u32 %v4369, 7
        %v4371 = vsub.s32 5, %v4370
        %v4372 = vrot.slane %v4314, %v4371
        %v4373 = vlaneseq
        %v4374 = vshrl.u32 %v4373, 7
        %v4375 = vsub.s32 6, %v4374
        %v4376 = vrot.slane %v4314, %v4375
        %v4377 = vlaneseq
        %v4378 = vshrl.u32 %v4377, 7
        %v4379 = vsub.s32 7, %v4378
        %v4380 = vrot.slane %v4314, %v4379
        %vm4397 = vcmp.gt.f32.partialorder %v4312, %v4320
        %vm4398 = vcmp.gt.f32.partialorder %v4314, %v4320
        %vm4399 = vcmp.gt.f32.partialorder %v4312, %v4324
        %vm4400 = vcmp.gt.f32.partialorder %v4314, %v4324
        %vm4401 = vcmp.gt.f32.partialorder %v4312, %v4328
        %vm4402 = vcmp.gt.f32.partialorder %v4314, %v4328
        %vm4403 = vcmp.gt.f32.partialorder %v4312, %v4332
        %vm4404 = vcmp.gt.f32.partialorder %v4314, %v4332
        %vm4405 = vcmp.gt.f32.partialorder %v4312, %v4336
        %vm4406 = vcmp.gt.f32.partialorder %v4314, %v4336
        %vm4407 = vcmp.gt.f32.partialorder %v4312, %v4340
        %vm4408 = vcmp.gt.f32.partialorder %v4314, %v4340
        %vm4409 = vcmp.gt.f32.partialorder %v4312, %v4344
        %vm4410 = vcmp.gt.f32.partialorder %v4314, %v4344
        %vm4411 = vcmp.gt.f32.partialorder %v4312, %v4348
        %vm4412 = vcmp.gt.f32.partialorder %v4314, %v4348
        %vm4413 = vcmp.gt.f32.partialorder %v4312, %v4352
        %vm4414 = vcmp.gt.f32.partialorder %v4314, %v4352
        %vm4415 = vcmp.gt.f32.partialorder %v4312, %v4356
        %vm4416 = vcmp.gt.f32.partialorder %v4314, %v4356
        %vm4417 = vcmp.gt.f32.partialorder %v4312, %v4360
        %vm4418 = vcmp.gt.f32.partialorder %v4314, %v4360
        %vm4419 = vcmp.gt.f32.partialorder %v4312, %v4364
        %vm4420 = vcmp.gt.f32.partialorder %v4314, %v4364
        %vm4421 = vcmp.gt.f32.partialorder %v4312, %v4368
        %vm4422 = vcmp.gt.f32.partialorder %v4314, %v4368
        %vm4423 = vcmp.gt.f32.partialorder %v4312, %v4372
        %vm4424 = vcmp.gt.f32.partialorder %v4314, %v4372
        %vm4425 = vcmp.gt.f32.partialorder %v4312, %v4376
        %vm4426 = vcmp.gt.f32.partialorder %v4314, %v4376
        %vm4427 = vcmp.gt.f32.partialorder %v4312, %v4380
        %vm4428 = vcmp.gt.f32.partialorder %v4314, %v4380
        %v4429 = vsel %vm4397, 1, 0
        %v4430 = vsel %vm4398, 1, 0
        %v4431 = vsel %vm4399, 1, 0
        %v4432 = vsel %vm4400, 1, 0
        %v4433 = vsel %vm4401, 1, 0
        %v4434 = vsel %vm4402, 1, 0
        %v4435 = vsel %vm4403, 1, 0
        %v4436 = vsel %vm4404, 1, 0
        %v4437 = vsel %vm4405, 1, 0
        %v4438 = vsel %vm4406, 1, 0
        %v4439 = vsel %vm4407, 1, 0
        %v4440 = vsel %vm4408, 1, 0
        %v4441 = vsel %vm4409, 1, 0
        %v4442 = vsel %vm4410, 1, 0
        %v4443 = vsel %vm4411, 1, 0
        %v4444 = vsel %vm4412, 1, 0
        %v4445 = vsel %vm4413, 1, 0
        %v4446 = vsel %vm4414, 1, 0
        %v4447 = vsel %vm4415, 1, 0
        %v4448 = vsel %vm4416, 1, 0
        %v4449 = vsel %vm4417, 1, 0
        %v4450 = vsel %vm4418, 1, 0
        %v4451 = vsel %vm4419, 1, 0
        %v4452 = vsel %vm4420, 1, 0
        %v4453 = vsel %vm4421, 1, 0
        %v4454 = vsel %vm4422, 1, 0
        %v4455 = vsel %vm4423, 1, 0
        %v4456 = vsel %vm4424, 1, 0
        %v4457 = vsel %vm4425, 1, 0
        %v4458 = vsel %vm4426, 1, 0
        %v4459 = vsel %vm4427, 1, 0
        %v4460 = vsel %vm4428, 1, 0
        %v4461 = vcvt.s32.f32 %v4429
        %v4462 = vcvt.s32.f32 %v4430
        %v4463 = vcvt.s32.f32 %v4431
        %v4464 = vcvt.s32.f32 %v4432
        %v4465 = vcvt.s32.f32 %v4433
        %v4466 = vcvt.s32.f32 %v4434
        %v4467 = vcvt.s32.f32 %v4435
        %v4468 = vcvt.s32.f32 %v4436
        %v4469 = vcvt.s32.f32 %v4437
        %v4470 = vcvt.s32.f32 %v4438
        %v4471 = vcvt.s32.f32 %v4439
        %v4472 = vcvt.s32.f32 %v4440
        %v4473 = vcvt.s32.f32 %v4441
        %v4474 = vcvt.s32.f32 %v4442
        %v4475 = vcvt.s32.f32 %v4443
        %v4476 = vcvt.s32.f32 %v4444
        %v4477 = vcvt.s32.f32 %v4445
        %v4478 = vcvt.s32.f32 %v4446
        %v4479 = vcvt.s32.f32 %v4447
        %v4480 = vcvt.s32.f32 %v4448
        %v4481 = vcvt.s32.f32 %v4449
        %v4482 = vcvt.s32.f32 %v4450
        %v4483 = vcvt.s32.f32 %v4451
        %v4484 = vcvt.s32.f32 %v4452
        %v4485 = vcvt.s32.f32 %v4453
        %v4486 = vcvt.s32.f32 %v4454
        %v4487 = vcvt.s32.f32 %v4455
        %v4488 = vcvt.s32.f32 %v4456
        %v4489 = vcvt.s32.f32 %v4457
        %v4490 = vcvt.s32.f32 %v4458
        %v4491 = vcvt.s32.f32 %v4459
        %v4492 = vcvt.s32.f32 %v4460
        %vm4493 = vcmp.eq.f32.partialorder %v4312, %v4320
        %vm4494 = vcmp.eq.f32.partialorder %v4314, %v4320
        %vm4495 = vcmp.eq.f32.partialorder %v4312, %v4324
        %vm4496 = vcmp.eq.f32.partialorder %v4314, %v4324
        %vm4497 = vcmp.eq.f32.partialorder %v4312, %v4328
        %vm4498 = vcmp.eq.f32.partialorder %v4314, %v4328
        %vm4499 = vcmp.eq.f32.partialorder %v4312, %v4332
        %vm4500 = vcmp.eq.f32.partialorder %v4314, %v4332
        %vm4501 = vcmp.eq.f32.partialorder %v4312, %v4336
        %vm4502 = vcmp.eq.f32.partialorder %v4314, %v4336
        %vm4503 = vcmp.eq.f32.partialorder %v4312, %v4340
        %vm4504 = vcmp.eq.f32.partialorder %v4314, %v4340
        %vm4505 = vcmp.eq.f32.partialorder %v4312, %v4344
        %vm4506 = vcmp.eq.f32.partialorder %v4314, %v4344
        %vm4507 = vcmp.eq.f32.partialorder %v4312, %v4348
        %vm4508 = vcmp.eq.f32.partialorder %v4314, %v4348
        %vm4509 = vcmp.eq.f32.partialorder %v4312, %v4352
        %vm4510 = vcmp.eq.f32.partialorder %v4314, %v4352
        %vm4511 = vcmp.eq.f32.partialorder %v4312, %v4356
        %vm4512 = vcmp.eq.f32.partialorder %v4314, %v4356
        %vm4513 = vcmp.eq.f32.partialorder %v4312, %v4360
        %vm4514 = vcmp.eq.f32.partialorder %v4314, %v4360
        %vm4515 = vcmp.eq.f32.partialorder %v4312, %v4364
        %vm4516 = vcmp.eq.f32.partialorder %v4314, %v4364
        %vm4517 = vcmp.eq.f32.partialorder %v4312, %v4368
        %vm4518 = vcmp.eq.f32.partialorder %v4314, %v4368
        %vm4519 = vcmp.eq.f32.partialorder %v4312, %v4372
        %vm4520 = vcmp.eq.f32.partialorder %v4314, %v4372
        %vm4521 = vcmp.eq.f32.partialorder %v4312, %v4376
        %vm4522 = vcmp.eq.f32.partialorder %v4314, %v4376
        %vm4523 = vcmp.eq.f32.partialorder %v4312, %v4380
        %vm4524 = vcmp.eq.f32.partialorder %v4314, %v4380
        %v4525 = vsel %vm4493, 1, 0
        %v4526 = vsel %vm4494, 1, 0
        %v4527 = vsel %vm4495, 1, 0
        %v4528 = vsel %vm4496, 1, 0
        %v4529 = vsel %vm4497, 1, 0
        %v4530 = vsel %vm4498, 1, 0
        %v4531 = vsel %vm4499, 1, 0
        %v4532 = vsel %vm4500, 1, 0
        %v4533 = vsel %vm4501, 1, 0
        %v4534 = vsel %vm4502, 1, 0
        %v4535 = vsel %vm4503, 1, 0
        %v4536 = vsel %vm4504, 1, 0
        %v4537 = vsel %vm4505, 1, 0
        %v4538 = vsel %vm4506, 1, 0
        %v4539 = vsel %vm4507, 1, 0
        %v4540 = vsel %vm4508, 1, 0
        %v4541 = vsel %vm4509, 1, 0
        %v4542 = vsel %vm4510, 1, 0
        %v4543 = vsel %vm4511, 1, 0
        %v4544 = vsel %vm4512, 1, 0
        %v4545 = vsel %vm4513, 1, 0
        %v4546 = vsel %vm4514, 1, 0
        %v4547 = vsel %vm4515, 1, 0
        %v4548 = vsel %vm4516, 1, 0
        %v4549 = vsel %vm4517, 1, 0
        %v4550 = vsel %vm4518, 1, 0
        %v4551 = vsel %vm4519, 1, 0
        %v4552 = vsel %vm4520, 1, 0
        %v4553 = vsel %vm4521, 1, 0
        %v4554 = vsel %vm4522, 1, 0
        %v4555 = vsel %vm4523, 1, 0
        %v4556 = vsel %vm4524, 1, 0
        %v4557 = vcvt.s32.f32 %v4525
        %v4558 = vcvt.s32.f32 %v4526
        %v4559 = vcvt.s32.f32 %v4527
        %v4560 = vcvt.s32.f32 %v4528
        %v4561 = vcvt.s32.f32 %v4529
        %v4562 = vcvt.s32.f32 %v4530
        %v4563 = vcvt.s32.f32 %v4531
        %v4564 = vcvt.s32.f32 %v4532
        %v4565 = vcvt.s32.f32 %v4533
        %v4566 = vcvt.s32.f32 %v4534
        %v4567 = vcvt.s32.f32 %v4535
        %v4568 = vcvt.s32.f32 %v4536
        %v4569 = vcvt.s32.f32 %v4537
        %v4570 = vcvt.s32.f32 %v4538
        %v4571 = vcvt.s32.f32 %v4539
        %v4572 = vcvt.s32.f32 %v4540
        %v4573 = vcvt.s32.f32 %v4541
        %v4574 = vcvt.s32.f32 %v4542
        %v4575 = vcvt.s32.f32 %v4543
        %v4576 = vcvt.s32.f32 %v4544
        %v4577 = vcvt.s32.f32 %v4545
        %v4578 = vcvt.s32.f32 %v4546
        %v4579 = vcvt.s32.f32 %v4547
        %v4580 = vcvt.s32.f32 %v4548
        %v4581 = vcvt.s32.f32 %v4549
        %v4582 = vcvt.s32.f32 %v4550
        %v4583 = vcvt.s32.f32 %v4551
        %v4584 = vcvt.s32.f32 %v4552
        %v4585 = vcvt.s32.f32 %v4553
        %v4586 = vcvt.s32.f32 %v4554
        %v4587 = vcvt.s32.f32 %v4555
        %v4588 = vcvt.s32.f32 %v4556
        %v4589 = vmul.f32 %v4557, %v1419
        %v4590 = vmul.f32 %v4558, %v1423
        %v4591 = vmul.f32 %v4559, %v1430
        %v4592 = vmul.f32 %v4560, %v1434
        %v4593 = vmul.f32 %v4561, %v1441
        %v4594 = vmul.f32 %v4562, %v1445
        %v4595 = vmul.f32 %v4563, %v1452
        %v4596 = vmul.f32 %v4564, %v1456
        %v4597 = vmul.f32 %v4565, %v1463
        %v4598 = vmul.f32 %v4566, %v1467
        %v4599 = vmul.f32 %v4567, %v1474
        %v4600 = vmul.f32 %v4568, %v1478
        %v4601 = vmul.f32 %v4569, %v1485
        %v4602 = vmul.f32 %v4570, %v1489
        %v4603 = vmul.f32 %v4571, %v1496
        %v4604 = vmul.f32 %v4572, %v1500
        %v4605 = vmul.f32 %v4573, %v1507
        %v4606 = vmul.f32 %v4574, %v1511
        %v4607 = vmul.f32 %v4575, %v1518
        %v4608 = vmul.f32 %v4576, %v1522
        %v4609 = vmul.f32 %v4577, %v1529
        %v4610 = vmul.f32 %v4578, %v1533
        %v4611 = vmul.f32 %v4579, %v1540
        %v4612 = vmul.f32 %v4580, %v1544
        %v4613 = vmul.f32 %v4581, %v1551
        %v4614 = vmul.f32 %v4582, %v1555
        %v4615 = vmul.f32 %v4583, %v1562
        %v4616 = vmul.f32 %v4584, %v1566
        %v4617 = vmul.f32 %v4585, %v1573
        %v4618 = vmul.f32 %v4586, %v1577
        %v4619 = vmul.f32 %v4587, %v1584
        %v4620 = vmul.f32 %v4588, %v1588
        %v4621 = vadd.f32 %v4461, %v4589
        %v4622 = vadd.f32 %v4462, %v4590
        %v4623 = vadd.f32 %v4463, %v4591
        %v4624 = vadd.f32 %v4464, %v4592
        %v4625 = vadd.f32 %v4465, %v4593
        %v4626 = vadd.f32 %v4466, %v4594
        %v4627 = vadd.f32 %v4467, %v4595
        %v4628 = vadd.f32 %v4468, %v4596
        %v4629 = vadd.f32 %v4469, %v4597
        %v4630 = vadd.f32 %v4470, %v4598
        %v4631 = vadd.f32 %v4471, %v4599
        %v4632 = vadd.f32 %v4472, %v4600
        %v4633 = vadd.f32 %v4473, %v4601
        %v4634 = vadd.f32 %v4474, %v4602
        %v4635 = vadd.f32 %v4475, %v4603
        %v4636 = vadd.f32 %v4476, %v4604
        %v4637 = vadd.f32 %v4477, %v4605
        %v4638 = vadd.f32 %v4478, %v4606
        %v4639 = vadd.f32 %v4479, %v4607
        %v4640 = vadd.f32 %v4480, %v4608
        %v4641 = vadd.f32 %v4481, %v4609
        %v4642 = vadd.f32 %v4482, %v4610
        %v4643 = vadd.f32 %v4483, %v4611
        %v4644 = vadd.f32 %v4484, %v4612
        %v4645 = vadd.f32 %v4485, %v4613
        %v4646 = vadd.f32 %v4486, %v4614
        %v4647 = vadd.f32 %v4487, %v4615
        %v4648 = vadd.f32 %v4488, %v4616
        %v4649 = vadd.f32 %v4489, %v4617
        %v4650 = vadd.f32 %v4490, %v4618
        %v4651 = vadd.f32 %v4491, %v4619
        %v4652 = vadd.f32 %v4492, %v4620
        %v4653 = vmul.f32 %v4001, %v4621
        %v4654 = vmul.f32 %v4002, %v4622
        %v4655 = vmul.f32 %v4001, %v4623
        %v4656 = vmul.f32 %v4002, %v4624
        %v4657 = vmul.f32 %v4001, %v4625
        %v4658 = vmul.f32 %v4002, %v4626
        %v4659 = vmul.f32 %v4001, %v4627
        %v4660 = vmul.f32 %v4002, %v4628
        %v4661 = vmul.f32 %v4001, %v4629
        %v4662 = vmul.f32 %v4002, %v4630
        %v4663 = vmul.f32 %v4001, %v4631
        %v4664 = vmul.f32 %v4002, %v4632
        %v4665 = vmul.f32 %v4001, %v4633
        %v4666 = vmul.f32 %v4002, %v4634
        %v4667 = vmul.f32 %v4001, %v4635
        %v4668 = vmul.f32 %v4002, %v4636
        %v4669 = vmul.f32 %v4001, %v4637
        %v4670 = vmul.f32 %v4002, %v4638
        %v4671 = vmul.f32 %v4001, %v4639
        %v4672 = vmul.f32 %v4002, %v4640
        %v4673 = vmul.f32 %v4001, %v4641
        %v4674 = vmul.f32 %v4002, %v4642
        %v4675 = vmul.f32 %v4001, %v4643
        %v4676 = vmul.f32 %v4002, %v4644
        %v4677 = vmul.f32 %v4001, %v4645
        %v4678 = vmul.f32 %v4002, %v4646
        %v4679 = vmul.f32 %v4001, %v4647
        %v4680 = vmul.f32 %v4002, %v4648
        %v4681 = vmul.f32 %v4001, %v4649
        %v4682 = vmul.f32 %v4002, %v4650
        %v4683 = vmul.f32 %v4001, %v4651
        %v4684 = vmul.f32 %v4002, %v4652
        %4717 = vset.pattern.permute.xlu0 0
        %4718 = vperm.xlu0 %4717, %v4653
        %v4719 = vpop.permute.xlu0 %4718
        %4720 = vset.pattern.permute.xlu0 0
        %4721 = vperm.xlu0 %4720, %v4654
        %v4722 = vpop.permute.xlu0 %4721
        %4723 = vset.pattern.permute.xlu0 0
        %4724 = vperm.xlu0 %4723, %v4655
        %v4725 = vpop.permute.xlu0 %4724
        %4726 = vset.pattern.permute.xlu0 0
        %4727 = vperm.xlu0 %4726, %v4656
        %v4728 = vpop.permute.xlu0 %4727
        %4729 = vset.pattern.permute.xlu0 0
        %4730 = vperm.xlu0 %4729, %v4657
        %v4731 = vpop.permute.xlu0 %4730
        %4732 = vset.pattern.permute.xlu0 0
        %4733 = vperm.xlu0 %4732, %v4658
        %v4734 = vpop.permute.xlu0 %4733
        %4735 = vset.pattern.permute.xlu0 0
        %4736 = vperm.xlu0 %4735, %v4659
        %v4737 = vpop.permute.xlu0 %4736
        %4738 = vset.pattern.permute.xlu0 0
        %4739 = vperm.xlu0 %4738, %v4660
        %v4740 = vpop.permute.xlu0 %4739
        %4741 = vset.pattern.permute.xlu0 0
        %4742 = vperm.xlu0 %4741, %v4661
        %v4743 = vpop.permute.xlu0 %4742
        %4744 = vset.pattern.permute.xlu0 0
        %4745 = vperm.xlu0 %4744, %v4662
        %v4746 = vpop.permute.xlu0 %4745
        %4747 = vset.pattern.permute.xlu0 0
        %4748 = vperm.xlu0 %4747, %v4663
        %v4749 = vpop.permute.xlu0 %4748
        %4750 = vset.pattern.permute.xlu0 0
        %4751 = vperm.xlu0 %4750, %v4664
        %v4752 = vpop.permute.xlu0 %4751
        %4753 = vset.pattern.permute.xlu0 0
        %4754 = vperm.xlu0 %4753, %v4665
        %v4755 = vpop.permute.xlu0 %4754
        %4756 = vset.pattern.permute.xlu0 0
        %4757 = vperm.xlu0 %4756, %v4666
        %v4758 = vpop.permute.xlu0 %4757
        %4759 = vset.pattern.permute.xlu0 0
        %4760 = vperm.xlu0 %4759, %v4667
        %v4761 = vpop.permute.xlu0 %4760
        %4762 = vset.pattern.permute.xlu0 0
        %4763 = vperm.xlu0 %4762, %v4668
        %v4764 = vpop.permute.xlu0 %4763
        %4765 = vset.pattern.permute.xlu0 0
        %4766 = vperm.xlu0 %4765, %v4669
        %v4767 = vpop.permute.xlu0 %4766
        %4768 = vset.pattern.permute.xlu0 0
        %4769 = vperm.xlu0 %4768, %v4670
        %v4770 = vpop.permute.xlu0 %4769
        %4771 = vset.pattern.permute.xlu0 0
        %4772 = vperm.xlu0 %4771, %v4671
        %v4773 = vpop.permute.xlu0 %4772
        %4774 = vset.pattern.permute.xlu0 0
        %4775 = vperm.xlu0 %4774, %v4672
        %v4776 = vpop.permute.xlu0 %4775
        %4777 = vset.pattern.permute.xlu0 0
        %4778 = vperm.xlu0 %4777, %v4673
        %v4779 = vpop.permute.xlu0 %4778
        %4780 = vset.pattern.permute.xlu0 0
        %4781 = vperm.xlu0 %4780, %v4674
        %v4782 = vpop.permute.xlu0 %4781
        %4783 = vset.pattern.permute.xlu0 0
        %4784 = vperm.xlu0 %4783, %v4675
        %v4785 = vpop.permute.xlu0 %4784
        %4786 = vset.pattern.permute.xlu0 0
        %4787 = vperm.xlu0 %4786, %v4676
        %v4788 = vpop.permute.xlu0 %4787
        %4789 = vset.pattern.permute.xlu0 0
        %4790 = vperm.xlu0 %4789, %v4677
        %v4791 = vpop.permute.xlu0 %4790
        %4792 = vset.pattern.permute.xlu0 0
        %4793 = vperm.xlu0 %4792, %v4678
        %v4794 = vpop.permute.xlu0 %4793
        %4795 = vset.pattern.permute.xlu0 0
        %4796 = vperm.xlu0 %4795, %v4679
        %v4797 = vpop.permute.xlu0 %4796
        %4798 = vset.pattern.permute.xlu0 0
        %4799 = vperm.xlu0 %4798, %v4680
        %v4800 = vpop.permute.xlu0 %4799
        %4801 = vset.pattern.permute.xlu0 0
        %4802 = vperm.xlu0 %4801, %v4681
        %v4803 = vpop.permute.xlu0 %4802
        %4804 = vset.pattern.permute.xlu0 0
        %4805 = vperm.xlu0 %4804, %v4682
        %v4806 = vpop.permute.xlu0 %4805
        %4807 = vset.pattern.permute.xlu0 0
        %4808 = vperm.xlu0 %4807, %v4683
        %v4809 = vpop.permute.xlu0 %4808
        %4810 = vset.pattern.permute.xlu0 0
        %4811 = vperm.xlu0 %4810, %v4684
        %v4812 = vpop.permute.xlu0 %4811
        %v4813 = vlaneseq
        %v4814 = vshrl.u32 %v4813, 7
        %v4815 = vsub.s32 %v870, %v4814
        %v4816 = vrot.slane %v4719, %v4815
        %v4817 = vlaneseq
        %v4818 = vshrl.u32 %v4817, 7
        %v4819 = vsub.s32 %v893, %v4818
        %v4820 = vrot.slane %v4722, %v4819
        %v4821 = vsel %vm898, %v4820, %v4816
        %v4822 = vlaneseq
        %v4823 = vshrl.u32 %v4822, 7
        %v4824 = vsub.s32 %v870, %v4823
        %v4825 = vrot.slane %v4725, %v4824
        %v4826 = vlaneseq
        %v4827 = vshrl.u32 %v4826, 7
        %v4828 = vsub.s32 %v893, %v4827
        %v4829 = vrot.slane %v4728, %v4828
        %v4830 = vsel %vm898, %v4829, %v4825
        %v4831 = vlaneseq
        %v4832 = vshrl.u32 %v4831, 7
        %v4833 = vsub.s32 %v870, %v4832
        %v4834 = vrot.slane %v4731, %v4833
        %v4835 = vlaneseq
        %v4836 = vshrl.u32 %v4835, 7
        %v4837 = vsub.s32 %v893, %v4836
        %v4838 = vrot.slane %v4734, %v4837
        %v4839 = vsel %vm898, %v4838, %v4834
        %v4840 = vlaneseq
        %v4841 = vshrl.u32 %v4840, 7
        %v4842 = vsub.s32 %v870, %v4841
        %v4843 = vrot.slane %v4737, %v4842
        %v4844 = vlaneseq
        %v4845 = vshrl.u32 %v4844, 7
        %v4846 = vsub.s32 %v893, %v4845
        %v4847 = vrot.slane %v4740, %v4846
        %v4848 = vsel %vm898, %v4847, %v4843
        %v4849 = vlaneseq
        %v4850 = vshrl.u32 %v4849, 7
        %v4851 = vsub.s32 %v870, %v4850
        %v4852 = vrot.slane %v4743, %v4851
        %v4853 = vlaneseq
        %v4854 = vshrl.u32 %v4853, 7
        %v4855 = vsub.s32 %v893, %v4854
        %v4856 = vrot.slane %v4746, %v4855
        %v4857 = vsel %vm898, %v4856, %v4852
        %v4858 = vlaneseq
        %v4859 = vshrl.u32 %v4858, 7
        %v4860 = vsub.s32 %v870, %v4859
        %v4861 = vrot.slane %v4749, %v4860
        %v4862 = vlaneseq
        %v4863 = vshrl.u32 %v4862, 7
        %v4864 = vsub.s32 %v893, %v4863
        %v4865 = vrot.slane %v4752, %v4864
        %v4866 = vsel %vm898, %v4865, %v4861
        %v4867 = vlaneseq
        %v4868 = vshrl.u32 %v4867, 7
        %v4869 = vsub.s32 %v870, %v4868
        %v4870 = vrot.slane %v4755, %v4869
        %v4871 = vlaneseq
        %v4872 = vshrl.u32 %v4871, 7
        %v4873 = vsub.s32 %v893, %v4872
        %v4874 = vrot.slane %v4758, %v4873
        %v4875 = vsel %vm898, %v4874, %v4870
        %v4876 = vlaneseq
        %v4877 = vshrl.u32 %v4876, 7
        %v4878 = vsub.s32 %v870, %v4877
        %v4879 = vrot.slane %v4761, %v4878
        %v4880 = vlaneseq
        %v4881 = vshrl.u32 %v4880, 7
        %v4882 = vsub.s32 %v893, %v4881
        %v4883 = vrot.slane %v4764, %v4882
        %v4884 = vsel %vm898, %v4883, %v4879
        %v4885 = vlaneseq
        %v4886 = vshrl.u32 %v4885, 7
        %v4887 = vsub.s32 %v870, %v4886
        %v4888 = vrot.slane %v4767, %v4887
        %v4889 = vlaneseq
        %v4890 = vshrl.u32 %v4889, 7
        %v4891 = vsub.s32 %v893, %v4890
        %v4892 = vrot.slane %v4770, %v4891
        %v4893 = vsel %vm898, %v4892, %v4888
        %v4894 = vlaneseq
        %v4895 = vshrl.u32 %v4894, 7
        %v4896 = vsub.s32 %v870, %v4895
        %v4897 = vrot.slane %v4773, %v4896
        %v4898 = vlaneseq
        %v4899 = vshrl.u32 %v4898, 7
        %v4900 = vsub.s32 %v893, %v4899
        %v4901 = vrot.slane %v4776, %v4900
        %v4902 = vsel %vm898, %v4901, %v4897
        %v4903 = vlaneseq
        %v4904 = vshrl.u32 %v4903, 7
        %v4905 = vsub.s32 %v870, %v4904
        %v4906 = vrot.slane %v4779, %v4905
        %v4907 = vlaneseq
        %v4908 = vshrl.u32 %v4907, 7
        %v4909 = vsub.s32 %v893, %v4908
        %v4910 = vrot.slane %v4782, %v4909
        %v4911 = vsel %vm898, %v4910, %v4906
        %v4912 = vlaneseq
        %v4913 = vshrl.u32 %v4912, 7
        %v4914 = vsub.s32 %v870, %v4913
        %v4915 = vrot.slane %v4785, %v4914
        %v4916 = vlaneseq
        %v4917 = vshrl.u32 %v4916, 7
        %v4918 = vsub.s32 %v893, %v4917
        %v4919 = vrot.slane %v4788, %v4918
        %v4920 = vsel %vm898, %v4919, %v4915
        %v4921 = vlaneseq
        %v4922 = vshrl.u32 %v4921, 7
        %v4923 = vsub.s32 %v870, %v4922
        %v4924 = vrot.slane %v4791, %v4923
        %v4925 = vlaneseq
        %v4926 = vshrl.u32 %v4925, 7
        %v4927 = vsub.s32 %v893, %v4926
        %v4928 = vrot.slane %v4794, %v4927
        %v4929 = vsel %vm898, %v4928, %v4924
        %v4930 = vlaneseq
        %v4931 = vshrl.u32 %v4930, 7
        %v4932 = vsub.s32 %v870, %v4931
        %v4933 = vrot.slane %v4797, %v4932
        %v4934 = vlaneseq
        %v4935 = vshrl.u32 %v4934, 7
        %v4936 = vsub.s32 %v893, %v4935
        %v4937 = vrot.slane %v4800, %v4936
        %v4938 = vsel %vm898, %v4937, %v4933
        %v4939 = vlaneseq
        %v4940 = vshrl.u32 %v4939, 7
        %v4941 = vsub.s32 %v870, %v4940
        %v4942 = vrot.slane %v4803, %v4941
        %v4943 = vlaneseq
        %v4944 = vshrl.u32 %v4943, 7
        %v4945 = vsub.s32 %v893, %v4944
        %v4946 = vrot.slane %v4806, %v4945
        %v4947 = vsel %vm898, %v4946, %v4942
        %v4948 = vlaneseq
        %v4949 = vshrl.u32 %v4948, 7
        %v4950 = vsub.s32 %v870, %v4949
        %v4951 = vrot.slane %v4809, %v4950
        %v4952 = vlaneseq
        %v4953 = vshrl.u32 %v4952, 7
        %v4954 = vsub.s32 %v893, %v4953
        %v4955 = vrot.slane %v4812, %v4954
        %v4956 = vsel %vm898, %v4955, %v4951
        %v4957 = vsel %vm900, %v4830, %v4821
        %v4958 = vsel %vm901, %v4839, %v4957
        %v4959 = vsel %vm903, %v4848, %v4958
        %v4960 = vsel %vm905, %v4857, %v4959
        %v4961 = vsel %vm907, %v4866, %v4960
        %v4962 = vsel %vm909, %v4875, %v4961
        %v4963 = vsel %vm911, %v4884, %v4962
        %v4964 = vsel %vm900, %v4902, %v4893
        %v4965 = vsel %vm901, %v4911, %v4964
        %v4966 = vsel %vm903, %v4920, %v4965
        %v4967 = vsel %vm905, %v4929, %v4966
        %v4968 = vsel %vm907, %v4938, %v4967
        %v4969 = vsel %vm909, %v4947, %v4968
        %v4970 = vsel %vm911, %v4956, %v4969
        %v4973 = vsel %vm916, %v4963, 0.0
        %4974 = vadd.xlane.f32.xlu0 %v4973
        %v4975 = vpop.xlane.xlu0 %4974
        %v4976 = vsel %vm916, %v4970, 0.0
        %4977 = vadd.xlane.f32.xlu0 %v4976
        %v4978 = vpop.xlane.xlu0 %4977
        %v4979 = vmul.f32 %v4027, 0.8
        %v4980 = vceil.f32 %v4979
        %vm4981 = vcmp.lt.f32.partialorder %v4975, %v4980
        %vm4982 = vcmp.lt.f32.partialorder %v4978, %v4980
        %v4983 = vsel %vm4981, 1, 0
        %v4984 = vsel %vm4982, 1, 0
        %v4985 = vcvt.s32.f32 %v4983
        %v4986 = vcvt.s32.f32 %v4984
        %v4987 = vmul.f32 %v4001, %v4985
        %v4988 = vmul.f32 %v4002, %v4986
        %v4989 = vtanh.pop %v4312
        %v4990 = vtanh.pop %v4314
        %v4991 = vmul.f32 %v4301, %v4989
        %v4992 = vmul.f32 %v4302, %v4990
        %4994 = vset.pattern.permute.xlu0 0
        %4995 = vperm.xlu0 %4994, %v4987
        %v4996 = vpop.permute.xlu0 %4995
        %4999 = vset.pattern.permute.xlu0 0
        %5000 = vperm.xlu0 %4999, %v4988
        %v5001 = vpop.permute.xlu0 %5000
        %v5003 = vmul.f32 %v4991, %v4996
        %v5004 = vmul.f32 %v4992, %v5001
        %v5005 = vsel %vm2011, %v4987, 0.0
        %v5006 = vsel %vm2011, %v4988, 0.0
        %v5007 = vadd.f32 %v5005, %v5006
        %v5008 = vrot.slane %v5007, 4
        %v5009 = vadd.f32 %v5007, %v5008
        %v5010 = vrot.slane %v5009, 2
        %v5011 = vadd.f32 %v5009, %v5010
        %v5012 = vrot.slane %v5011, 1
        %v5013 = vadd.f32 %v5011, %v5012
        %v5014 = vadd.f32 %v5003, %v5004
        %v5015 = vrot.slane %v5014, 4
        %v5016 = vadd.f32 %v5014, %v5015
        %v5017 = vrot.slane %v5016, 2
        %v5018 = vadd.f32 %v5016, %v5017
        %v5019 = vrot.slane %v5018, 1
        %v5020 = vadd.f32 %v5018, %v5019
        %v5021 = vmax.f32 %v5013, 1.0
        %5023 = vset.pattern.permute.xlu0 0
        %5024 = vperm.xlu0 %5023, %v5021
        %v5025 = vpop.permute.xlu0 %5024
        %v5027 = vrcp.pop %v5025
        %v5028 = vmul.f32 %v5020, %v5027
        %vm5029 = vcmp.gt.f32.partialorder %v4987, 0.5
        %vm5030 = vcmp.gt.f32.partialorder %v4988, 0.5
        %v5031 = vsel %vm5029, 1, 0
        %v5032 = vsel %vm5030, 1, 0
        %5033 = vset.pattern.permute.xlu0 0
        %5034 = vperm.xlu0 %5033, %v5031
        %v5035 = vpop.permute.xlu0 %5034
        %5036 = vset.pattern.permute.xlu0 0
        %5037 = vperm.xlu0 %5036, %v5032
        %v5038 = vpop.permute.xlu0 %5037
        %vm5039 = vcmp.eq.s32.totalorder %v5035, 1
        %vm5040 = vcmp.eq.s32.totalorder %v5038, 1
        %v5041 = vsel %vm5039, %v5003, -1e+30
        %v5042 = vsel %vm5040, %v5004, -1e+30
        %v5043 = vmax.f32 %v5041, %v5042
        %v5044 = vrot.slane %v5043, 4
        %v5045 = vmax.f32 %v5043, %v5044
        %v5046 = vrot.slane %v5045, 2
        %v5047 = vmax.f32 %v5045, %v5046
        %v5048 = vrot.slane %v5047, 1
        %v5049 = vmax.f32 %v5047, %v5048
        %vm5050 = vcmp.gt.f32.partialorder %v5013, 0.0
        %v5051 = vsel %vm5050, 1, 0
        %5052 = vset.pattern.permute.xlu0 0
        %5053 = vperm.xlu0 %5052, %v5051
        %v5054 = vpop.permute.xlu0 %5053
        %vm5055 = vcmp.eq.s32.totalorder %v5054, 1
        %v5056 = vsel %vm5055, %v5049, 0.0
        %v5057 = vadd.f32 %v4071, %v5056
        %v5058 = vadd.f32 %v4072, %v5028
        %v5059 = vld [vmem:[%s15] sm:$0xff]
        %v5060 = vld [vmem:[%s15 + $0x8] sm:$0xff]
        %v5061 = vld [vmem:[%s15 + $0x10] sm:$0xff]
        %v5062 = vld [vmem:[%s15 + $0x18] sm:$0xff]
        %v5063 = vld [vmem:[%s15 + $0x20] sm:$0xff]
        %v5064 = vld [vmem:[%s15 + $0x28] sm:$0xff]
        %v5065 = vld [vmem:[%s15 + $0x30] sm:$0xff]
        %v5066 = vld [vmem:[%s15 + $0x38] sm:$0xff]
        %v5067 = vld [vmem:[%s15 + $0x40] sm:$0xff]
        %v5068 = vld [vmem:[%s15 + $0x48] sm:$0xff]
        %v5069 = vld [vmem:[%s15 + $0x50] sm:$0xff]
        %v5070 = vld [vmem:[%s15 + $0x58] sm:$0xff]
        %v5071 = vld [vmem:[%s15 + $0x60] sm:$0xff]
        %v5072 = vld [vmem:[%s15 + $0x68] sm:$0xff]
        %v5073 = vld [vmem:[%s15 + $0x70] sm:$0xff]
        %v5074 = vld [vmem:[%s15 + $0x78] sm:$0xff]
        %v5075 = vld [vmem:[%s15 + $0x80] sm:$0xff]
        %v5076 = vld [vmem:[%s15 + $0x88] sm:$0xff]
        %v5077 = vld [vmem:[%s15 + $0x90] sm:$0xff]
        %v5078 = vld [vmem:[%s15 + $0x98] sm:$0xff]
        %v5079 = vld [vmem:[%s15 + $0xa0] sm:$0xff]
        %v5080 = vld [vmem:[%s15 + $0xa8] sm:$0xff]
        %v5081 = vld [vmem:[%s15 + $0xb0] sm:$0xff]
        %v5082 = vld [vmem:[%s15 + $0xb8] sm:$0xff]
        %v5083 = vld [vmem:[%s15 + $0xc0] sm:$0xff]
        %v5084 = vld [vmem:[%s15 + $0xc8] sm:$0xff]
        %v5085 = vld [vmem:[%s15 + $0xd0] sm:$0xff]
        %v5086 = vld [vmem:[%s15 + $0xd8] sm:$0xff]
        %v5087 = vld [vmem:[%s15 + $0xe0] sm:$0xff]
        %v5088 = vld [vmem:[%s15 + $0xe8] sm:$0xff]
        %v5089 = vld [vmem:[%s15 + $0xf0] sm:$0xff]
        %v5090 = vld [vmem:[%s15 + $0xf8] sm:$0xff]
        %5091 = vmatprep.subr.mxu0 0.0
        %5092 = vmatpush1.msra.mxu0 %v5090
        %5093 = vmatprep.subr.mxu0 0.0
        %5094 = vmatpush1.msra.mxu0 %v5089
        %5095 = vmatprep.subr.mxu0 0.0
        %5096 = vmatpush1.msra.mxu0 %v5088
        %5097 = vmatprep.subr.mxu0 0.0
        %5098 = vmatpush1.msra.mxu0 %v5087
        %5099 = vmatprep.subr.mxu0 0.0
        %5100 = vmatpush1.msra.mxu0 %v5086
        %5101 = vmatprep.subr.mxu0 0.0
        %5102 = vmatpush1.msra.mxu0 %v5085
        %5103 = vmatprep.subr.mxu0 0.0
        %5104 = vmatpush1.msra.mxu0 %v5084
        %5105 = vmatprep.subr.mxu0 0.0
        %5106 = vmatpush1.msra.mxu0 %v5083
        %5107 = vmatprep.subr.mxu0 0.0
        %5108 = vmatpush1.msra.mxu0 %v5082
        %5109 = vmatprep.subr.mxu0 0.0
        %5110 = vmatpush1.msra.mxu0 %v5081
        %5111 = vmatprep.subr.mxu0 0.0
        %5112 = vmatpush1.msra.mxu0 %v5080
        %5113 = vmatprep.subr.mxu0 0.0
        %5114 = vmatpush1.msra.mxu0 %v5079
        %5115 = vmatprep.subr.mxu0 0.0
        %5116 = vmatpush1.msra.mxu0 %v5078
        %5117 = vmatprep.subr.mxu0 0.0
        %5118 = vmatpush1.msra.mxu0 %v5077
        %5119 = vmatprep.subr.mxu0 0.0
        %5120 = vmatpush1.msra.mxu0 %v5076
        %5121 = vmatprep.subr.mxu0 0.0
        %5122 = vmatpush1.msra.mxu0 %v5075
        %5123 = vmatprep.subr.mxu0 0.0
        %5124 = vmatpush2.msra.mxu0 0.0
        %5125 = vmatprep.subr.mxu0 0.0
        %5126 = vmatpush2.msra.mxu0 0.0
        %5127 = vmatprep.subr.mxu0 0.0
        %5128 = vmatpush2.msra.mxu0 0.0
        %5129 = vmatprep.subr.mxu0 0.0
        %5130 = vmatpush2.msra.mxu0 0.0
        %5131 = vmatprep.subr.mxu0 0.0
        %5132 = vmatpush2.msra.mxu0 0.0
        %5133 = vmatprep.subr.mxu0 0.0
        %5134 = vmatpush2.msra.mxu0 0.0
        %5135 = vmatprep.subr.mxu0 0.0
        %5136 = vmatpush2.msra.mxu0 0.0
        %5137 = vmatprep.subr.mxu0 0.0
        %5138 = vmatpush2.msra.mxu0 0.0
        %5139 = vmatprep.subr.mxu0 0.0
        %5140 = vmatpush2.msra.mxu0 0.0
        %5141 = vmatprep.subr.mxu0 0.0
        %5142 = vmatpush2.msra.mxu0 0.0
        %5143 = vmatprep.subr.mxu0 0.0
        %5144 = vmatpush2.msra.mxu0 0.0
        %5145 = vmatprep.subr.mxu0 0.0
        %5146 = vmatpush2.msra.mxu0 0.0
        %5147 = vmatprep.subr.mxu0 0.0
        %5148 = vmatpush2.msra.mxu0 0.0
        %5149 = vmatprep.subr.mxu0 0.0
        %5150 = vmatpush2.msra.mxu0 0.0
        %5151 = vmatprep.subr.mxu0 0.0
        %5152 = vmatpush2.msra.mxu0 0.0
        %5153 = vmatprep.subr.mxu0 0.0
        %5154 = vmatpush2.msra.mxu0 0.0
        %5155 = vmatprep.mubr.f32.mxu0 0.0
        %5156 = vmatmul.mubr.f32.gmra.mxu0 %v5058
        %v5157 = vpop.f32.mrf.mxu0
        %v5158 = vadd.f32 0.0, %v5157
        %v5159 = vpop.f32.mrf.mxu0
        %5160 = vdwg.mxu0
        %5161 = vmatprep.subr.mxu0 0.0
        %5162 = vmatpush1.msra.mxu0 %v5074
        %5163 = vmatprep.subr.mxu0 0.0
        %5164 = vmatpush1.msra.mxu0 %v5073
        %5165 = vmatprep.subr.mxu0 0.0
        %5166 = vmatpush1.msra.mxu0 %v5072
        %5167 = vmatprep.subr.mxu0 0.0
        %5168 = vmatpush1.msra.mxu0 %v5071
        %5169 = vmatprep.subr.mxu0 0.0
        %5170 = vmatpush1.msra.mxu0 %v5070
        %5171 = vmatprep.subr.mxu0 0.0
        %5172 = vmatpush1.msra.mxu0 %v5069
        %5173 = vmatprep.subr.mxu0 0.0
        %5174 = vmatpush1.msra.mxu0 %v5068
        %5175 = vmatprep.subr.mxu0 0.0
        %5176 = vmatpush1.msra.mxu0 %v5067
        %5177 = vmatprep.subr.mxu0 0.0
        %5178 = vmatpush1.msra.mxu0 %v5066
        %5179 = vmatprep.subr.mxu0 0.0
        %5180 = vmatpush1.msra.mxu0 %v5065
        %5181 = vmatprep.subr.mxu0 0.0
        %5182 = vmatpush1.msra.mxu0 %v5064
        %5183 = vmatprep.subr.mxu0 0.0
        %5184 = vmatpush1.msra.mxu0 %v5063
        %5185 = vmatprep.subr.mxu0 0.0
        %5186 = vmatpush1.msra.mxu0 %v5062
        %5187 = vmatprep.subr.mxu0 0.0
        %5188 = vmatpush1.msra.mxu0 %v5061
        %5189 = vmatprep.subr.mxu0 0.0
        %5190 = vmatpush1.msra.mxu0 %v5060
        %5191 = vmatprep.subr.mxu0 0.0
        %5192 = vmatpush1.msra.mxu0 %v5059
        %5193 = vmatprep.subr.mxu0 0.0
        %5194 = vmatpush2.msra.mxu0 0.0
        %5195 = vmatprep.subr.mxu0 0.0
        %5196 = vmatpush2.msra.mxu0 0.0
        %5197 = vmatprep.subr.mxu0 0.0
        %5198 = vmatpush2.msra.mxu0 0.0
        %5199 = vmatprep.subr.mxu0 0.0
        %5200 = vmatpush2.msra.mxu0 0.0
        %5201 = vmatprep.subr.mxu0 0.0
        %5202 = vmatpush2.msra.mxu0 0.0
        %5203 = vmatprep.subr.mxu0 0.0
        %5204 = vmatpush2.msra.mxu0 0.0
        %5205 = vmatprep.subr.mxu0 0.0
        %5206 = vmatpush2.msra.mxu0 0.0
        %5207 = vmatprep.subr.mxu0 0.0
        %5208 = vmatpush2.msra.mxu0 0.0
        %5209 = vmatprep.subr.mxu0 0.0
        %5210 = vmatpush2.msra.mxu0 0.0
        %5211 = vmatprep.subr.mxu0 0.0
        %5212 = vmatpush2.msra.mxu0 0.0
        %5213 = vmatprep.subr.mxu0 0.0
        %5214 = vmatpush2.msra.mxu0 0.0
        %5215 = vmatprep.subr.mxu0 0.0
        %5216 = vmatpush2.msra.mxu0 0.0
        %5217 = vmatprep.subr.mxu0 0.0
        %5218 = vmatpush2.msra.mxu0 0.0
        %5219 = vmatprep.subr.mxu0 0.0
        %5220 = vmatpush2.msra.mxu0 0.0
        %5221 = vmatprep.subr.mxu0 0.0
        %5222 = vmatpush2.msra.mxu0 0.0
        %5223 = vmatprep.subr.mxu0 0.0
        %5224 = vmatpush2.msra.mxu0 0.0
        %5225 = vmatprep.mubr.f32.mxu0 0.0
        %5226 = vmatmul.mubr.f32.gmra.mxu0 %v5057
        %v5227 = vpop.f32.mrf.mxu0
        %v5228 = vadd.f32 %v5158, %v5227
        %v5229 = vpop.f32.mrf.mxu0
        %5230 = vdwg.mxu0
        %v5231 = vld [vmem:[#allocation17] sm:$0x1]
        %v5232 = vadd.f32 %v5228, %v5231
        %v5233 = vmax.f32 %v5232, 0.0
        %v5234 = vld [vmem:[%s17] sm:$0xff]
        %v5235 = vld [vmem:[%s17 + $0x8] sm:$0xff]
        %v5236 = vld [vmem:[%s17 + $0x10] sm:$0xff]
        %v5237 = vld [vmem:[%s17 + $0x18] sm:$0xff]
        %v5238 = vld [vmem:[%s17 + $0x20] sm:$0xff]
        %v5239 = vld [vmem:[%s17 + $0x28] sm:$0xff]
        %v5240 = vld [vmem:[%s17 + $0x30] sm:$0xff]
        %v5241 = vld [vmem:[%s17 + $0x38] sm:$0xff]
        %v5242 = vld [vmem:[%s17 + $0x40] sm:$0xff]
        %v5243 = vld [vmem:[%s17 + $0x48] sm:$0xff]
        %v5244 = vld [vmem:[%s17 + $0x50] sm:$0xff]
        %v5245 = vld [vmem:[%s17 + $0x58] sm:$0xff]
        %v5246 = vld [vmem:[%s17 + $0x60] sm:$0xff]
        %v5247 = vld [vmem:[%s17 + $0x68] sm:$0xff]
        %v5248 = vld [vmem:[%s17 + $0x70] sm:$0xff]
        %v5249 = vld [vmem:[%s17 + $0x78] sm:$0xff]
        %v5250 = vld [vmem:[#allocation19] sm:$0x1]
        %5251 = vmatprep.subr.mxu0 0.0
        %5252 = vmatpush1.msra.mxu0 %v5249
        %5253 = vmatprep.subr.mxu0 0.0
        %5254 = vmatpush1.msra.mxu0 %v5248
        %5255 = vmatprep.subr.mxu0 0.0
        %5256 = vmatpush1.msra.mxu0 %v5247
        %5257 = vmatprep.subr.mxu0 0.0
        %5258 = vmatpush1.msra.mxu0 %v5246
        %5259 = vmatprep.subr.mxu0 0.0
        %5260 = vmatpush1.msra.mxu0 %v5245
        %5261 = vmatprep.subr.mxu0 0.0
        %5262 = vmatpush1.msra.mxu0 %v5244
        %5263 = vmatprep.subr.mxu0 0.0
        %5264 = vmatpush1.msra.mxu0 %v5243
        %5265 = vmatprep.subr.mxu0 0.0
        %5266 = vmatpush1.msra.mxu0 %v5242
        %5267 = vmatprep.subr.mxu0 0.0
        %5268 = vmatpush1.msra.mxu0 %v5241
        %5269 = vmatprep.subr.mxu0 0.0
        %5270 = vmatpush1.msra.mxu0 %v5240
        %5271 = vmatprep.subr.mxu0 0.0
        %5272 = vmatpush1.msra.mxu0 %v5239
        %5273 = vmatprep.subr.mxu0 0.0
        %5274 = vmatpush1.msra.mxu0 %v5238
        %5275 = vmatprep.subr.mxu0 0.0
        %5276 = vmatpush1.msra.mxu0 %v5237
        %5277 = vmatprep.subr.mxu0 0.0
        %5278 = vmatpush1.msra.mxu0 %v5236
        %5279 = vmatprep.subr.mxu0 0.0
        %5280 = vmatpush1.msra.mxu0 %v5235
        %5281 = vmatprep.subr.mxu0 0.0
        %5282 = vmatpush1.msra.mxu0 %v5234
        %5283 = vmatprep.subr.mxu0 0.0
        %5284 = vmatpush2.msra.mxu0 0.0
        %5285 = vmatprep.subr.mxu0 0.0
        %5286 = vmatpush2.msra.mxu0 0.0
        %5287 = vmatprep.subr.mxu0 0.0
        %5288 = vmatpush2.msra.mxu0 0.0
        %5289 = vmatprep.subr.mxu0 0.0
        %5290 = vmatpush2.msra.mxu0 0.0
        %5291 = vmatprep.subr.mxu0 0.0
        %5292 = vmatpush2.msra.mxu0 0.0
        %5293 = vmatprep.subr.mxu0 0.0
        %5294 = vmatpush2.msra.mxu0 0.0
        %5295 = vmatprep.subr.mxu0 0.0
        %5296 = vmatpush2.msra.mxu0 0.0
        %5297 = vmatprep.subr.mxu0 0.0
        %5298 = vmatpush2.msra.mxu0 0.0
        %5299 = vmatprep.subr.mxu0 0.0
        %5300 = vmatpush2.msra.mxu0 0.0
        %5301 = vmatprep.subr.mxu0 0.0
        %5302 = vmatpush2.msra.mxu0 0.0
        %5303 = vmatprep.subr.mxu0 0.0
        %5304 = vmatpush2.msra.mxu0 0.0
        %5305 = vmatprep.subr.mxu0 0.0
        %5306 = vmatpush2.msra.mxu0 0.0
        %5307 = vmatprep.subr.mxu0 0.0
        %5308 = vmatpush2.msra.mxu0 0.0
        %5309 = vmatprep.subr.mxu0 0.0
        %5310 = vmatpush2.msra.mxu0 0.0
        %5311 = vmatprep.subr.mxu0 0.0
        %5312 = vmatpush2.msra.mxu0 0.0
        %5313 = vmatprep.subr.mxu0 0.0
        %5314 = vmatpush2.msra.mxu0 0.0
        %5315 = vmatprep.mubr.f32.mxu0 0.0
        %5316 = vmatmul.mubr.f32.gmra.mxu0 %v5233
        %v5317 = vpop.f32.mrf.mxu0
        %v5318 = vadd.f32 %v5250, %v5317
        %v5319 = vpop.f32.mrf.mxu0
        %5320 = vdwg.mxu0
        %v5321 = vmax.f32 %v5318, 0.0
        %v5322 = vld [vmem:[%s19] sm:$0xff]
        %v5323 = vld [vmem:[%s19 + $0x8] sm:$0xff]
        %v5324 = vld [vmem:[%s19 + $0x10] sm:$0xff]
        %v5325 = vld [vmem:[%s19 + $0x18] sm:$0xff]
        %v5326 = vld [vmem:[%s19 + $0x20] sm:$0xff]
        %v5327 = vld [vmem:[%s19 + $0x28] sm:$0xff]
        %v5328 = vld [vmem:[%s19 + $0x30] sm:$0xff]
        %v5329 = vld [vmem:[%s19 + $0x38] sm:$0xff]
        %v5330 = vld [vmem:[#allocation20] sm:$0x1]
        %vm5331 = vcmask 523264
        %v5333 = vsel %vm5331, %v5321, 0
        %5335 = vmatprep.subr.mxu0 0.0
        %5336 = vmatpush1.msra.mxu0 0.0
        %5337 = vmatprep.subr.mxu0 0.0
        %5338 = vmatpush1.msra.mxu0 0.0
        %5339 = vmatprep.subr.mxu0 0.0
        %5340 = vmatpush1.msra.mxu0 0.0
        %5341 = vmatprep.subr.mxu0 0.0
        %5342 = vmatpush1.msra.mxu0 0.0
        %5343 = vmatprep.subr.mxu0 0.0
        %5344 = vmatpush1.msra.mxu0 0.0
        %5345 = vmatprep.subr.mxu0 0.0
        %5346 = vmatpush1.msra.mxu0 0.0
        %5347 = vmatprep.subr.mxu0 0.0
        %5348 = vmatpush1.msra.mxu0 0.0
        %5349 = vmatprep.subr.mxu0 0.0
        %5350 = vmatpush1.msra.mxu0 0.0
        %5351 = vmatprep.subr.mxu0 0.0
        %5352 = vmatpush1.msra.mxu0 %v5329
        %5353 = vmatprep.subr.mxu0 0.0
        %5354 = vmatpush1.msra.mxu0 %v5328
        %5355 = vmatprep.subr.mxu0 0.0
        %5356 = vmatpush1.msra.mxu0 %v5327
        %5357 = vmatprep.subr.mxu0 0.0
        %5358 = vmatpush1.msra.mxu0 %v5326
        %5359 = vmatprep.subr.mxu0 0.0
        %5360 = vmatpush1.msra.mxu0 %v5325
        %5361 = vmatprep.subr.mxu0 0.0
        %5362 = vmatpush1.msra.mxu0 %v5324
        %5363 = vmatprep.subr.mxu0 0.0
        %5364 = vmatpush1.msra.mxu0 %v5323
        %5365 = vmatprep.subr.mxu0 0.0
        %5366 = vmatpush1.msra.mxu0 %v5322
        %5367 = vmatprep.subr.mxu0 0.0
        %5368 = vmatpush2.msra.mxu0 0.0
        %5369 = vmatprep.subr.mxu0 0.0
        %5370 = vmatpush2.msra.mxu0 0.0
        %5371 = vmatprep.subr.mxu0 0.0
        %5372 = vmatpush2.msra.mxu0 0.0
        %5373 = vmatprep.subr.mxu0 0.0
        %5374 = vmatpush2.msra.mxu0 0.0
        %5375 = vmatprep.subr.mxu0 0.0
        %5376 = vmatpush2.msra.mxu0 0.0
        %5377 = vmatprep.subr.mxu0 0.0
        %5378 = vmatpush2.msra.mxu0 0.0
        %5379 = vmatprep.subr.mxu0 0.0
        %5380 = vmatpush2.msra.mxu0 0.0
        %5381 = vmatprep.subr.mxu0 0.0
        %5382 = vmatpush2.msra.mxu0 0.0
        %5383 = vmatprep.subr.mxu0 0.0
        %5384 = vmatpush2.msra.mxu0 0.0
        %5385 = vmatprep.subr.mxu0 0.0
        %5386 = vmatpush2.msra.mxu0 0.0
        %5387 = vmatprep.subr.mxu0 0.0
        %5388 = vmatpush2.msra.mxu0 0.0
        %5389 = vmatprep.subr.mxu0 0.0
        %5390 = vmatpush2.msra.mxu0 0.0
        %5391 = vmatprep.subr.mxu0 0.0
        %5392 = vmatpush2.msra.mxu0 0.0
        %5393 = vmatprep.subr.mxu0 0.0
        %5394 = vmatpush2.msra.mxu0 0.0
        %5395 = vmatprep.subr.mxu0 0.0
        %5396 = vmatpush2.msra.mxu0 0.0
        %5397 = vmatprep.subr.mxu0 0.0
        %5398 = vmatpush2.msra.mxu0 0.0
        %5399 = vmatprep.mubr.f32.mxu0 0.0
        %5400 = vmatmul.mubr.f32.gmra.mxu0 %v5333
        %v5401 = vpop.f32.mrf.mxu0
        %v5402 = vadd.f32 %v5330, %v5401
        %v5403 = vpop.f32.mrf.mxu0
        %5404 = vdwg.mxu0
        %vm5405 = vcmask 40960
        %v5406 = vsel %vm5405, %v5402, -inf
        %5407 = vmax.xlane.f32.xlu0 %v5406
        %v5408 = vpop.xlane.xlu0 %5407
        %v5409 = vsub.f32 %v5402, %v5408
        %v5410 = vmul.f32 %v5409, 1.442695
        %v5411 = vpow.pop %v5410
        %v5412 = vsel %vm5405, %v5411, 0.0
        %5413 = vadd.xlane.f32.xlu0 %v5412
        %v5414 = vpop.xlane.xlu0 %5413
        %v5415 = vlog2.pop %v5414
        %v5416 = vmul.f32 %v5415, 0.6931472
        %v5417 = vsub.f32 %v5409, %v5416
        %5418 = vst.msk [vmem:[%s849] sm:$0x1] %vm5405, %v5417
        %s5419 = sand.u32 %s508, 1
        %s5420 = scalar_lea.sflag [#allocation4], %s5419
        %s5421 = sand.u32 %s508, 1
        %s5422 = scalar_lea.vmem [#allocation22], %s5421
        // Predicated region
        $region153: #{net0_forward.1} parent=103 // pred_check
          %p5423 = pneg %p518
        $region154: #{net0_forward.1} parent=103 // pred_check_branch
          %5425 = sbr.rel (%p5423) target = $region156
        $region155: #{net0_forward.1} parent=103 // pred_region
          %s5427 = ssub.s32 16, 16
          %5428 = vsyncadd %s5420, %s5427
          %s5429 = smul.addr %s44, 16
          %s5430 = scalar_lea.hbm %s21, %s5429
          %s5432 = sshll.u32 %s5422, 4
          %s5433 = int_to_ptr.vmem [resolvable:$true] %s5432
          %5435 = dma.vmem_to_hbm [thread:$0]  %s5433, 16, %s5430, %s5420
        $region156: #{net0_forward.1} parent=103 // pred_fallthru
          _
      $region104: #{net0_forward.1} parent=5 // pred_fallthru
        _
      %p5436 = scmp.le.s32.totalorder 2, %s39
      // Predicated region
      $region157: #{net0_forward.1} parent=5 // pred_check
        %p5437 = pneg %p5436
      $region158: #{net0_forward.1} parent=5 // pred_check_branch
        %5439 = sbr.rel (%p5437) target = $region160
      $region159: #{net0_forward.1} parent=5 // pred_region
        %s5440 = ssub.s32 %s39, 2
        // Predicated region
        $region161: #{net0_forward.1} parent=159 // pred_check
          %p5441 = pneg %p524
        $region162: #{net0_forward.1} parent=159 // pred_check_branch
          %5443 = sbr.rel (%p5441) target = $region164
        $region163: #{net0_forward.1} parent=159 // pred_region
          %s5444 = sand.u32 %s509, 1
          %s5445 = scalar_lea.sflag [#allocation4], %s5444
          %s5446 = sand.u32 %s509, 1
          %s5447 = scalar_lea.vmem [#allocation22], %s5446
          %5448 = dma.done %s5445, 16
        $region164: #{net0_forward.1} parent=159 // pred_fallthru
          _
      $region160: #{net0_forward.1} parent=5 // pred_fallthru
        _
    $region6: #{net0_forward.1} parent=1 // loop_footer
      %s43 = sadd.s32 1, %s39
    $region7: #{net0_forward.1} parent=1 // loop_footer_branch
      %38 = sbr.rel target = $region3
    $region8: #{net0_forward.1} parent=1 // loop_exit
      _
    %5449 = vsyncpa [#allocation3], 1
    %s5450 = scalar_lea.sflag [#allocation3], 1
    %5451 = vsyncpa %s5450, 1
    %5452 = vsyncpa [#allocation6], 1
    %5453 = vsyncpa [#allocation9], 1
    %5454 = vsyncpa [#allocation12], 1
    %5455 = vsyncpa [#allocation15], 1
    %5456 = vsyncpa [#allocation18], 1
    %5457 = vsyncpa [#allocation21], 1
    %5458 = vsyncpa [#allocation4], 1
    %s5459 = scalar_lea.sflag [#allocation4], 1
    %5460 = vsyncpa %s5459, 1

</llo_original>
